<compile_context>
chip_gen: v7x
topology: tpu7x:2x2x1
jax: 0.10.0
libtpu: 0.0.40
codegen_flags: <defaults>
</compile_context>

<pallas_src>
import functools
import math

import numpy as np
import jax
import jax.numpy as jnp
from jax.experimental import pallas as pl
from jax.experimental.pallas import tpu as pltpu


def _round_up(n, m):
    return ((n + m - 1) // m) * m


# ----------------------------------------------------------------------------
# In-kernel building blocks (operate on one batch row, all-static shapes)
# ----------------------------------------------------------------------------

def _transformer_block(x, vecs, wqkv, wo, w1, w2, *, num_heads, l_real):
    """Pre-LN transformer block.  x: (Lp, D) f32.

    vecs (8, 4D) f32 row layout:
      0: ln1 gamma   1: ln1 beta   2: ln2 gamma   3: ln2 beta
      4: out-proj bias   5: mlp-out bias   6: qkv bias (3D)   7: mlp-in bias (4D)
    wqkv (D, 3D) bf16 (Q columns pre-scaled by 1/sqrt(dh)), wo (D, D) bf16,
    w1 (D, 4D) bf16, w2 (4D, D) bf16.
    """
    lp, d = x.shape
    nh = num_heads
    dh = d // nh
    eps = 1e-5

    ln1g, ln1b = vecs[0:1, 0:d], vecs[1:2, 0:d]
    ln2g, ln2b = vecs[2:3, 0:d], vecs[3:4, 0:d]
    bo, b2 = vecs[4:5, 0:d], vecs[5:6, 0:d]
    bqkv = vecs[6:7, 0:3 * d]
    b1 = vecs[7:8, 0:4 * d]

    def layernorm(v, g, b):
        mu = jnp.mean(v, axis=-1, keepdims=True)
        var = jnp.mean(jnp.square(v - mu), axis=-1, keepdims=True)
        return (v - mu) * jax.lax.rsqrt(var + eps) * g + b

    # ---- attention: one lane-dense QKV matmul, per-head score/value steps ----
    xn = layernorm(x, ln1g, ln1b).astype(jnp.bfloat16)
    qkv = jnp.dot(xn, wqkv, preferred_element_type=jnp.float32) + bqkv   # (Lp, 3D)

    kmask = jax.lax.broadcasted_iota(jnp.int32, (1, lp), 1) < l_real
    heads = []
    for h in range(nh):
        qh = qkv[:, h * dh:(h + 1) * dh].astype(jnp.bfloat16)
        kh = qkv[:, d + h * dh:d + (h + 1) * dh].astype(jnp.bfloat16)
        vh = qkv[:, 2 * d + h * dh:2 * d + (h + 1) * dh].astype(jnp.bfloat16)
        s = jnp.einsum('qd,kd->qk', qh, kh,
                       preferred_element_type=jnp.float32)               # (Lp, Lp)
        s = jnp.where(kmask, s, jnp.float32(-1e30))
        m = jnp.max(s, axis=-1, keepdims=True)
        p = jnp.exp(s - m)
        denom = jnp.sum(p, axis=-1, keepdims=True)
        p = (p * pl.reciprocal(denom, approx=True)).astype(jnp.bfloat16)
        heads.append(jnp.dot(p, vh, preferred_element_type=jnp.float32))  # (Lp, dh)

    o = jnp.concatenate(heads, axis=-1).astype(jnp.bfloat16)              # (Lp, D)
    x = x + jnp.dot(o, wo, preferred_element_type=jnp.float32) + bo       # one (Lp,D)x(D,D)

    # ---- MLP ----
    xn2 = layernorm(x, ln2g, ln2b).astype(jnp.bfloat16)
    hdn = jnp.dot(xn2, w1, preferred_element_type=jnp.float32) + b1
    hdn = jax.nn.gelu(hdn).astype(jnp.bfloat16)
    x = x + jnp.dot(hdn, w2, preferred_element_type=jnp.float32) + b2
    return x


def _merge_tokens(x, sel, wproj, mb, *, num_global):
    """Global-token resize Linear + grouped 2x2/stride-2 merge conv, in-kernel.

    x: (Lp_in, C_in) f32.
    sel: (5, Lp_out, Lp_in) bf16 0/1 selection matrices
         (tap 0 selects global rows, taps 1..4 select the 2x2 conv sources).
    wproj: (5, C_in, C_out) bf16 (tap 0 = resize Linear weight, taps 1..4 =
           per-tap block-diagonal grouped-conv weights).
    mb: (2, C_out) f32: row 0 resize bias (global rows), row 1 conv bias.
    """
    xb = x.astype(jnp.bfloat16)
    y = None
    for p in range(5):
        g = jnp.dot(sel[p], xb, preferred_element_type=jnp.float32)
        g = g.astype(jnp.bfloat16)
        t = jnp.dot(g, wproj[p], preferred_element_type=jnp.float32)
        y = t if y is None else y + t
    lp_out = sel.shape[1]
    row = jax.lax.broadcasted_iota(jnp.int32, (lp_out, 1), 0)
    bias = jnp.where(row < num_global, mb[0:1, :], mb[1:2, :])
    return y + bias


def _fused_kernel(*refs, plan, num_heads):
    """Whole Processor forward on one batch row (plan is static Python)."""
    x_ref = refs[0]
    out_ref = refs[-1]
    prefs = refs[1:-1]
    x = x_ref[0]
    i = 0
    for step in plan:
        if step[0] == "merge":
            sel = prefs[i][...]
            wproj = prefs[i + 1][...]
            mb = prefs[i + 2][...]
            i += 3
            x = _merge_tokens(x, sel, wproj, mb, num_global=step[1])
        else:  # "block"
            vecs = prefs[i][...]
            wqkv = prefs[i + 1][...]
            wo = prefs[i + 2][...]
            w1 = prefs[i + 3][...]
            w2 = prefs[i + 4][...]
            i += 5
            x = _transformer_block(x, vecs, wqkv, wo, w1, w2,
                                   num_heads=num_heads, l_real=step[1])
    out_ref[0] = x


# ----------------------------------------------------------------------------
# Host-side helpers
# ----------------------------------------------------------------------------

def _bcast_spec(arr):
    zeros = (0,) * arr.ndim
    return pl.BlockSpec(arr.shape, lambda b, _z=zeros: _z)


def _build_merge_selection(ng, v, h, w, lp_in, lp_out):
    """Static 0/1 selection matrices for the merge re-layout (trace time)."""
    h2, w2 = h // 2, w // 2
    sel = np.zeros((5, lp_out, lp_in), np.float32)
    for j in range(ng):                       # global tokens keep their row
        sel[0, j, j] = 1.0
    for vi in range(v):
        for hi in range(h2):
            for wi in range(w2):
                j = ng + (vi * h2 + hi) * w2 + wi
                for kh in range(2):
                    for kw in range(2):
                        p = kh * 2 + kw
                        src = ng + (vi * h + (2 * hi + kh)) * w + (2 * wi + kw)
                        sel[p + 1, j, src] = 1.0
    return jnp.asarray(sel, jnp.bfloat16)


def _init_block_params(key, d, num_heads, scale=0.02):
    dh = d // num_heads
    ks = jax.random.split(key, 8)
    wqkv = jax.random.normal(ks[0], (d, 3 * d), jnp.float32) * scale
    bqkv = jax.random.normal(ks[1], (3 * d,), jnp.float32) * scale
    wo = jax.random.normal(ks[2], (d, d), jnp.float32) * scale
    bo = jax.random.normal(ks[3], (d,), jnp.float32) * scale
    w1 = jax.random.normal(ks[4], (d, 4 * d), jnp.float32) * scale
    b1 = jax.random.normal(ks[5], (4 * d,), jnp.float32) * scale
    w2 = jax.random.normal(ks[6], (4 * d, d), jnp.float32) * scale
    b2 = jax.random.normal(ks[7], (d,), jnp.float32) * scale

    # fold the 1/sqrt(dh) attention scale into the Q projection (weights+bias)
    sc = 1.0 / math.sqrt(dh)
    wqkv = wqkv.at[:, :d].multiply(sc)
    bqkv = bqkv.at[:d].multiply(sc)

    # pack all 1-D params into a single (8, 4D) f32 ref
    vecs = jnp.zeros((8, 4 * d), jnp.float32)
    vecs = vecs.at[0, :d].set(1.0)          # ln1 gamma (beta row 1 stays 0)
    vecs = vecs.at[2, :d].set(1.0)          # ln2 gamma (beta row 3 stays 0)
    vecs = vecs.at[4, :d].set(bo)
    vecs = vecs.at[5, :d].set(b2)
    vecs = vecs.at[6, :3 * d].set(bqkv)
    vecs = vecs.at[7, :].set(b1)

    return dict(vecs=vecs,
                wqkv=wqkv.astype(jnp.bfloat16),
                wo=wo.astype(jnp.bfloat16),
                w1=w1.astype(jnp.bfloat16),
                w2=w2.astype(jnp.bfloat16))


def _init_merge_params(key, d_in, d_out, scale=0.02):
    k1, k2, k3, k4 = jax.random.split(key, 4)
    wr = jax.random.normal(k1, (d_in, d_out), jnp.float32) * scale   # resize Linear
    br = jax.random.normal(k2, (d_out,), jnp.float32) * scale
    cw = jax.random.normal(k3, (d_out, 2, 2), jnp.float32) * scale   # Conv2d (Cout,1,2,2)
    cb = jax.random.normal(k4, (d_out,), jnp.float32) * scale
    kmul = d_out // d_in
    # grouped conv (groups=d_in): output channel oc reads input channel oc//kmul
    onehot = (jnp.arange(d_in)[:, None] == (jnp.arange(d_out) // kmul)[None, :])
    onehot = onehot.astype(jnp.float32)                              # (d_in, d_out)
    cw4 = cw.reshape(d_out, 4)                                       # (d_out, p), p = kh*2+kw
    wc = cw4.T[:, None, :] * onehot[None, :, :]                      # (4, d_in, d_out)
    wproj = jnp.concatenate([wr[None], wc], axis=0).astype(jnp.bfloat16)
    mb = jnp.stack([br, cb], axis=0)                                 # (2, d_out) f32
    return wproj, mb


# ----------------------------------------------------------------------------
# Processor (JAX/Pallas)
# ----------------------------------------------------------------------------

class Processor:
    """JAX/Pallas port of llrm.Processor.

    config: num_layers=2, dims=[32, 64], merge_layers=[1],
            block_type='transformer', transformer.num_heads=4.
    """

    def __init__(self, key, num_layers=2, dims=(32, 64), merge_at=(1,),
                 num_heads=4):
        self.num_layers = num_layers
        self.dims = list(dims)
        self.merge_at = list(merge_at)
        self.num_heads = num_heads
        assert len(self.dims) == len(self.merge_at) + 1

        self.block_params = []
        self.merge_params = []
        dim_cur = self.dims[0]
        keys = jax.random.split(key, 2 * num_layers + 4)
        ki = 0
        for i in range(num_layers):
            if i in self.merge_at:
                dim_next = self.dims[self.merge_at.index(i) + 1]
                self.merge_params.append(
                    _init_merge_params(keys[ki], dim_cur, dim_next))
                ki += 1
                dim_cur = dim_next
            self.block_params.append(
                _init_block_params(keys[ki], dim_cur, num_heads))
            ki += 1
            # TODO(synk): Mamba2Block ('m') branch not implemented (config here
            # is 'transformer'; no Mamba2Block source provided).

    def __call__(self, x, num_global_tokens, v, h, w):
        B, L, _ = x.shape
        assert L - num_global_tokens == v * h * w
        hh, ww = h, w
        dim_cur = self.dims[0]
        l_real = L
        lp = _round_up(l_real, 16)                    # bf16 sublane multiple
        x = jnp.pad(x, ((0, 0), (0, lp - l_real), (0, 0)))

        plan = []
        params = []
        for i in range(self.num_layers):
            if i in self.merge_at:
                mi = self.merge_at.index(i)
                dim_next = self.dims[mi + 1]
                h2, w2 = hh // 2, ww // 2
                l_new = num_global_tokens + v * h2 * w2
                lp_new = _round_up(l_new, 16)
                sel = _build_merge_selection(num_global_tokens, v, hh, ww,
                                             lp, lp_new)
                wproj, mb = self.merge_params[mi]
                plan.append(("merge", num_global_tokens))
                params += [sel, wproj, mb]
                hh, ww = h2, w2
                l_real, lp = l_new, lp_new
                dim_cur = dim_next
            bp = self.block_params[i]
            plan.append(("block", l_real))
            params += [bp["vecs"], bp["wqkv"], bp["wo"], bp["w1"], bp["w2"]]

        kernel = functools.partial(_fused_kernel, plan=tuple(plan),
                                   num_heads=self.num_heads)
        lp_in, d_in = x.shape[1], x.shape[2]
        out = pl.pallas_call(
            kernel,
            out_shape=jax.ShapeDtypeStruct((B, lp, dim_cur), jnp.float32),
            grid=(B,),
            in_specs=[pl.BlockSpec((1, lp_in, d_in), lambda b: (b, 0, 0))]
                     + [_bcast_spec(a) for a in params],
            out_specs=pl.BlockSpec((1, lp, dim_cur), lambda b: (b, 0, 0)),
            compiler_params=pltpu.CompilerParams(
                dimension_semantics=("parallel",)),
        )(x, *params)
        return out[:, :l_real], hh, ww


# ----------------------------------------------------------------------------
# Demo
# ----------------------------------------------------------------------------

if __name__ == "__main__":
    key = jax.random.PRNGKey(0)
    k_param, k_x = jax.random.split(key)

    B = 2
    num_global_tokens = 2
    v, h, w = 2, 4, 4
    D0 = 32
    L = num_global_tokens + v * h * w           # 34

    proc = Processor(k_param, num_layers=2, dims=(32, 64), merge_at=(1,),
                     num_heads=4)
    x = jax.random.normal(k_x, (B, L, D0), jnp.float32)

    fwd = jax.jit(proc.__call__, static_argnums=(1, 2, 3, 4))
    out, h_out, w_out = fwd(x, num_global_tokens, v, h, w)
    out = jax.block_until_ready(out)

    expected_L = num_global_tokens + v * (h // 2) * (w // 2)
    assert out.shape == (B, expected_L, 64), out.shape
    assert (int(h_out), int(w_out)) == (h // 2, w // 2)
    assert bool(jnp.all(jnp.isfinite(out)))
    print("KERNEL_OK")
</pallas_src>

<mosaic_0001>
module attributes {stable_mosaic.version = 11 : i64} {
  func.func @_fused_kernel(%arg0: i32, %arg1: memref<1x48x32xf32, #tpu.memory_space<vmem>>, %arg2: memref<8x128xf32, #tpu.memory_space<vmem>>, %arg3: memref<32x96xbf16, #tpu.memory_space<vmem>>, %arg4: memref<32x32xbf16, #tpu.memory_space<vmem>>, %arg5: memref<32x128xbf16, #tpu.memory_space<vmem>>, %arg6: memref<128x32xbf16, #tpu.memory_space<vmem>>, %arg7: memref<5x16x48xbf16, #tpu.memory_space<vmem>>, %arg8: memref<5x32x64xbf16, #tpu.memory_space<vmem>>, %arg9: memref<2x64xf32, #tpu.memory_space<vmem>>, %arg10: memref<8x256xf32, #tpu.memory_space<vmem>>, %arg11: memref<64x192xbf16, #tpu.memory_space<vmem>>, %arg12: memref<64x64xbf16, #tpu.memory_space<vmem>>, %arg13: memref<64x256xbf16, #tpu.memory_space<vmem>>, %arg14: memref<256x64xbf16, #tpu.memory_space<vmem>>, %arg15: memref<1x16x64xf32, #tpu.memory_space<vmem>>) attributes {dimension_semantics = [#tpu.dimension_semantics<parallel>], iteration_bounds = array<i64: 2>, scalar_prefetch = 0 : i64, scratch_operands = 0 : i64, tpu.core_type = #tpu.core_type<tc>, window_params = [{transform_indices = @transform_0, window_bounds = array<i64: 1, 48, 32>}, {pipeline_mode = #tpu.pipeline_mode<synchronous>, transform_indices = @transform_1, window_bounds = array<i64: 8, 128>}, {pipeline_mode = #tpu.pipeline_mode<synchronous>, transform_indices = @transform_2, window_bounds = array<i64: 32, 96>}, {pipeline_mode = #tpu.pipeline_mode<synchronous>, transform_indices = @transform_3, window_bounds = array<i64: 32, 32>}, {pipeline_mode = #tpu.pipeline_mode<synchronous>, transform_indices = @transform_4, window_bounds = array<i64: 32, 128>}, {pipeline_mode = #tpu.pipeline_mode<synchronous>, transform_indices = @transform_5, window_bounds = array<i64: 128, 32>}, {pipeline_mode = #tpu.pipeline_mode<synchronous>, transform_indices = @transform_6, window_bounds = array<i64: 5, 16, 48>}, {pipeline_mode = #tpu.pipeline_mode<synchronous>, transform_indices = @transform_7, window_bounds = array<i64: 5, 32, 64>}, {pipeline_mode = #tpu.pipeline_mode<synchronous>, transform_indices = @transform_8, window_bounds = array<i64: 2, 64>}, {pipeline_mode = #tpu.pipeline_mode<synchronous>, transform_indices = @transform_9, window_bounds = array<i64: 8, 256>}, {pipeline_mode = #tpu.pipeline_mode<synchronous>, transform_indices = @transform_10, window_bounds = array<i64: 64, 192>}, {pipeline_mode = #tpu.pipeline_mode<synchronous>, transform_indices = @transform_11, window_bounds = array<i64: 64, 64>}, {pipeline_mode = #tpu.pipeline_mode<synchronous>, transform_indices = @transform_12, window_bounds = array<i64: 64, 256>}, {pipeline_mode = #tpu.pipeline_mode<synchronous>, transform_indices = @transform_13, window_bounds = array<i64: 256, 64>}, {transform_indices = @transform_14, window_bounds = array<i64: 1, 16, 64>}]} {
    %c0 = arith.constant 0 : index
    %c0_0 = arith.constant 0 : index
    %c0_1 = arith.constant 0 : index
    %0 = vector.load %arg1[%c0, %c0_0, %c0_1] : memref<1x48x32xf32, #tpu.memory_space<vmem>>, vector<1x48x32xf32>
    %1 = vector.shape_cast %0 : vector<1x48x32xf32> to vector<48x32xf32>
    %c0_2 = arith.constant 0 : index
    %c0_3 = arith.constant 0 : index
    %2 = vector.load %arg2[%c0_2, %c0_3] : memref<8x128xf32, #tpu.memory_space<vmem>>, vector<8x128xf32>
    %c0_4 = arith.constant 0 : index
    %c0_5 = arith.constant 0 : index
    %3 = vector.load %arg3[%c0_4, %c0_5] : memref<32x96xbf16, #tpu.memory_space<vmem>>, vector<32x96xbf16>
    %c0_6 = arith.constant 0 : index
    %c0_7 = arith.constant 0 : index
    %4 = vector.load %arg4[%c0_6, %c0_7] : memref<32x32xbf16, #tpu.memory_space<vmem>>, vector<32x32xbf16>
    %c0_8 = arith.constant 0 : index
    %c0_9 = arith.constant 0 : index
    %5 = vector.load %arg5[%c0_8, %c0_9] : memref<32x128xbf16, #tpu.memory_space<vmem>>, vector<32x128xbf16>
    %c0_10 = arith.constant 0 : index
    %c0_11 = arith.constant 0 : index
    %6 = vector.load %arg6[%c0_10, %c0_11] : memref<128x32xbf16, #tpu.memory_space<vmem>>, vector<128x32xbf16>
    %7 = vector.extract_strided_slice %2 {offsets = [0, 0], sizes = [1, 32], strides = [1, 1]} : vector<8x128xf32> to vector<1x32xf32>
    %8 = vector.extract_strided_slice %2 {offsets = [1, 0], sizes = [1, 32], strides = [1, 1]} : vector<8x128xf32> to vector<1x32xf32>
    %9 = vector.extract_strided_slice %2 {offsets = [2, 0], sizes = [1, 32], strides = [1, 1]} : vector<8x128xf32> to vector<1x32xf32>
    %10 = vector.extract_strided_slice %2 {offsets = [3, 0], sizes = [1, 32], strides = [1, 1]} : vector<8x128xf32> to vector<1x32xf32>
    %11 = vector.extract_strided_slice %2 {offsets = [4, 0], sizes = [1, 32], strides = [1, 1]} : vector<8x128xf32> to vector<1x32xf32>
    %12 = vector.extract_strided_slice %2 {offsets = [5, 0], sizes = [1, 32], strides = [1, 1]} : vector<8x128xf32> to vector<1x32xf32>
    %13 = vector.extract_strided_slice %2 {offsets = [6, 0], sizes = [1, 96], strides = [1, 1]} : vector<8x128xf32> to vector<1x96xf32>
    %14 = vector.extract_strided_slice %2 {offsets = [7, 0], sizes = [1, 128], strides = [1, 1]} : vector<8x128xf32> to vector<1x128xf32>
    %cst = arith.constant dense<0.000000e+00> : vector<48xf32>
    %15 = vector.multi_reduction <add>, %1, %cst [1] : vector<48x32xf32> to vector<48xf32>
    %16 = vector.shape_cast %15 : vector<48xf32> to vector<48x1xf32>
    %cst_12 = arith.constant 3.200000e+01 : f32
    %17 = vector.broadcast %cst_12 : f32 to vector<48x1xf32>
    %18 = arith.divf %16, %17 : vector<48x1xf32>
    %19 = vector.broadcast %18 : vector<48x1xf32> to vector<48x32xf32>
    %20 = arith.subf %1, %19 : vector<48x32xf32>
    %21 = arith.mulf %20, %20 : vector<48x32xf32>
    %cst_13 = arith.constant dense<0.000000e+00> : vector<48xf32>
    %22 = vector.multi_reduction <add>, %21, %cst_13 [1] : vector<48x32xf32> to vector<48xf32>
    %23 = vector.shape_cast %22 : vector<48xf32> to vector<48x1xf32>
    %cst_14 = arith.constant 3.200000e+01 : f32
    %24 = vector.broadcast %cst_14 : f32 to vector<48x1xf32>
    %25 = arith.divf %23, %24 : vector<48x1xf32>
    %26 = vector.broadcast %18 : vector<48x1xf32> to vector<48x32xf32>
    %27 = arith.subf %1, %26 : vector<48x32xf32>
    %cst_15 = arith.constant 9.99999974E-6 : f32
    %28 = vector.broadcast %cst_15 : f32 to vector<48x1xf32>
    %29 = arith.addf %25, %28 : vector<48x1xf32>
    %30 = math.rsqrt %29 : vector<48x1xf32>
    %31 = vector.broadcast %30 : vector<48x1xf32> to vector<48x32xf32>
    %32 = arith.mulf %27, %31 : vector<48x32xf32>
    %33 = vector.broadcast %7 : vector<1x32xf32> to vector<48x32xf32>
    %34 = arith.mulf %32, %33 : vector<48x32xf32>
    %35 = vector.broadcast %8 : vector<1x32xf32> to vector<48x32xf32>
    %36 = arith.addf %34, %35 : vector<48x32xf32>
    %37 = arith.truncf %36 : vector<48x32xf32> to vector<48x32xbf16>
    %cst_16 = arith.constant dense<0.000000e+00> : vector<48x96xf32>
    %38 = tpu.matmul %37, %3, %cst_16 {dimension_numbers = #tpu.dot_dimension_numbers<[1], [0], [0], [1], [0, 0, 1, 1], [], []>} : vector<48x32xbf16>, vector<32x96xbf16>, vector<48x96xf32> -> vector<48x96xf32>
    %39 = vector.broadcast %13 : vector<1x96xf32> to vector<48x96xf32>
    %40 = arith.addf %38, %39 : vector<48x96xf32>
    %41 = tpu.iota {dimensions = array<i32: 1>} : vector<1x48xi32>
    %c34_i32 = arith.constant 34 : i32
    %42 = vector.broadcast %c34_i32 : i32 to vector<1x48xi32>
    %43 = arith.cmpi slt, %41, %42 : vector<1x48xi32>
    %44 = vector.extract_strided_slice %40 {offsets = [0, 0], sizes = [48, 8], strides = [1, 1]} : vector<48x96xf32> to vector<48x8xf32>
    %45 = arith.truncf %44 : vector<48x8xf32> to vector<48x8xbf16>
    %46 = vector.extract_strided_slice %40 {offsets = [0, 32], sizes = [48, 8], strides = [1, 1]} : vector<48x96xf32> to vector<48x8xf32>
    %47 = arith.truncf %46 : vector<48x8xf32> to vector<48x8xbf16>
    %48 = vector.extract_strided_slice %40 {offsets = [0, 64], sizes = [48, 8], strides = [1, 1]} : vector<48x96xf32> to vector<48x8xf32>
    %49 = arith.truncf %48 : vector<48x8xf32> to vector<48x8xbf16>
    "tpu.trace_start"() <{level = 10 : i32, message = "qd,kd->qk"}> : () -> ()
    %cst_17 = arith.constant dense<0.000000e+00> : vector<48x48xf32>
    %50 = tpu.matmul %45, %47, %cst_17 {dimension_numbers = #tpu.dot_dimension_numbers<[1], [1], [0], [0], [0, 0, 1, 0], [], []>} : vector<48x8xbf16>, vector<48x8xbf16>, vector<48x48xf32> -> vector<48x48xf32>
    %cst_18 = arith.constant -1.000000e+30 : f32
    "tpu.trace_stop"() : () -> ()
    %51 = vector.shape_cast %43 : vector<1x48xi1> to vector<1x48xi1>
    %52 = vector.broadcast %51 : vector<1x48xi1> to vector<48x48xi1>
    %53 = vector.broadcast %cst_18 : f32 to vector<48x48xf32>
    %54 = arith.select %52, %50, %53 : vector<48x48xi1>, vector<48x48xf32>
    %cst_19 = arith.constant dense<0xFF800000> : vector<48xf32>
    %55 = vector.multi_reduction <maximumf>, %54, %cst_19 [1] : vector<48x48xf32> to vector<48xf32>
    %56 = vector.shape_cast %55 : vector<48xf32> to vector<48x1xf32>
    %57 = vector.broadcast %56 : vector<48x1xf32> to vector<48x48xf32>
    %58 = arith.subf %54, %57 : vector<48x48xf32>
    %59 = math.exp %58 : vector<48x48xf32>
    %cst_20 = arith.constant dense<0.000000e+00> : vector<48xf32>
    %60 = vector.multi_reduction <add>, %59, %cst_20 [1] : vector<48x48xf32> to vector<48xf32>
    %61 = vector.shape_cast %60 : vector<48xf32> to vector<48x1xf32>
    %62 = tpu.reciprocal %61 {approx = true} : vector<48x1xf32> -> vector<48x1xf32>
    %63 = vector.broadcast %62 : vector<48x1xf32> to vector<48x48xf32>
    %64 = arith.mulf %59, %63 : vector<48x48xf32>
    %65 = arith.truncf %64 : vector<48x48xf32> to vector<48x48xbf16>
    %cst_21 = arith.constant dense<0.000000e+00> : vector<48x8xf32>
    %66 = tpu.matmul %65, %49, %cst_21 {dimension_numbers = #tpu.dot_dimension_numbers<[1], [0], [0], [1], [0, 0, 1, 1], [], []>} : vector<48x48xbf16>, vector<48x8xbf16>, vector<48x8xf32> -> vector<48x8xf32>
    %67 = vector.extract_strided_slice %40 {offsets = [0, 8], sizes = [48, 8], strides = [1, 1]} : vector<48x96xf32> to vector<48x8xf32>
    %68 = arith.truncf %67 : vector<48x8xf32> to vector<48x8xbf16>
    %69 = vector.extract_strided_slice %40 {offsets = [0, 40], sizes = [48, 8], strides = [1, 1]} : vector<48x96xf32> to vector<48x8xf32>
    %70 = arith.truncf %69 : vector<48x8xf32> to vector<48x8xbf16>
    %71 = vector.extract_strided_slice %40 {offsets = [0, 72], sizes = [48, 8], strides = [1, 1]} : vector<48x96xf32> to vector<48x8xf32>
    %72 = arith.truncf %71 : vector<48x8xf32> to vector<48x8xbf16>
    "tpu.trace_start"() <{level = 10 : i32, message = "qd,kd->qk"}> : () -> ()
    %cst_22 = arith.constant dense<0.000000e+00> : vector<48x48xf32>
    %73 = tpu.matmul %68, %70, %cst_22 {dimension_numbers = #tpu.dot_dimension_numbers<[1], [1], [0], [0], [0, 0, 1, 0], [], []>} : vector<48x8xbf16>, vector<48x8xbf16>, vector<48x48xf32> -> vector<48x48xf32>
    %cst_23 = arith.constant -1.000000e+30 : f32
    "tpu.trace_stop"() : () -> ()
    %74 = vector.shape_cast %43 : vector<1x48xi1> to vector<1x48xi1>
    %75 = vector.broadcast %74 : vector<1x48xi1> to vector<48x48xi1>
    %76 = vector.broadcast %cst_23 : f32 to vector<48x48xf32>
    %77 = arith.select %75, %73, %76 : vector<48x48xi1>, vector<48x48xf32>
    %cst_24 = arith.constant dense<0xFF800000> : vector<48xf32>
    %78 = vector.multi_reduction <maximumf>, %77, %cst_24 [1] : vector<48x48xf32> to vector<48xf32>
    %79 = vector.shape_cast %78 : vector<48xf32> to vector<48x1xf32>
    %80 = vector.broadcast %79 : vector<48x1xf32> to vector<48x48xf32>
    %81 = arith.subf %77, %80 : vector<48x48xf32>
    %82 = math.exp %81 : vector<48x48xf32>
    %cst_25 = arith.constant dense<0.000000e+00> : vector<48xf32>
    %83 = vector.multi_reduction <add>, %82, %cst_25 [1] : vector<48x48xf32> to vector<48xf32>
    %84 = vector.shape_cast %83 : vector<48xf32> to vector<48x1xf32>
    %85 = tpu.reciprocal %84 {approx = true} : vector<48x1xf32> -> vector<48x1xf32>
    %86 = vector.broadcast %85 : vector<48x1xf32> to vector<48x48xf32>
    %87 = arith.mulf %82, %86 : vector<48x48xf32>
    %88 = arith.truncf %87 : vector<48x48xf32> to vector<48x48xbf16>
    %cst_26 = arith.constant dense<0.000000e+00> : vector<48x8xf32>
    %89 = tpu.matmul %88, %72, %cst_26 {dimension_numbers = #tpu.dot_dimension_numbers<[1], [0], [0], [1], [0, 0, 1, 1], [], []>} : vector<48x48xbf16>, vector<48x8xbf16>, vector<48x8xf32> -> vector<48x8xf32>
    %90 = vector.extract_strided_slice %40 {offsets = [0, 16], sizes = [48, 8], strides = [1, 1]} : vector<48x96xf32> to vector<48x8xf32>
    %91 = arith.truncf %90 : vector<48x8xf32> to vector<48x8xbf16>
    %92 = vector.extract_strided_slice %40 {offsets = [0, 48], sizes = [48, 8], strides = [1, 1]} : vector<48x96xf32> to vector<48x8xf32>
    %93 = arith.truncf %92 : vector<48x8xf32> to vector<48x8xbf16>
    %94 = vector.extract_strided_slice %40 {offsets = [0, 80], sizes = [48, 8], strides = [1, 1]} : vector<48x96xf32> to vector<48x8xf32>
    %95 = arith.truncf %94 : vector<48x8xf32> to vector<48x8xbf16>
    "tpu.trace_start"() <{level = 10 : i32, message = "qd,kd->qk"}> : () -> ()
    %cst_27 = arith.constant dense<0.000000e+00> : vector<48x48xf32>
    %96 = tpu.matmul %91, %93, %cst_27 {dimension_numbers = #tpu.dot_dimension_numbers<[1], [1], [0], [0], [0, 0, 1, 0], [], []>} : vector<48x8xbf16>, vector<48x8xbf16>, vector<48x48xf32> -> vector<48x48xf32>
    %cst_28 = arith.constant -1.000000e+30 : f32
    "tpu.trace_stop"() : () -> ()
    %97 = vector.shape_cast %43 : vector<1x48xi1> to vector<1x48xi1>
    %98 = vector.broadcast %97 : vector<1x48xi1> to vector<48x48xi1>
    %99 = vector.broadcast %cst_28 : f32 to vector<48x48xf32>
    %100 = arith.select %98, %96, %99 : vector<48x48xi1>, vector<48x48xf32>
    %cst_29 = arith.constant dense<0xFF800000> : vector<48xf32>
    %101 = vector.multi_reduction <maximumf>, %100, %cst_29 [1] : vector<48x48xf32> to vector<48xf32>
    %102 = vector.shape_cast %101 : vector<48xf32> to vector<48x1xf32>
    %103 = vector.broadcast %102 : vector<48x1xf32> to vector<48x48xf32>
    %104 = arith.subf %100, %103 : vector<48x48xf32>
    %105 = math.exp %104 : vector<48x48xf32>
    %cst_30 = arith.constant dense<0.000000e+00> : vector<48xf32>
    %106 = vector.multi_reduction <add>, %105, %cst_30 [1] : vector<48x48xf32> to vector<48xf32>
    %107 = vector.shape_cast %106 : vector<48xf32> to vector<48x1xf32>
    %108 = tpu.reciprocal %107 {approx = true} : vector<48x1xf32> -> vector<48x1xf32>
    %109 = vector.broadcast %108 : vector<48x1xf32> to vector<48x48xf32>
    %110 = arith.mulf %105, %109 : vector<48x48xf32>
    %111 = arith.truncf %110 : vector<48x48xf32> to vector<48x48xbf16>
    %cst_31 = arith.constant dense<0.000000e+00> : vector<48x8xf32>
    %112 = tpu.matmul %111, %95, %cst_31 {dimension_numbers = #tpu.dot_dimension_numbers<[1], [0], [0], [1], [0, 0, 1, 1], [], []>} : vector<48x48xbf16>, vector<48x8xbf16>, vector<48x8xf32> -> vector<48x8xf32>
    %113 = vector.extract_strided_slice %40 {offsets = [0, 24], sizes = [48, 8], strides = [1, 1]} : vector<48x96xf32> to vector<48x8xf32>
    %114 = arith.truncf %113 : vector<48x8xf32> to vector<48x8xbf16>
    %115 = vector.extract_strided_slice %40 {offsets = [0, 56], sizes = [48, 8], strides = [1, 1]} : vector<48x96xf32> to vector<48x8xf32>
    %116 = arith.truncf %115 : vector<48x8xf32> to vector<48x8xbf16>
    %117 = vector.extract_strided_slice %40 {offsets = [0, 88], sizes = [48, 8], strides = [1, 1]} : vector<48x96xf32> to vector<48x8xf32>
    %118 = arith.truncf %117 : vector<48x8xf32> to vector<48x8xbf16>
    "tpu.trace_start"() <{level = 10 : i32, message = "qd,kd->qk"}> : () -> ()
    %cst_32 = arith.constant dense<0.000000e+00> : vector<48x48xf32>
    %119 = tpu.matmul %114, %116, %cst_32 {dimension_numbers = #tpu.dot_dimension_numbers<[1], [1], [0], [0], [0, 0, 1, 0], [], []>} : vector<48x8xbf16>, vector<48x8xbf16>, vector<48x48xf32> -> vector<48x48xf32>
    %cst_33 = arith.constant -1.000000e+30 : f32
    "tpu.trace_stop"() : () -> ()
    %120 = vector.shape_cast %43 : vector<1x48xi1> to vector<1x48xi1>
    %121 = vector.broadcast %120 : vector<1x48xi1> to vector<48x48xi1>
    %122 = vector.broadcast %cst_33 : f32 to vector<48x48xf32>
    %123 = arith.select %121, %119, %122 : vector<48x48xi1>, vector<48x48xf32>
    %cst_34 = arith.constant dense<0xFF800000> : vector<48xf32>
    %124 = vector.multi_reduction <maximumf>, %123, %cst_34 [1] : vector<48x48xf32> to vector<48xf32>
    %125 = vector.shape_cast %124 : vector<48xf32> to vector<48x1xf32>
    %126 = vector.broadcast %125 : vector<48x1xf32> to vector<48x48xf32>
    %127 = arith.subf %123, %126 : vector<48x48xf32>
    %128 = math.exp %127 : vector<48x48xf32>
    %cst_35 = arith.constant dense<0.000000e+00> : vector<48xf32>
    %129 = vector.multi_reduction <add>, %128, %cst_35 [1] : vector<48x48xf32> to vector<48xf32>
    %130 = vector.shape_cast %129 : vector<48xf32> to vector<48x1xf32>
    %131 = tpu.reciprocal %130 {approx = true} : vector<48x1xf32> -> vector<48x1xf32>
    %132 = vector.broadcast %131 : vector<48x1xf32> to vector<48x48xf32>
    %133 = arith.mulf %128, %132 : vector<48x48xf32>
    %134 = arith.truncf %133 : vector<48x48xf32> to vector<48x48xbf16>
    %cst_36 = arith.constant dense<0.000000e+00> : vector<48x8xf32>
    %135 = tpu.matmul %134, %118, %cst_36 {dimension_numbers = #tpu.dot_dimension_numbers<[1], [0], [0], [1], [0, 0, 1, 1], [], []>} : vector<48x48xbf16>, vector<48x8xbf16>, vector<48x8xf32> -> vector<48x8xf32>
    %136 = tpu.concatenate %66, %89, %112, %135 in 1 : vector<48x8xf32>, vector<48x8xf32>, vector<48x8xf32>, vector<48x8xf32> -> vector<48x32xf32>
    %137 = arith.truncf %136 : vector<48x32xf32> to vector<48x32xbf16>
    %cst_37 = arith.constant dense<0.000000e+00> : vector<48x32xf32>
    %138 = tpu.matmul %137, %4, %cst_37 {dimension_numbers = #tpu.dot_dimension_numbers<[1], [0], [0], [1], [0, 0, 1, 1], [], []>} : vector<48x32xbf16>, vector<32x32xbf16>, vector<48x32xf32> -> vector<48x32xf32>
    %139 = arith.addf %1, %138 : vector<48x32xf32>
    %140 = vector.broadcast %11 : vector<1x32xf32> to vector<48x32xf32>
    %141 = arith.addf %139, %140 : vector<48x32xf32>
    %cst_38 = arith.constant dense<0.000000e+00> : vector<48xf32>
    %142 = vector.multi_reduction <add>, %141, %cst_38 [1] : vector<48x32xf32> to vector<48xf32>
    %143 = vector.shape_cast %142 : vector<48xf32> to vector<48x1xf32>
    %cst_39 = arith.constant 3.200000e+01 : f32
    %144 = vector.broadcast %cst_39 : f32 to vector<48x1xf32>
    %145 = arith.divf %143, %144 : vector<48x1xf32>
    %146 = vector.broadcast %145 : vector<48x1xf32> to vector<48x32xf32>
    %147 = arith.subf %141, %146 : vector<48x32xf32>
    %148 = arith.mulf %147, %147 : vector<48x32xf32>
    %cst_40 = arith.constant dense<0.000000e+00> : vector<48xf32>
    %149 = vector.multi_reduction <add>, %148, %cst_40 [1] : vector<48x32xf32> to vector<48xf32>
    %150 = vector.shape_cast %149 : vector<48xf32> to vector<48x1xf32>
    %cst_41 = arith.constant 3.200000e+01 : f32
    %151 = vector.broadcast %cst_41 : f32 to vector<48x1xf32>
    %152 = arith.divf %150, %151 : vector<48x1xf32>
    %153 = vector.broadcast %145 : vector<48x1xf32> to vector<48x32xf32>
    %154 = arith.subf %141, %153 : vector<48x32xf32>
    %cst_42 = arith.constant 9.99999974E-6 : f32
    %155 = vector.broadcast %cst_42 : f32 to vector<48x1xf32>
    %156 = arith.addf %152, %155 : vector<48x1xf32>
    %157 = math.rsqrt %156 : vector<48x1xf32>
    %158 = vector.broadcast %157 : vector<48x1xf32> to vector<48x32xf32>
    %159 = arith.mulf %154, %158 : vector<48x32xf32>
    %160 = vector.broadcast %9 : vector<1x32xf32> to vector<48x32xf32>
    %161 = arith.mulf %159, %160 : vector<48x32xf32>
    %162 = vector.broadcast %10 : vector<1x32xf32> to vector<48x32xf32>
    %163 = arith.addf %161, %162 : vector<48x32xf32>
    %164 = arith.truncf %163 : vector<48x32xf32> to vector<48x32xbf16>
    %cst_43 = arith.constant dense<0.000000e+00> : vector<48x128xf32>
    %165 = tpu.matmul %164, %5, %cst_43 {dimension_numbers = #tpu.dot_dimension_numbers<[1], [0], [0], [1], [0, 0, 1, 1], [], []>} : vector<48x32xbf16>, vector<32x128xbf16>, vector<48x128xf32> -> vector<48x128xf32>
    %166 = vector.broadcast %14 : vector<1x128xf32> to vector<48x128xf32>
    %167 = arith.addf %165, %166 : vector<48x128xf32>
    %168 = arith.mulf %167, %167 : vector<48x128xf32>
    %169 = arith.mulf %167, %168 : vector<48x128xf32>
    %cst_44 = arith.constant 4.471500e-02 : f32
    %170 = vector.broadcast %cst_44 : f32 to vector<48x128xf32>
    %171 = arith.mulf %170, %169 : vector<48x128xf32>
    %172 = arith.addf %167, %171 : vector<48x128xf32>
    %cst_45 = arith.constant 0.797884583 : f32
    %173 = vector.broadcast %cst_45 : f32 to vector<48x128xf32>
    %174 = arith.mulf %173, %172 : vector<48x128xf32>
    %175 = math.tanh %174 : vector<48x128xf32>
    %cst_46 = arith.constant 1.000000e+00 : f32
    %176 = vector.broadcast %cst_46 : f32 to vector<48x128xf32>
    %177 = arith.addf %176, %175 : vector<48x128xf32>
    %cst_47 = arith.constant 5.000000e-01 : f32
    %178 = vector.broadcast %cst_47 : f32 to vector<48x128xf32>
    %179 = arith.mulf %178, %177 : vector<48x128xf32>
    %180 = arith.mulf %167, %179 : vector<48x128xf32>
    %181 = arith.truncf %180 : vector<48x128xf32> to vector<48x128xbf16>
    %cst_48 = arith.constant dense<0.000000e+00> : vector<48x32xf32>
    %182 = tpu.matmul %181, %6, %cst_48 {dimension_numbers = #tpu.dot_dimension_numbers<[1], [0], [0], [1], [0, 0, 1, 1], [], []>} : vector<48x128xbf16>, vector<128x32xbf16>, vector<48x32xf32> -> vector<48x32xf32>
    %183 = arith.addf %141, %182 : vector<48x32xf32>
    %184 = vector.broadcast %12 : vector<1x32xf32> to vector<48x32xf32>
    %185 = arith.addf %183, %184 : vector<48x32xf32>
    %c0_49 = arith.constant 0 : index
    %c0_50 = arith.constant 0 : index
    %c0_51 = arith.constant 0 : index
    %186 = vector.load %arg7[%c0_49, %c0_50, %c0_51] : memref<5x16x48xbf16, #tpu.memory_space<vmem>>, vector<5x16x48xbf16>
    %c0_52 = arith.constant 0 : index
    %c0_53 = arith.constant 0 : index
    %c0_54 = arith.constant 0 : index
    %187 = vector.load %arg8[%c0_52, %c0_53, %c0_54] : memref<5x32x64xbf16, #tpu.memory_space<vmem>>, vector<5x32x64xbf16>
    %c0_55 = arith.constant 0 : index
    %c0_56 = arith.constant 0 : index
    %188 = vector.load %arg9[%c0_55, %c0_56] : memref<2x64xf32, #tpu.memory_space<vmem>>, vector<2x64xf32>
    %189 = arith.truncf %185 : vector<48x32xf32> to vector<48x32xbf16>
    %190 = vector.extract_strided_slice %186 {offsets = [0, 0, 0], sizes = [1, 16, 48], strides = [1, 1, 1]} : vector<5x16x48xbf16> to vector<1x16x48xbf16>
    %191 = vector.shape_cast %190 : vector<1x16x48xbf16> to vector<16x48xbf16>
    %cst_57 = arith.constant dense<0.000000e+00> : vector<16x32xf32>
    %192 = tpu.matmul %191, %189, %cst_57 {dimension_numbers = #tpu.dot_dimension_numbers<[1], [0], [0], [1], [0, 0, 1, 1], [], []>} : vector<16x48xbf16>, vector<48x32xbf16>, vector<16x32xf32> -> vector<16x32xf32>
    %193 = arith.truncf %192 : vector<16x32xf32> to vector<16x32xbf16>
    %194 = vector.extract_strided_slice %187 {offsets = [0, 0, 0], sizes = [1, 32, 64], strides = [1, 1, 1]} : vector<5x32x64xbf16> to vector<1x32x64xbf16>
    %195 = vector.shape_cast %194 : vector<1x32x64xbf16> to vector<32x64xbf16>
    %cst_58 = arith.constant dense<0.000000e+00> : vector<16x64xf32>
    %196 = tpu.matmul %193, %195, %cst_58 {dimension_numbers = #tpu.dot_dimension_numbers<[1], [0], [0], [1], [0, 0, 1, 1], [], []>} : vector<16x32xbf16>, vector<32x64xbf16>, vector<16x64xf32> -> vector<16x64xf32>
    %197 = vector.extract_strided_slice %186 {offsets = [1, 0, 0], sizes = [1, 16, 48], strides = [1, 1, 1]} : vector<5x16x48xbf16> to vector<1x16x48xbf16>
    %198 = vector.shape_cast %197 : vector<1x16x48xbf16> to vector<16x48xbf16>
    %cst_59 = arith.constant dense<0.000000e+00> : vector<16x32xf32>
    %199 = tpu.matmul %198, %189, %cst_59 {dimension_numbers = #tpu.dot_dimension_numbers<[1], [0], [0], [1], [0, 0, 1, 1], [], []>} : vector<16x48xbf16>, vector<48x32xbf16>, vector<16x32xf32> -> vector<16x32xf32>
    %200 = arith.truncf %199 : vector<16x32xf32> to vector<16x32xbf16>
    %201 = vector.extract_strided_slice %187 {offsets = [1, 0, 0], sizes = [1, 32, 64], strides = [1, 1, 1]} : vector<5x32x64xbf16> to vector<1x32x64xbf16>
    %202 = vector.shape_cast %201 : vector<1x32x64xbf16> to vector<32x64xbf16>
    %cst_60 = arith.constant dense<0.000000e+00> : vector<16x64xf32>
    %203 = tpu.matmul %200, %202, %cst_60 {dimension_numbers = #tpu.dot_dimension_numbers<[1], [0], [0], [1], [0, 0, 1, 1], [], []>} : vector<16x32xbf16>, vector<32x64xbf16>, vector<16x64xf32> -> vector<16x64xf32>
    %204 = arith.addf %196, %203 : vector<16x64xf32>
    %205 = vector.extract_strided_slice %186 {offsets = [2, 0, 0], sizes = [1, 16, 48], strides = [1, 1, 1]} : vector<5x16x48xbf16> to vector<1x16x48xbf16>
    %206 = vector.shape_cast %205 : vector<1x16x48xbf16> to vector<16x48xbf16>
    %cst_61 = arith.constant dense<0.000000e+00> : vector<16x32xf32>
    %207 = tpu.matmul %206, %189, %cst_61 {dimension_numbers = #tpu.dot_dimension_numbers<[1], [0], [0], [1], [0, 0, 1, 1], [], []>} : vector<16x48xbf16>, vector<48x32xbf16>, vector<16x32xf32> -> vector<16x32xf32>
    %208 = arith.truncf %207 : vector<16x32xf32> to vector<16x32xbf16>
    %209 = vector.extract_strided_slice %187 {offsets = [2, 0, 0], sizes = [1, 32, 64], strides = [1, 1, 1]} : vector<5x32x64xbf16> to vector<1x32x64xbf16>
    %210 = vector.shape_cast %209 : vector<1x32x64xbf16> to vector<32x64xbf16>
    %cst_62 = arith.constant dense<0.000000e+00> : vector<16x64xf32>
    %211 = tpu.matmul %208, %210, %cst_62 {dimension_numbers = #tpu.dot_dimension_numbers<[1], [0], [0], [1], [0, 0, 1, 1], [], []>} : vector<16x32xbf16>, vector<32x64xbf16>, vector<16x64xf32> -> vector<16x64xf32>
    %212 = arith.addf %204, %211 : vector<16x64xf32>
    %213 = vector.extract_strided_slice %186 {offsets = [3, 0, 0], sizes = [1, 16, 48], strides = [1, 1, 1]} : vector<5x16x48xbf16> to vector<1x16x48xbf16>
    %214 = vector.shape_cast %213 : vector<1x16x48xbf16> to vector<16x48xbf16>
    %cst_63 = arith.constant dense<0.000000e+00> : vector<16x32xf32>
    %215 = tpu.matmul %214, %189, %cst_63 {dimension_numbers = #tpu.dot_dimension_numbers<[1], [0], [0], [1], [0, 0, 1, 1], [], []>} : vector<16x48xbf16>, vector<48x32xbf16>, vector<16x32xf32> -> vector<16x32xf32>
    %216 = arith.truncf %215 : vector<16x32xf32> to vector<16x32xbf16>
    %217 = vector.extract_strided_slice %187 {offsets = [3, 0, 0], sizes = [1, 32, 64], strides = [1, 1, 1]} : vector<5x32x64xbf16> to vector<1x32x64xbf16>
    %218 = vector.shape_cast %217 : vector<1x32x64xbf16> to vector<32x64xbf16>
    %cst_64 = arith.constant dense<0.000000e+00> : vector<16x64xf32>
    %219 = tpu.matmul %216, %218, %cst_64 {dimension_numbers = #tpu.dot_dimension_numbers<[1], [0], [0], [1], [0, 0, 1, 1], [], []>} : vector<16x32xbf16>, vector<32x64xbf16>, vector<16x64xf32> -> vector<16x64xf32>
    %220 = arith.addf %212, %219 : vector<16x64xf32>
    %221 = vector.extract_strided_slice %186 {offsets = [4, 0, 0], sizes = [1, 16, 48], strides = [1, 1, 1]} : vector<5x16x48xbf16> to vector<1x16x48xbf16>
    %222 = vector.shape_cast %221 : vector<1x16x48xbf16> to vector<16x48xbf16>
    %cst_65 = arith.constant dense<0.000000e+00> : vector<16x32xf32>
    %223 = tpu.matmul %222, %189, %cst_65 {dimension_numbers = #tpu.dot_dimension_numbers<[1], [0], [0], [1], [0, 0, 1, 1], [], []>} : vector<16x48xbf16>, vector<48x32xbf16>, vector<16x32xf32> -> vector<16x32xf32>
    %224 = arith.truncf %223 : vector<16x32xf32> to vector<16x32xbf16>
    %225 = vector.extract_strided_slice %187 {offsets = [4, 0, 0], sizes = [1, 32, 64], strides = [1, 1, 1]} : vector<5x32x64xbf16> to vector<1x32x64xbf16>
    %226 = vector.shape_cast %225 : vector<1x32x64xbf16> to vector<32x64xbf16>
    %cst_66 = arith.constant dense<0.000000e+00> : vector<16x64xf32>
    %227 = tpu.matmul %224, %226, %cst_66 {dimension_numbers = #tpu.dot_dimension_numbers<[1], [0], [0], [1], [0, 0, 1, 1], [], []>} : vector<16x32xbf16>, vector<32x64xbf16>, vector<16x64xf32> -> vector<16x64xf32>
    %228 = arith.addf %220, %227 : vector<16x64xf32>
    %229 = tpu.iota {dimensions = array<i32: 0>} : vector<16x1xi32>
    %c2_i32 = arith.constant 2 : i32
    %230 = vector.broadcast %c2_i32 : i32 to vector<16x1xi32>
    %231 = arith.cmpi slt, %229, %230 : vector<16x1xi32>
    %232 = vector.extract_strided_slice %188 {offsets = [0, 0], sizes = [1, 64], strides = [1, 1]} : vector<2x64xf32> to vector<1x64xf32>
    %233 = vector.extract_strided_slice %188 {offsets = [1, 0], sizes = [1, 64], strides = [1, 1]} : vector<2x64xf32> to vector<1x64xf32>
    %234 = vector.shape_cast %231 : vector<16x1xi1> to vector<16x1xi1>
    %235 = vector.broadcast %234 : vector<16x1xi1> to vector<16x64xi1>
    %236 = vector.shape_cast %232 : vector<1x64xf32> to vector<1x64xf32>
    %237 = vector.broadcast %236 : vector<1x64xf32> to vector<16x64xf32>
    %238 = vector.shape_cast %233 : vector<1x64xf32> to vector<1x64xf32>
    %239 = vector.broadcast %238 : vector<1x64xf32> to vector<16x64xf32>
    %240 = arith.select %235, %237, %239 : vector<16x64xi1>, vector<16x64xf32>
    %241 = arith.addf %228, %240 : vector<16x64xf32>
    %c0_67 = arith.constant 0 : index
    %c0_68 = arith.constant 0 : index
    %242 = vector.load %arg10[%c0_67, %c0_68] : memref<8x256xf32, #tpu.memory_space<vmem>>, vector<8x256xf32>
    %c0_69 = arith.constant 0 : index
    %c0_70 = arith.constant 0 : index
    %243 = vector.load %arg11[%c0_69, %c0_70] : memref<64x192xbf16, #tpu.memory_space<vmem>>, vector<64x192xbf16>
    %c0_71 = arith.constant 0 : index
    %c0_72 = arith.constant 0 : index
    %244 = vector.load %arg12[%c0_71, %c0_72] : memref<64x64xbf16, #tpu.memory_space<vmem>>, vector<64x64xbf16>
    %c0_73 = arith.constant 0 : index
    %c0_74 = arith.constant 0 : index
    %245 = vector.load %arg13[%c0_73, %c0_74] : memref<64x256xbf16, #tpu.memory_space<vmem>>, vector<64x256xbf16>
    %c0_75 = arith.constant 0 : index
    %c0_76 = arith.constant 0 : index
    %246 = vector.load %arg14[%c0_75, %c0_76] : memref<256x64xbf16, #tpu.memory_space<vmem>>, vector<256x64xbf16>
    %247 = vector.extract_strided_slice %242 {offsets = [0, 0], sizes = [1, 64], strides = [1, 1]} : vector<8x256xf32> to vector<1x64xf32>
    %248 = vector.extract_strided_slice %242 {offsets = [1, 0], sizes = [1, 64], strides = [1, 1]} : vector<8x256xf32> to vector<1x64xf32>
    %249 = vector.extract_strided_slice %242 {offsets = [2, 0], sizes = [1, 64], strides = [1, 1]} : vector<8x256xf32> to vector<1x64xf32>
    %250 = vector.extract_strided_slice %242 {offsets = [3, 0], sizes = [1, 64], strides = [1, 1]} : vector<8x256xf32> to vector<1x64xf32>
    %251 = vector.extract_strided_slice %242 {offsets = [4, 0], sizes = [1, 64], strides = [1, 1]} : vector<8x256xf32> to vector<1x64xf32>
    %252 = vector.extract_strided_slice %242 {offsets = [5, 0], sizes = [1, 64], strides = [1, 1]} : vector<8x256xf32> to vector<1x64xf32>
    %253 = vector.extract_strided_slice %242 {offsets = [6, 0], sizes = [1, 192], strides = [1, 1]} : vector<8x256xf32> to vector<1x192xf32>
    %254 = vector.extract_strided_slice %242 {offsets = [7, 0], sizes = [1, 256], strides = [1, 1]} : vector<8x256xf32> to vector<1x256xf32>
    %cst_77 = arith.constant dense<0.000000e+00> : vector<16xf32>
    %255 = vector.multi_reduction <add>, %241, %cst_77 [1] : vector<16x64xf32> to vector<16xf32>
    %256 = vector.shape_cast %255 : vector<16xf32> to vector<16x1xf32>
    %cst_78 = arith.constant 6.400000e+01 : f32
    %257 = vector.broadcast %cst_78 : f32 to vector<16x1xf32>
    %258 = arith.divf %256, %257 : vector<16x1xf32>
    %259 = vector.broadcast %258 : vector<16x1xf32> to vector<16x64xf32>
    %260 = arith.subf %241, %259 : vector<16x64xf32>
    %261 = arith.mulf %260, %260 : vector<16x64xf32>
    %cst_79 = arith.constant dense<0.000000e+00> : vector<16xf32>
    %262 = vector.multi_reduction <add>, %261, %cst_79 [1] : vector<16x64xf32> to vector<16xf32>
    %263 = vector.shape_cast %262 : vector<16xf32> to vector<16x1xf32>
    %cst_80 = arith.constant 6.400000e+01 : f32
    %264 = vector.broadcast %cst_80 : f32 to vector<16x1xf32>
    %265 = arith.divf %263, %264 : vector<16x1xf32>
    %266 = vector.broadcast %258 : vector<16x1xf32> to vector<16x64xf32>
    %267 = arith.subf %241, %266 : vector<16x64xf32>
    %cst_81 = arith.constant 9.99999974E-6 : f32
    %268 = vector.broadcast %cst_81 : f32 to vector<16x1xf32>
    %269 = arith.addf %265, %268 : vector<16x1xf32>
    %270 = math.rsqrt %269 : vector<16x1xf32>
    %271 = vector.broadcast %270 : vector<16x1xf32> to vector<16x64xf32>
    %272 = arith.mulf %267, %271 : vector<16x64xf32>
    %273 = vector.broadcast %247 : vector<1x64xf32> to vector<16x64xf32>
    %274 = arith.mulf %272, %273 : vector<16x64xf32>
    %275 = vector.broadcast %248 : vector<1x64xf32> to vector<16x64xf32>
    %276 = arith.addf %274, %275 : vector<16x64xf32>
    %277 = arith.truncf %276 : vector<16x64xf32> to vector<16x64xbf16>
    %cst_82 = arith.constant dense<0.000000e+00> : vector<16x192xf32>
    %278 = tpu.matmul %277, %243, %cst_82 {dimension_numbers = #tpu.dot_dimension_numbers<[1], [0], [0], [1], [0, 0, 1, 1], [], []>} : vector<16x64xbf16>, vector<64x192xbf16>, vector<16x192xf32> -> vector<16x192xf32>
    %279 = vector.broadcast %253 : vector<1x192xf32> to vector<16x192xf32>
    %280 = arith.addf %278, %279 : vector<16x192xf32>
    %281 = tpu.iota {dimensions = array<i32: 1>} : vector<1x16xi32>
    %c10_i32 = arith.constant 10 : i32
    %282 = vector.broadcast %c10_i32 : i32 to vector<1x16xi32>
    %283 = arith.cmpi slt, %281, %282 : vector<1x16xi32>
    %284 = vector.extract_strided_slice %280 {offsets = [0, 0], sizes = [16, 16], strides = [1, 1]} : vector<16x192xf32> to vector<16x16xf32>
    %285 = arith.truncf %284 : vector<16x16xf32> to vector<16x16xbf16>
    %286 = vector.extract_strided_slice %280 {offsets = [0, 64], sizes = [16, 16], strides = [1, 1]} : vector<16x192xf32> to vector<16x16xf32>
    %287 = arith.truncf %286 : vector<16x16xf32> to vector<16x16xbf16>
    %288 = vector.extract_strided_slice %280 {offsets = [0, 128], sizes = [16, 16], strides = [1, 1]} : vector<16x192xf32> to vector<16x16xf32>
    %289 = arith.truncf %288 : vector<16x16xf32> to vector<16x16xbf16>
    "tpu.trace_start"() <{level = 10 : i32, message = "qd,kd->qk"}> : () -> ()
    %cst_83 = arith.constant dense<0.000000e+00> : vector<16x16xf32>
    %290 = tpu.matmul %285, %287, %cst_83 {dimension_numbers = #tpu.dot_dimension_numbers<[1], [1], [0], [0], [0, 0, 1, 0], [], []>} : vector<16x16xbf16>, vector<16x16xbf16>, vector<16x16xf32> -> vector<16x16xf32>
    %cst_84 = arith.constant -1.000000e+30 : f32
    "tpu.trace_stop"() : () -> ()
    %291 = vector.shape_cast %283 : vector<1x16xi1> to vector<1x16xi1>
    %292 = vector.broadcast %291 : vector<1x16xi1> to vector<16x16xi1>
    %293 = vector.broadcast %cst_84 : f32 to vector<16x16xf32>
    %294 = arith.select %292, %290, %293 : vector<16x16xi1>, vector<16x16xf32>
    %cst_85 = arith.constant dense<0xFF800000> : vector<16xf32>
    %295 = vector.multi_reduction <maximumf>, %294, %cst_85 [1] : vector<16x16xf32> to vector<16xf32>
    %296 = vector.shape_cast %295 : vector<16xf32> to vector<16x1xf32>
    %297 = vector.broadcast %296 : vector<16x1xf32> to vector<16x16xf32>
    %298 = arith.subf %294, %297 : vector<16x16xf32>
    %299 = math.exp %298 : vector<16x16xf32>
    %cst_86 = arith.constant dense<0.000000e+00> : vector<16xf32>
    %300 = vector.multi_reduction <add>, %299, %cst_86 [1] : vector<16x16xf32> to vector<16xf32>
    %301 = vector.shape_cast %300 : vector<16xf32> to vector<16x1xf32>
    %302 = tpu.reciprocal %301 {approx = true} : vector<16x1xf32> -> vector<16x1xf32>
    %303 = vector.broadcast %302 : vector<16x1xf32> to vector<16x16xf32>
    %304 = arith.mulf %299, %303 : vector<16x16xf32>
    %305 = arith.truncf %304 : vector<16x16xf32> to vector<16x16xbf16>
    %cst_87 = arith.constant dense<0.000000e+00> : vector<16x16xf32>
    %306 = tpu.matmul %305, %289, %cst_87 {dimension_numbers = #tpu.dot_dimension_numbers<[1], [0], [0], [1], [0, 0, 1, 1], [], []>} : vector<16x16xbf16>, vector<16x16xbf16>, vector<16x16xf32> -> vector<16x16xf32>
    %307 = vector.extract_strided_slice %280 {offsets = [0, 16], sizes = [16, 16], strides = [1, 1]} : vector<16x192xf32> to vector<16x16xf32>
    %308 = arith.truncf %307 : vector<16x16xf32> to vector<16x16xbf16>
    %309 = vector.extract_strided_slice %280 {offsets = [0, 80], sizes = [16, 16], strides = [1, 1]} : vector<16x192xf32> to vector<16x16xf32>
    %310 = arith.truncf %309 : vector<16x16xf32> to vector<16x16xbf16>
    %311 = vector.extract_strided_slice %280 {offsets = [0, 144], sizes = [16, 16], strides = [1, 1]} : vector<16x192xf32> to vector<16x16xf32>
    %312 = arith.truncf %311 : vector<16x16xf32> to vector<16x16xbf16>
    "tpu.trace_start"() <{level = 10 : i32, message = "qd,kd->qk"}> : () -> ()
    %cst_88 = arith.constant dense<0.000000e+00> : vector<16x16xf32>
    %313 = tpu.matmul %308, %310, %cst_88 {dimension_numbers = #tpu.dot_dimension_numbers<[1], [1], [0], [0], [0, 0, 1, 0], [], []>} : vector<16x16xbf16>, vector<16x16xbf16>, vector<16x16xf32> -> vector<16x16xf32>
    %cst_89 = arith.constant -1.000000e+30 : f32
    "tpu.trace_stop"() : () -> ()
    %314 = vector.shape_cast %283 : vector<1x16xi1> to vector<1x16xi1>
    %315 = vector.broadcast %314 : vector<1x16xi1> to vector<16x16xi1>
    %316 = vector.broadcast %cst_89 : f32 to vector<16x16xf32>
    %317 = arith.select %315, %313, %316 : vector<16x16xi1>, vector<16x16xf32>
    %cst_90 = arith.constant dense<0xFF800000> : vector<16xf32>
    %318 = vector.multi_reduction <maximumf>, %317, %cst_90 [1] : vector<16x16xf32> to vector<16xf32>
    %319 = vector.shape_cast %318 : vector<16xf32> to vector<16x1xf32>
    %320 = vector.broadcast %319 : vector<16x1xf32> to vector<16x16xf32>
    %321 = arith.subf %317, %320 : vector<16x16xf32>
    %322 = math.exp %321 : vector<16x16xf32>
    %cst_91 = arith.constant dense<0.000000e+00> : vector<16xf32>
    %323 = vector.multi_reduction <add>, %322, %cst_91 [1] : vector<16x16xf32> to vector<16xf32>
    %324 = vector.shape_cast %323 : vector<16xf32> to vector<16x1xf32>
    %325 = tpu.reciprocal %324 {approx = true} : vector<16x1xf32> -> vector<16x1xf32>
    %326 = vector.broadcast %325 : vector<16x1xf32> to vector<16x16xf32>
    %327 = arith.mulf %322, %326 : vector<16x16xf32>
    %328 = arith.truncf %327 : vector<16x16xf32> to vector<16x16xbf16>
    %cst_92 = arith.constant dense<0.000000e+00> : vector<16x16xf32>
    %329 = tpu.matmul %328, %312, %cst_92 {dimension_numbers = #tpu.dot_dimension_numbers<[1], [0], [0], [1], [0, 0, 1, 1], [], []>} : vector<16x16xbf16>, vector<16x16xbf16>, vector<16x16xf32> -> vector<16x16xf32>
    %330 = vector.extract_strided_slice %280 {offsets = [0, 32], sizes = [16, 16], strides = [1, 1]} : vector<16x192xf32> to vector<16x16xf32>
    %331 = arith.truncf %330 : vector<16x16xf32> to vector<16x16xbf16>
    %332 = vector.extract_strided_slice %280 {offsets = [0, 96], sizes = [16, 16], strides = [1, 1]} : vector<16x192xf32> to vector<16x16xf32>
    %333 = arith.truncf %332 : vector<16x16xf32> to vector<16x16xbf16>
    %334 = vector.extract_strided_slice %280 {offsets = [0, 160], sizes = [16, 16], strides = [1, 1]} : vector<16x192xf32> to vector<16x16xf32>
    %335 = arith.truncf %334 : vector<16x16xf32> to vector<16x16xbf16>
    "tpu.trace_start"() <{level = 10 : i32, message = "qd,kd->qk"}> : () -> ()
    %cst_93 = arith.constant dense<0.000000e+00> : vector<16x16xf32>
    %336 = tpu.matmul %331, %333, %cst_93 {dimension_numbers = #tpu.dot_dimension_numbers<[1], [1], [0], [0], [0, 0, 1, 0], [], []>} : vector<16x16xbf16>, vector<16x16xbf16>, vector<16x16xf32> -> vector<16x16xf32>
    %cst_94 = arith.constant -1.000000e+30 : f32
    "tpu.trace_stop"() : () -> ()
    %337 = vector.shape_cast %283 : vector<1x16xi1> to vector<1x16xi1>
    %338 = vector.broadcast %337 : vector<1x16xi1> to vector<16x16xi1>
    %339 = vector.broadcast %cst_94 : f32 to vector<16x16xf32>
    %340 = arith.select %338, %336, %339 : vector<16x16xi1>, vector<16x16xf32>
    %cst_95 = arith.constant dense<0xFF800000> : vector<16xf32>
    %341 = vector.multi_reduction <maximumf>, %340, %cst_95 [1] : vector<16x16xf32> to vector<16xf32>
    %342 = vector.shape_cast %341 : vector<16xf32> to vector<16x1xf32>
    %343 = vector.broadcast %342 : vector<16x1xf32> to vector<16x16xf32>
    %344 = arith.subf %340, %343 : vector<16x16xf32>
    %345 = math.exp %344 : vector<16x16xf32>
    %cst_96 = arith.constant dense<0.000000e+00> : vector<16xf32>
    %346 = vector.multi_reduction <add>, %345, %cst_96 [1] : vector<16x16xf32> to vector<16xf32>
    %347 = vector.shape_cast %346 : vector<16xf32> to vector<16x1xf32>
    %348 = tpu.reciprocal %347 {approx = true} : vector<16x1xf32> -> vector<16x1xf32>
    %349 = vector.broadcast %348 : vector<16x1xf32> to vector<16x16xf32>
    %350 = arith.mulf %345, %349 : vector<16x16xf32>
    %351 = arith.truncf %350 : vector<16x16xf32> to vector<16x16xbf16>
    %cst_97 = arith.constant dense<0.000000e+00> : vector<16x16xf32>
    %352 = tpu.matmul %351, %335, %cst_97 {dimension_numbers = #tpu.dot_dimension_numbers<[1], [0], [0], [1], [0, 0, 1, 1], [], []>} : vector<16x16xbf16>, vector<16x16xbf16>, vector<16x16xf32> -> vector<16x16xf32>
    %353 = vector.extract_strided_slice %280 {offsets = [0, 48], sizes = [16, 16], strides = [1, 1]} : vector<16x192xf32> to vector<16x16xf32>
    %354 = arith.truncf %353 : vector<16x16xf32> to vector<16x16xbf16>
    %355 = vector.extract_strided_slice %280 {offsets = [0, 112], sizes = [16, 16], strides = [1, 1]} : vector<16x192xf32> to vector<16x16xf32>
    %356 = arith.truncf %355 : vector<16x16xf32> to vector<16x16xbf16>
    %357 = vector.extract_strided_slice %280 {offsets = [0, 176], sizes = [16, 16], strides = [1, 1]} : vector<16x192xf32> to vector<16x16xf32>
    %358 = arith.truncf %357 : vector<16x16xf32> to vector<16x16xbf16>
    "tpu.trace_start"() <{level = 10 : i32, message = "qd,kd->qk"}> : () -> ()
    %cst_98 = arith.constant dense<0.000000e+00> : vector<16x16xf32>
    %359 = tpu.matmul %354, %356, %cst_98 {dimension_numbers = #tpu.dot_dimension_numbers<[1], [1], [0], [0], [0, 0, 1, 0], [], []>} : vector<16x16xbf16>, vector<16x16xbf16>, vector<16x16xf32> -> vector<16x16xf32>
    %cst_99 = arith.constant -1.000000e+30 : f32
    "tpu.trace_stop"() : () -> ()
    %360 = vector.shape_cast %283 : vector<1x16xi1> to vector<1x16xi1>
    %361 = vector.broadcast %360 : vector<1x16xi1> to vector<16x16xi1>
    %362 = vector.broadcast %cst_99 : f32 to vector<16x16xf32>
    %363 = arith.select %361, %359, %362 : vector<16x16xi1>, vector<16x16xf32>
    %cst_100 = arith.constant dense<0xFF800000> : vector<16xf32>
    %364 = vector.multi_reduction <maximumf>, %363, %cst_100 [1] : vector<16x16xf32> to vector<16xf32>
    %365 = vector.shape_cast %364 : vector<16xf32> to vector<16x1xf32>
    %366 = vector.broadcast %365 : vector<16x1xf32> to vector<16x16xf32>
    %367 = arith.subf %363, %366 : vector<16x16xf32>
    %368 = math.exp %367 : vector<16x16xf32>
    %cst_101 = arith.constant dense<0.000000e+00> : vector<16xf32>
    %369 = vector.multi_reduction <add>, %368, %cst_101 [1] : vector<16x16xf32> to vector<16xf32>
    %370 = vector.shape_cast %369 : vector<16xf32> to vector<16x1xf32>
    %371 = tpu.reciprocal %370 {approx = true} : vector<16x1xf32> -> vector<16x1xf32>
    %372 = vector.broadcast %371 : vector<16x1xf32> to vector<16x16xf32>
    %373 = arith.mulf %368, %372 : vector<16x16xf32>
    %374 = arith.truncf %373 : vector<16x16xf32> to vector<16x16xbf16>
    %cst_102 = arith.constant dense<0.000000e+00> : vector<16x16xf32>
    %375 = tpu.matmul %374, %358, %cst_102 {dimension_numbers = #tpu.dot_dimension_numbers<[1], [0], [0], [1], [0, 0, 1, 1], [], []>} : vector<16x16xbf16>, vector<16x16xbf16>, vector<16x16xf32> -> vector<16x16xf32>
    %376 = tpu.concatenate %306, %329, %352, %375 in 1 : vector<16x16xf32>, vector<16x16xf32>, vector<16x16xf32>, vector<16x16xf32> -> vector<16x64xf32>
    %377 = arith.truncf %376 : vector<16x64xf32> to vector<16x64xbf16>
    %cst_103 = arith.constant dense<0.000000e+00> : vector<16x64xf32>
    %378 = tpu.matmul %377, %244, %cst_103 {dimension_numbers = #tpu.dot_dimension_numbers<[1], [0], [0], [1], [0, 0, 1, 1], [], []>} : vector<16x64xbf16>, vector<64x64xbf16>, vector<16x64xf32> -> vector<16x64xf32>
    %379 = arith.addf %241, %378 : vector<16x64xf32>
    %380 = vector.broadcast %251 : vector<1x64xf32> to vector<16x64xf32>
    %381 = arith.addf %379, %380 : vector<16x64xf32>
    %cst_104 = arith.constant dense<0.000000e+00> : vector<16xf32>
    %382 = vector.multi_reduction <add>, %381, %cst_104 [1] : vector<16x64xf32> to vector<16xf32>
    %383 = vector.shape_cast %382 : vector<16xf32> to vector<16x1xf32>
    %cst_105 = arith.constant 6.400000e+01 : f32
    %384 = vector.broadcast %cst_105 : f32 to vector<16x1xf32>
    %385 = arith.divf %383, %384 : vector<16x1xf32>
    %386 = vector.broadcast %385 : vector<16x1xf32> to vector<16x64xf32>
    %387 = arith.subf %381, %386 : vector<16x64xf32>
    %388 = arith.mulf %387, %387 : vector<16x64xf32>
    %cst_106 = arith.constant dense<0.000000e+00> : vector<16xf32>
    %389 = vector.multi_reduction <add>, %388, %cst_106 [1] : vector<16x64xf32> to vector<16xf32>
    %390 = vector.shape_cast %389 : vector<16xf32> to vector<16x1xf32>
    %cst_107 = arith.constant 6.400000e+01 : f32
    %391 = vector.broadcast %cst_107 : f32 to vector<16x1xf32>
    %392 = arith.divf %390, %391 : vector<16x1xf32>
    %393 = vector.broadcast %385 : vector<16x1xf32> to vector<16x64xf32>
    %394 = arith.subf %381, %393 : vector<16x64xf32>
    %cst_108 = arith.constant 9.99999974E-6 : f32
    %395 = vector.broadcast %cst_108 : f32 to vector<16x1xf32>
    %396 = arith.addf %392, %395 : vector<16x1xf32>
    %397 = math.rsqrt %396 : vector<16x1xf32>
    %398 = vector.broadcast %397 : vector<16x1xf32> to vector<16x64xf32>
    %399 = arith.mulf %394, %398 : vector<16x64xf32>
    %400 = vector.broadcast %249 : vector<1x64xf32> to vector<16x64xf32>
    %401 = arith.mulf %399, %400 : vector<16x64xf32>
    %402 = vector.broadcast %250 : vector<1x64xf32> to vector<16x64xf32>
    %403 = arith.addf %401, %402 : vector<16x64xf32>
    %404 = arith.truncf %403 : vector<16x64xf32> to vector<16x64xbf16>
    %cst_109 = arith.constant dense<0.000000e+00> : vector<16x256xf32>
    %405 = tpu.matmul %404, %245, %cst_109 {dimension_numbers = #tpu.dot_dimension_numbers<[1], [0], [0], [1], [0, 0, 1, 1], [], []>} : vector<16x64xbf16>, vector<64x256xbf16>, vector<16x256xf32> -> vector<16x256xf32>
    %406 = vector.broadcast %254 : vector<1x256xf32> to vector<16x256xf32>
    %407 = arith.addf %405, %406 : vector<16x256xf32>
    %408 = arith.mulf %407, %407 : vector<16x256xf32>
    %409 = arith.mulf %407, %408 : vector<16x256xf32>
    %cst_110 = arith.constant 4.471500e-02 : f32
    %410 = vector.broadcast %cst_110 : f32 to vector<16x256xf32>
    %411 = arith.mulf %410, %409 : vector<16x256xf32>
    %412 = arith.addf %407, %411 : vector<16x256xf32>
    %cst_111 = arith.constant 0.797884583 : f32
    %413 = vector.broadcast %cst_111 : f32 to vector<16x256xf32>
    %414 = arith.mulf %413, %412 : vector<16x256xf32>
    %415 = math.tanh %414 : vector<16x256xf32>
    %cst_112 = arith.constant 1.000000e+00 : f32
    %416 = vector.broadcast %cst_112 : f32 to vector<16x256xf32>
    %417 = arith.addf %416, %415 : vector<16x256xf32>
    %cst_113 = arith.constant 5.000000e-01 : f32
    %418 = vector.broadcast %cst_113 : f32 to vector<16x256xf32>
    %419 = arith.mulf %418, %417 : vector<16x256xf32>
    %420 = arith.mulf %407, %419 : vector<16x256xf32>
    %421 = arith.truncf %420 : vector<16x256xf32> to vector<16x256xbf16>
    %cst_114 = arith.constant dense<0.000000e+00> : vector<16x64xf32>
    %422 = tpu.matmul %421, %246, %cst_114 {dimension_numbers = #tpu.dot_dimension_numbers<[1], [0], [0], [1], [0, 0, 1, 1], [], []>} : vector<16x256xbf16>, vector<256x64xbf16>, vector<16x64xf32> -> vector<16x64xf32>
    %423 = arith.addf %381, %422 : vector<16x64xf32>
    %424 = vector.broadcast %252 : vector<1x64xf32> to vector<16x64xf32>
    %425 = arith.addf %423, %424 : vector<16x64xf32>
    %c0_115 = arith.constant 0 : index
    %c0_116 = arith.constant 0 : index
    %c0_117 = arith.constant 0 : index
    %426 = vector.load %arg15[%c0_115, %c0_116, %c0_117] : memref<1x16x64xf32, #tpu.memory_space<vmem>>, vector<1x16x64xf32>
    %427 = vector.shape_cast %426 : vector<1x16x64xf32> to vector<16x64xf32>
    %428 = vector.shape_cast %425 : vector<16x64xf32> to vector<1x16x64xf32>
    tpu.vector_store %arg15[%c0_115, %c0_116, %c0_117], %428 {strides = array<i32>} : memref<1x16x64xf32, #tpu.memory_space<vmem>>, vector<1x16x64xf32>,
    return
  }
  func.func @transform_0(%arg0: i32) -> (i32, i32, i32) {
    %c0_i32 = arith.constant 0 : i32
    %c0_i32_0 = arith.constant 0 : i32
    %c0_i32_1 = arith.constant 0 : i32
    return %arg0, %c0_i32, %c0_i32_0 : i32, i32, i32
  }
  func.func @transform_1(%arg0: i32) -> (i32, i32) {
    %c0_i32 = arith.constant 0 : i32
    %c0_i32_0 = arith.constant 0 : i32
    %c0_i32_1 = arith.constant 0 : i32
    return %c0_i32, %c0_i32_0 : i32, i32
  }
  func.func @transform_2(%arg0: i32) -> (i32, i32) {
    %c0_i32 = arith.constant 0 : i32
    %c0_i32_0 = arith.constant 0 : i32
    %c0_i32_1 = arith.constant 0 : i32
    return %c0_i32, %c0_i32_0 : i32, i32
  }
  func.func @transform_3(%arg0: i32) -> (i32, i32) {
    %c0_i32 = arith.constant 0 : i32
    %c0_i32_0 = arith.constant 0 : i32
    %c0_i32_1 = arith.constant 0 : i32
    return %c0_i32, %c0_i32_0 : i32, i32
  }
  func.func @transform_4(%arg0: i32) -> (i32, i32) {
    %c0_i32 = arith.constant 0 : i32
    %c0_i32_0 = arith.constant 0 : i32
    %c0_i32_1 = arith.constant 0 : i32
    return %c0_i32, %c0_i32_0 : i32, i32
  }
  func.func @transform_5(%arg0: i32) -> (i32, i32) {
    %c0_i32 = arith.constant 0 : i32
    %c0_i32_0 = arith.constant 0 : i32
    %c0_i32_1 = arith.constant 0 : i32
    return %c0_i32, %c0_i32_0 : i32, i32
  }
  func.func @transform_6(%arg0: i32) -> (i32, i32, i32) {
    %c0_i32 = arith.constant 0 : i32
    %c0_i32_0 = arith.constant 0 : i32
    %c0_i32_1 = arith.constant 0 : i32
    %c0_i32_2 = arith.constant 0 : i32
    return %c0_i32, %c0_i32_0, %c0_i32_1 : i32, i32, i32
  }
  func.func @transform_7(%arg0: i32) -> (i32, i32, i32) {
    %c0_i32 = arith.constant 0 : i32
    %c0_i32_0 = arith.constant 0 : i32
    %c0_i32_1 = arith.constant 0 : i32
    %c0_i32_2 = arith.constant 0 : i32
    return %c0_i32, %c0_i32_0, %c0_i32_1 : i32, i32, i32
  }
  func.func @transform_8(%arg0: i32) -> (i32, i32) {
    %c0_i32 = arith.constant 0 : i32
    %c0_i32_0 = arith.constant 0 : i32
    %c0_i32_1 = arith.constant 0 : i32
    return %c0_i32, %c0_i32_0 : i32, i32
  }
  func.func @transform_9(%arg0: i32) -> (i32, i32) {
    %c0_i32 = arith.constant 0 : i32
    %c0_i32_0 = arith.constant 0 : i32
    %c0_i32_1 = arith.constant 0 : i32
    return %c0_i32, %c0_i32_0 : i32, i32
  }
  func.func @transform_10(%arg0: i32) -> (i32, i32) {
    %c0_i32 = arith.constant 0 : i32
    %c0_i32_0 = arith.constant 0 : i32
    %c0_i32_1 = arith.constant 0 : i32
    return %c0_i32, %c0_i32_0 : i32, i32
  }
  func.func @transform_11(%arg0: i32) -> (i32, i32) {
    %c0_i32 = arith.constant 0 : i32
    %c0_i32_0 = arith.constant 0 : i32
    %c0_i32_1 = arith.constant 0 : i32
    return %c0_i32, %c0_i32_0 : i32, i32
  }
  func.func @transform_12(%arg0: i32) -> (i32, i32) {
    %c0_i32 = arith.constant 0 : i32
    %c0_i32_0 = arith.constant 0 : i32
    %c0_i32_1 = arith.constant 0 : i32
    return %c0_i32, %c0_i32_0 : i32, i32
  }
  func.func @transform_13(%arg0: i32) -> (i32, i32) {
    %c0_i32 = arith.constant 0 : i32
    %c0_i32_0 = arith.constant 0 : i32
    %c0_i32_1 = arith.constant 0 : i32
    return %c0_i32, %c0_i32_0 : i32, i32
  }
  func.func @transform_14(%arg0: i32) -> (i32, i32, i32) {
    %c0_i32 = arith.constant 0 : i32
    %c0_i32_0 = arith.constant 0 : i32
    %c0_i32_1 = arith.constant 0 : i32
    return %arg0, %c0_i32, %c0_i32_0 : i32, i32, i32
  }
}

</mosaic_0001>

<llo_original>
// kernel: a_call__.1
$region0: #{a_call__.1}
  #allocation0 [shape = 'u32[]', space=smem, size = 0x4, offset = 0x4, fixed_abs, tag = 'smem constant byte address 0x4 - core index']
  #allocation1 [shape = 'u32[144,128]{1,0:T(1,128)}', space=vmem, size = 0x12000, scoped, tag = 'internal scratch']
  %s0 = inlined_call_operand.vmem [shape: f32[2,48,32], index: 0, kind: input, shape index: {}]
  %s1 = inlined_call_operand.vmem [shape: f32[8,128], index: 1, kind: input, shape index: {}]
  %s2 = inlined_call_operand.vmem [shape: bf16[32,96], index: 2, kind: input, shape index: {}]
  %s3 = inlined_call_operand.vmem [shape: bf16[32,32], index: 3, kind: input, shape index: {}]
  %s4 = inlined_call_operand.vmem [shape: bf16[32,128], index: 4, kind: input, shape index: {}]
  %s5 = inlined_call_operand.vmem [shape: bf16[128,32], index: 5, kind: input, shape index: {}]
  %s6 = inlined_call_operand.vmem [shape: bf16[5,16,48], index: 6, kind: input, shape index: {}]
  %s7 = inlined_call_operand.vmem [shape: bf16[5,32,64], index: 7, kind: input, shape index: {}]
  %s8 = inlined_call_operand.vmem [shape: f32[2,64], index: 8, kind: input, shape index: {}]
  %s9 = inlined_call_operand.vmem [shape: f32[8,256], index: 9, kind: input, shape index: {}]
  %s10 = inlined_call_operand.vmem [shape: bf16[64,192], index: 10, kind: input, shape index: {}]
  %s11 = inlined_call_operand.vmem [shape: bf16[64,64], index: 11, kind: input, shape index: {}]
  %s12 = inlined_call_operand.vmem [shape: bf16[64,256], index: 12, kind: input, shape index: {}]
  %s13 = inlined_call_operand.vmem [shape: bf16[256,64], index: 13, kind: input, shape index: {}]
  %s14 = inlined_call_operand.vmem [shape: f32[2,16,64], index: 14, kind: output, shape index: {}]
  %s15 = sld [smem:[#allocation0]]
  $region89: #{a_call__.1} parent=0
    _
  %s17 = ssub.s32 1, %s15
  %s18 = scalar_select 0, %s17, %s15
  loop: start=0, step=1, limit=4
  $region2: #{a_call__.1} parent=0 // loop_pre_header
    _
  $region3: #{a_call__.1} parent=0 // loop_header
    %s20 = sphi 0, %s24
    %p21 = scmp.ge.s32.totalorder %s20, 4
    %s30 = sphi 0, %s32
    %s33 = sphi 0, %s30
    %s34 = sphi 0, %s33
    %s50 = sphi 0, %s34
    %s54 = sphi 0, %s54
    %s56 = sphi 0, %s54
    %s57 = sphi 0, %s56
    %s71 = sphi 0, %s57
    %s75 = sphi 0, %s75
    %s77 = sphi 0, %s75
    %s78 = sphi 0, %s77
    %s92 = sphi 0, %s78
    %s96 = sphi 0, %s96
    %s98 = sphi 0, %s96
    %s99 = sphi 0, %s98
    %s113 = sphi 0, %s99
    %s117 = sphi 0, %s117
    %s119 = sphi 0, %s117
    %s120 = sphi 0, %s119
    %s134 = sphi 0, %s120
    %s138 = sphi 0, %s138
    %s140 = sphi 0, %s138
    %s141 = sphi 0, %s140
    %s155 = sphi 0, %s141
    %s159 = sphi 0, %s159
    %s161 = sphi 0, %s159
    %s162 = sphi 0, %s161
    %s176 = sphi 0, %s162
    %s180 = sphi 0, %s180
    %s182 = sphi 0, %s180
    %s183 = sphi 0, %s182
    %s197 = sphi 0, %s183
    %s201 = sphi 0, %s201
    %s203 = sphi 0, %s201
    %s204 = sphi 0, %s203
    %s218 = sphi 0, %s204
    %s222 = sphi 0, %s222
    %s224 = sphi 0, %s222
    %s225 = sphi 0, %s224
    %s239 = sphi 0, %s225
    %s243 = sphi 0, %s243
    %s245 = sphi 0, %s243
    %s246 = sphi 0, %s245
    %s260 = sphi 0, %s246
    %s264 = sphi 0, %s264
    %s266 = sphi 0, %s264
    %s267 = sphi 0, %s266
    %s281 = sphi 0, %s267
    %s285 = sphi 0, %s285
    %s287 = sphi 0, %s285
    %s288 = sphi 0, %s287
    %s302 = sphi 0, %s288
    %s306 = sphi 0, %s306
    %s308 = sphi 0, %s306
    %s309 = sphi 0, %s308
    %s323 = sphi 0, %s309
    %s329 = sphi 0, %s331
    %s332 = sphi 0, %s329
    %s333 = sphi 0, %s332
    %s349 = sphi 0, %s333
  $region4: #{a_call__.1} parent=0 // loop_header_branch
    %23 = sbr.rel (%p21) target = $region8
  $region5: #{a_call__.1} parent=0 // loop_body
    %s25 = ssub.s32 %s20, 1
    %s26 = ssub.s32 %s20, 2
    %s27 = sadd.s32 %s20, 1
    %s28 = ssub.s32 %s20, %s27
    %p29 = scmp.eq.s32.totalorder %s28, 0
    %s31 = sadd.s32 %s30, 1
    %s32 = scalar_select %p29, %s30, %s31
    %p35 = pneg %p29
    %p36 = scmp.eq.s32.totalorder %s20, 1
    %p37 = por %p35, %p36
    %p38 = scmp.ne.s32.totalorder %s30, %s33
    %p39 = scmp.eq.s32.totalorder %s20, 0
    %p40 = por %p38, %p39
    %p41 = scmp.ne.s32.totalorder %s30, %s33
    %p42 = scmp.eq.s32.totalorder %s25, 1
    %p43 = por %p41, %p42
    %p44 = scmp.ne.s32.totalorder %s33, %s34
    %p45 = scmp.eq.s32.totalorder %s25, 0
    %p46 = por %p44, %p45
    %p47 = scmp.ne.s32.totalorder %s33, %s34
    %p48 = scmp.eq.s32.totalorder %s26, 1
    %p49 = por %p47, %p48
    %p51 = scmp.ne.s32.totalorder %s34, %s50
    %p52 = scmp.eq.s32.totalorder %s26, 0
    %p53 = por %p51, %p52
    %s55 = sadd.s32 %s54, 1
    %p58 = scmp.eq.s32.totalorder %s20, 1
    %p59 = scmp.ne.s32.totalorder %s54, %s56
    %p60 = scmp.eq.s32.totalorder %s20, 0
    %p61 = por %p59, %p60
    %p62 = scmp.ne.s32.totalorder %s54, %s56
    %p63 = scmp.eq.s32.totalorder %s25, 1
    %p64 = por %p62, %p63
    %p65 = scmp.ne.s32.totalorder %s56, %s57
    %p66 = scmp.eq.s32.totalorder %s25, 0
    %p67 = por %p65, %p66
    %p68 = scmp.ne.s32.totalorder %s56, %s57
    %p69 = scmp.eq.s32.totalorder %s26, 1
    %p70 = por %p68, %p69
    %p72 = scmp.ne.s32.totalorder %s57, %s71
    %p73 = scmp.eq.s32.totalorder %s26, 0
    %p74 = por %p72, %p73
    %s76 = sadd.s32 %s75, 1
    %p79 = scmp.eq.s32.totalorder %s20, 1
    %p80 = scmp.ne.s32.totalorder %s75, %s77
    %p81 = scmp.eq.s32.totalorder %s20, 0
    %p82 = por %p80, %p81
    %p83 = scmp.ne.s32.totalorder %s75, %s77
    %p84 = scmp.eq.s32.totalorder %s25, 1
    %p85 = por %p83, %p84
    %p86 = scmp.ne.s32.totalorder %s77, %s78
    %p87 = scmp.eq.s32.totalorder %s25, 0
    %p88 = por %p86, %p87
    %p89 = scmp.ne.s32.totalorder %s77, %s78
    %p90 = scmp.eq.s32.totalorder %s26, 1
    %p91 = por %p89, %p90
    %p93 = scmp.ne.s32.totalorder %s78, %s92
    %p94 = scmp.eq.s32.totalorder %s26, 0
    %p95 = por %p93, %p94
    %s97 = sadd.s32 %s96, 1
    %p100 = scmp.eq.s32.totalorder %s20, 1
    %p101 = scmp.ne.s32.totalorder %s96, %s98
    %p102 = scmp.eq.s32.totalorder %s20, 0
    %p103 = por %p101, %p102
    %p104 = scmp.ne.s32.totalorder %s96, %s98
    %p105 = scmp.eq.s32.totalorder %s25, 1
    %p106 = por %p104, %p105
    %p107 = scmp.ne.s32.totalorder %s98, %s99
    %p108 = scmp.eq.s32.totalorder %s25, 0
    %p109 = por %p107, %p108
    %p110 = scmp.ne.s32.totalorder %s98, %s99
    %p111 = scmp.eq.s32.totalorder %s26, 1
    %p112 = por %p110, %p111
    %p114 = scmp.ne.s32.totalorder %s99, %s113
    %p115 = scmp.eq.s32.totalorder %s26, 0
    %p116 = por %p114, %p115
    %s118 = sadd.s32 %s117, 1
    %p121 = scmp.eq.s32.totalorder %s20, 1
    %p122 = scmp.ne.s32.totalorder %s117, %s119
    %p123 = scmp.eq.s32.totalorder %s20, 0
    %p124 = por %p122, %p123
    %p125 = scmp.ne.s32.totalorder %s117, %s119
    %p126 = scmp.eq.s32.totalorder %s25, 1
    %p127 = por %p125, %p126
    %p128 = scmp.ne.s32.totalorder %s119, %s120
    %p129 = scmp.eq.s32.totalorder %s25, 0
    %p130 = por %p128, %p129
    %p131 = scmp.ne.s32.totalorder %s119, %s120
    %p132 = scmp.eq.s32.totalorder %s26, 1
    %p133 = por %p131, %p132
    %p135 = scmp.ne.s32.totalorder %s120, %s134
    %p136 = scmp.eq.s32.totalorder %s26, 0
    %p137 = por %p135, %p136
    %s139 = sadd.s32 %s138, 1
    %p142 = scmp.eq.s32.totalorder %s20, 1
    %p143 = scmp.ne.s32.totalorder %s138, %s140
    %p144 = scmp.eq.s32.totalorder %s20, 0
    %p145 = por %p143, %p144
    %p146 = scmp.ne.s32.totalorder %s138, %s140
    %p147 = scmp.eq.s32.totalorder %s25, 1
    %p148 = por %p146, %p147
    %p149 = scmp.ne.s32.totalorder %s140, %s141
    %p150 = scmp.eq.s32.totalorder %s25, 0
    %p151 = por %p149, %p150
    %p152 = scmp.ne.s32.totalorder %s140, %s141
    %p153 = scmp.eq.s32.totalorder %s26, 1
    %p154 = por %p152, %p153
    %p156 = scmp.ne.s32.totalorder %s141, %s155
    %p157 = scmp.eq.s32.totalorder %s26, 0
    %p158 = por %p156, %p157
    %s160 = sadd.s32 %s159, 1
    %p163 = scmp.eq.s32.totalorder %s20, 1
    %p164 = scmp.ne.s32.totalorder %s159, %s161
    %p165 = scmp.eq.s32.totalorder %s20, 0
    %p166 = por %p164, %p165
    %p167 = scmp.ne.s32.totalorder %s159, %s161
    %p168 = scmp.eq.s32.totalorder %s25, 1
    %p169 = por %p167, %p168
    %p170 = scmp.ne.s32.totalorder %s161, %s162
    %p171 = scmp.eq.s32.totalorder %s25, 0
    %p172 = por %p170, %p171
    %p173 = scmp.ne.s32.totalorder %s161, %s162
    %p174 = scmp.eq.s32.totalorder %s26, 1
    %p175 = por %p173, %p174
    %p177 = scmp.ne.s32.totalorder %s162, %s176
    %p178 = scmp.eq.s32.totalorder %s26, 0
    %p179 = por %p177, %p178
    %s181 = sadd.s32 %s180, 1
    %p184 = scmp.eq.s32.totalorder %s20, 1
    %p185 = scmp.ne.s32.totalorder %s180, %s182
    %p186 = scmp.eq.s32.totalorder %s20, 0
    %p187 = por %p185, %p186
    %p188 = scmp.ne.s32.totalorder %s180, %s182
    %p189 = scmp.eq.s32.totalorder %s25, 1
    %p190 = por %p188, %p189
    %p191 = scmp.ne.s32.totalorder %s182, %s183
    %p192 = scmp.eq.s32.totalorder %s25, 0
    %p193 = por %p191, %p192
    %p194 = scmp.ne.s32.totalorder %s182, %s183
    %p195 = scmp.eq.s32.totalorder %s26, 1
    %p196 = por %p194, %p195
    %p198 = scmp.ne.s32.totalorder %s183, %s197
    %p199 = scmp.eq.s32.totalorder %s26, 0
    %p200 = por %p198, %p199
    %s202 = sadd.s32 %s201, 1
    %p205 = scmp.eq.s32.totalorder %s20, 1
    %p206 = scmp.ne.s32.totalorder %s201, %s203
    %p207 = scmp.eq.s32.totalorder %s20, 0
    %p208 = por %p206, %p207
    %p209 = scmp.ne.s32.totalorder %s201, %s203
    %p210 = scmp.eq.s32.totalorder %s25, 1
    %p211 = por %p209, %p210
    %p212 = scmp.ne.s32.totalorder %s203, %s204
    %p213 = scmp.eq.s32.totalorder %s25, 0
    %p214 = por %p212, %p213
    %p215 = scmp.ne.s32.totalorder %s203, %s204
    %p216 = scmp.eq.s32.totalorder %s26, 1
    %p217 = por %p215, %p216
    %p219 = scmp.ne.s32.totalorder %s204, %s218
    %p220 = scmp.eq.s32.totalorder %s26, 0
    %p221 = por %p219, %p220
    %s223 = sadd.s32 %s222, 1
    %p226 = scmp.eq.s32.totalorder %s20, 1
    %p227 = scmp.ne.s32.totalorder %s222, %s224
    %p228 = scmp.eq.s32.totalorder %s20, 0
    %p229 = por %p227, %p228
    %p230 = scmp.ne.s32.totalorder %s222, %s224
    %p231 = scmp.eq.s32.totalorder %s25, 1
    %p232 = por %p230, %p231
    %p233 = scmp.ne.s32.totalorder %s224, %s225
    %p234 = scmp.eq.s32.totalorder %s25, 0
    %p235 = por %p233, %p234
    %p236 = scmp.ne.s32.totalorder %s224, %s225
    %p237 = scmp.eq.s32.totalorder %s26, 1
    %p238 = por %p236, %p237
    %p240 = scmp.ne.s32.totalorder %s225, %s239
    %p241 = scmp.eq.s32.totalorder %s26, 0
    %p242 = por %p240, %p241
    %s244 = sadd.s32 %s243, 1
    %p247 = scmp.eq.s32.totalorder %s20, 1
    %p248 = scmp.ne.s32.totalorder %s243, %s245
    %p249 = scmp.eq.s32.totalorder %s20, 0
    %p250 = por %p248, %p249
    %p251 = scmp.ne.s32.totalorder %s243, %s245
    %p252 = scmp.eq.s32.totalorder %s25, 1
    %p253 = por %p251, %p252
    %p254 = scmp.ne.s32.totalorder %s245, %s246
    %p255 = scmp.eq.s32.totalorder %s25, 0
    %p256 = por %p254, %p255
    %p257 = scmp.ne.s32.totalorder %s245, %s246
    %p258 = scmp.eq.s32.totalorder %s26, 1
    %p259 = por %p257, %p258
    %p261 = scmp.ne.s32.totalorder %s246, %s260
    %p262 = scmp.eq.s32.totalorder %s26, 0
    %p263 = por %p261, %p262
    %s265 = sadd.s32 %s264, 1
    %p268 = scmp.eq.s32.totalorder %s20, 1
    %p269 = scmp.ne.s32.totalorder %s264, %s266
    %p270 = scmp.eq.s32.totalorder %s20, 0
    %p271 = por %p269, %p270
    %p272 = scmp.ne.s32.totalorder %s264, %s266
    %p273 = scmp.eq.s32.totalorder %s25, 1
    %p274 = por %p272, %p273
    %p275 = scmp.ne.s32.totalorder %s266, %s267
    %p276 = scmp.eq.s32.totalorder %s25, 0
    %p277 = por %p275, %p276
    %p278 = scmp.ne.s32.totalorder %s266, %s267
    %p279 = scmp.eq.s32.totalorder %s26, 1
    %p280 = por %p278, %p279
    %p282 = scmp.ne.s32.totalorder %s267, %s281
    %p283 = scmp.eq.s32.totalorder %s26, 0
    %p284 = por %p282, %p283
    %s286 = sadd.s32 %s285, 1
    %p289 = scmp.eq.s32.totalorder %s20, 1
    %p290 = scmp.ne.s32.totalorder %s285, %s287
    %p291 = scmp.eq.s32.totalorder %s20, 0
    %p292 = por %p290, %p291
    %p293 = scmp.ne.s32.totalorder %s285, %s287
    %p294 = scmp.eq.s32.totalorder %s25, 1
    %p295 = por %p293, %p294
    %p296 = scmp.ne.s32.totalorder %s287, %s288
    %p297 = scmp.eq.s32.totalorder %s25, 0
    %p298 = por %p296, %p297
    %p299 = scmp.ne.s32.totalorder %s287, %s288
    %p300 = scmp.eq.s32.totalorder %s26, 1
    %p301 = por %p299, %p300
    %p303 = scmp.ne.s32.totalorder %s288, %s302
    %p304 = scmp.eq.s32.totalorder %s26, 0
    %p305 = por %p303, %p304
    %s307 = sadd.s32 %s306, 1
    %p310 = scmp.eq.s32.totalorder %s20, 1
    %p311 = scmp.ne.s32.totalorder %s306, %s308
    %p312 = scmp.eq.s32.totalorder %s20, 0
    %p313 = por %p311, %p312
    %p314 = scmp.ne.s32.totalorder %s306, %s308
    %p315 = scmp.eq.s32.totalorder %s25, 1
    %p316 = por %p314, %p315
    %p317 = scmp.ne.s32.totalorder %s308, %s309
    %p318 = scmp.eq.s32.totalorder %s25, 0
    %p319 = por %p317, %p318
    %p320 = scmp.ne.s32.totalorder %s308, %s309
    %p321 = scmp.eq.s32.totalorder %s26, 1
    %p322 = por %p320, %p321
    %p324 = scmp.ne.s32.totalorder %s309, %s323
    %p325 = scmp.eq.s32.totalorder %s26, 0
    %p326 = por %p324, %p325
    %s327 = ssub.s32 %s20, %s27
    %p328 = scmp.eq.s32.totalorder %s327, 0
    %s330 = sadd.s32 %s329, 1
    %s331 = scalar_select %p328, %s329, %s330
    %p334 = pneg %p328
    %p335 = scmp.eq.s32.totalorder %s20, 1
    %p336 = por %p334, %p335
    %p337 = scmp.ne.s32.totalorder %s329, %s332
    %p338 = scmp.eq.s32.totalorder %s20, 0
    %p339 = por %p337, %p338
    %p340 = scmp.ne.s32.totalorder %s329, %s332
    %p341 = scmp.eq.s32.totalorder %s25, 1
    %p342 = por %p340, %p341
    %p343 = scmp.ne.s32.totalorder %s332, %s333
    %p344 = scmp.eq.s32.totalorder %s25, 0
    %p345 = por %p343, %p344
    %p346 = scmp.ne.s32.totalorder %s332, %s333
    %p347 = scmp.eq.s32.totalorder %s26, 1
    %p348 = por %p346, %p347
    %p350 = scmp.ne.s32.totalorder %s333, %s349
    %p351 = scmp.eq.s32.totalorder %s26, 0
    %p352 = por %p350, %p351
    %p353 = scmp.le.s32.totalorder 1, %s20
    %p354 = scmp.lt.s32.totalorder %s20, 3
    %p355 = pnand %p353, %p354
    %p356 = pneg %p355
    // Predicated region
    $region9: #{a_call__.1} parent=5 // pred_check
      _
    $region10: #{a_call__.1} parent=5 // pred_check_branch
      %358 = sbr.rel (%p355) target = $region12
    $region11: #{a_call__.1} parent=5 // pred_region
      %s359 = ssub.s32 %s20, 1
      // Predicated region
      $region13: #{a_call__.1} parent=11 // pred_check
        %p360 = pneg %p67
      $region14: #{a_call__.1} parent=11 // pred_check_branch
        %362 = sbr.rel (%p360) target = $region16
      $region15: #{a_call__.1} parent=11 // pred_region
        _
      $region16: #{a_call__.1} parent=11 // pred_fallthru
        _
      // Predicated region
      $region17: #{a_call__.1} parent=11 // pred_check
        %p363 = pneg %p88
      $region18: #{a_call__.1} parent=11 // pred_check_branch
        %365 = sbr.rel (%p363) target = $region20
      $region19: #{a_call__.1} parent=11 // pred_region
        _
      $region20: #{a_call__.1} parent=11 // pred_fallthru
        _
      // Predicated region
      $region21: #{a_call__.1} parent=11 // pred_check
        %p366 = pneg %p109
      $region22: #{a_call__.1} parent=11 // pred_check_branch
        %368 = sbr.rel (%p366) target = $region24
      $region23: #{a_call__.1} parent=11 // pred_region
        _
      $region24: #{a_call__.1} parent=11 // pred_fallthru
        _
      // Predicated region
      $region25: #{a_call__.1} parent=11 // pred_check
        %p369 = pneg %p130
      $region26: #{a_call__.1} parent=11 // pred_check_branch
        %371 = sbr.rel (%p369) target = $region28
      $region27: #{a_call__.1} parent=11 // pred_region
        _
      $region28: #{a_call__.1} parent=11 // pred_fallthru
        _
      // Predicated region
      $region29: #{a_call__.1} parent=11 // pred_check
        %p372 = pneg %p151
      $region30: #{a_call__.1} parent=11 // pred_check_branch
        %374 = sbr.rel (%p372) target = $region32
      $region31: #{a_call__.1} parent=11 // pred_region
        _
      $region32: #{a_call__.1} parent=11 // pred_fallthru
        _
      // Predicated region
      $region33: #{a_call__.1} parent=11 // pred_check
        %p375 = pneg %p172
      $region34: #{a_call__.1} parent=11 // pred_check_branch
        %377 = sbr.rel (%p375) target = $region36
      $region35: #{a_call__.1} parent=11 // pred_region
        _
      $region36: #{a_call__.1} parent=11 // pred_fallthru
        _
      // Predicated region
      $region37: #{a_call__.1} parent=11 // pred_check
        %p378 = pneg %p193
      $region38: #{a_call__.1} parent=11 // pred_check_branch
        %380 = sbr.rel (%p378) target = $region40
      $region39: #{a_call__.1} parent=11 // pred_region
        _
      $region40: #{a_call__.1} parent=11 // pred_fallthru
        _
      // Predicated region
      $region41: #{a_call__.1} parent=11 // pred_check
        %p381 = pneg %p214
      $region42: #{a_call__.1} parent=11 // pred_check_branch
        %383 = sbr.rel (%p381) target = $region44
      $region43: #{a_call__.1} parent=11 // pred_region
        _
      $region44: #{a_call__.1} parent=11 // pred_fallthru
        _
      // Predicated region
      $region45: #{a_call__.1} parent=11 // pred_check
        %p384 = pneg %p235
      $region46: #{a_call__.1} parent=11 // pred_check_branch
        %386 = sbr.rel (%p384) target = $region48
      $region47: #{a_call__.1} parent=11 // pred_region
        _
      $region48: #{a_call__.1} parent=11 // pred_fallthru
        _
      // Predicated region
      $region49: #{a_call__.1} parent=11 // pred_check
        %p387 = pneg %p256
      $region50: #{a_call__.1} parent=11 // pred_check_branch
        %389 = sbr.rel (%p387) target = $region52
      $region51: #{a_call__.1} parent=11 // pred_region
        _
      $region52: #{a_call__.1} parent=11 // pred_fallthru
        _
      // Predicated region
      $region53: #{a_call__.1} parent=11 // pred_check
        %p390 = pneg %p277
      $region54: #{a_call__.1} parent=11 // pred_check_branch
        %392 = sbr.rel (%p390) target = $region56
      $region55: #{a_call__.1} parent=11 // pred_region
        _
      $region56: #{a_call__.1} parent=11 // pred_fallthru
        _
      // Predicated region
      $region57: #{a_call__.1} parent=11 // pred_check
        %p393 = pneg %p298
      $region58: #{a_call__.1} parent=11 // pred_check_branch
        %395 = sbr.rel (%p393) target = $region60
      $region59: #{a_call__.1} parent=11 // pred_region
        _
      $region60: #{a_call__.1} parent=11 // pred_fallthru
        _
      // Predicated region
      $region61: #{a_call__.1} parent=11 // pred_check
        %p396 = pneg %p319
      $region62: #{a_call__.1} parent=11 // pred_check_branch
        %398 = sbr.rel (%p396) target = $region64
      $region63: #{a_call__.1} parent=11 // pred_region
        _
      $region64: #{a_call__.1} parent=11 // pred_fallthru
        _
    $region12: #{a_call__.1} parent=5 // pred_fallthru
      _
    %p399 = scmp.lt.s32.totalorder %s20, 2
    // Predicated region
    $region65: #{a_call__.1} parent=5 // pred_check
      %p400 = pneg %p399
    $region66: #{a_call__.1} parent=5 // pred_check_branch
      %402 = sbr.rel (%p400) target = $region68
    $region67: #{a_call__.1} parent=5 // pred_region
      // Predicated region
      $region69: #{a_call__.1} parent=67 // pred_check
        %p403 = pneg %p40
      $region70: #{a_call__.1} parent=67 // pred_check_branch
        %405 = sbr.rel (%p403) target = $region72
      $region71: #{a_call__.1} parent=67 // pred_region
        %p406 = scmp.lt.s32.totalorder %s20, 1
        %s407 = scalar_select %p406, %s20, 1
        %s408 = smul.addr %s407, 6
        %s409 = smul.addr %s408, 8
        %s410 = scalar_lea.vmem %s0, %s409
      $region72: #{a_call__.1} parent=67 // pred_fallthru
        _
    $region68: #{a_call__.1} parent=5 // pred_fallthru
      _
    %p411 = scmp.le.s32.totalorder 1, %s20
    %p412 = scmp.lt.s32.totalorder %s20, 3
    %p413 = pnand %p411, %p412
    %p414 = pneg %p413
    // Predicated region
    $region73: #{a_call__.1} parent=5 // pred_check
      _
    $region74: #{a_call__.1} parent=5 // pred_check_branch
      %416 = sbr.rel (%p413) target = $region76
    $region75: #{a_call__.1} parent=5 // pred_region
      %s417 = ssub.s32 %s20, 1
      %p418 = scmp.lt.s32.totalorder %s25, 1
      %s419 = scalar_select %p418, %s25, 1
      %s420 = smul.addr %s419, 6
      %s421 = smul.addr %s420, 8
      %s422 = scalar_lea.vmem %s0, %s421
      %p423 = pneg %p46
      %p424 = pneg %p43
      %p425 = pneg %p67
      %p426 = pneg %p64
      %p427 = pneg %p88
      %p428 = pneg %p85
      %p429 = pneg %p109
      %p430 = pneg %p106
      %p431 = pneg %p130
      %p432 = pneg %p127
      %p433 = pneg %p151
      %p434 = pneg %p148
      %p435 = pneg %p172
      %p436 = pneg %p169
      %p437 = pneg %p193
      %p438 = pneg %p190
      %p439 = pneg %p214
      %p440 = pneg %p211
      %p441 = pneg %p235
      %p442 = pneg %p232
      %p443 = pneg %p256
      %p444 = pneg %p253
      %p445 = pneg %p277
      %p446 = pneg %p274
      %p447 = pneg %p298
      %p448 = pneg %p295
      %p449 = pneg %p319
      %p450 = pneg %p316
      %p451 = pneg %p345
      %p452 = pneg %p342
      %p453 = scmp.lt.s32.totalorder %s25, 1
      %s454 = scalar_select %p453, %s25, 1
      %s455 = smul.addr %s454, 2
      %s456 = smul.addr %s455, 8
      %s457 = scalar_lea.vmem %s14, %s456
      %p458 = scmp.lt.s32.totalorder %s25, 1
      %s459 = scalar_select %p458, %s25, 1
      %s460 = smul.addr %s459, 6
      %s461 = smul.addr %s460, 8
      %s462 = scalar_lea.vmem %s0, %s461
      %p463 = scmp.lt.s32.totalorder %s25, 1
      %s464 = scalar_select %p463, %s25, 1
      %s465 = smul.addr %s464, 2
      %s466 = smul.addr %s465, 8
      %s467 = scalar_lea.vmem %s14, %s466
      %v469 = vld [vmem:[%s462] sm:$0xff]
      %v470 = vld [vmem:[%s462 + $0x8] sm:$0xff]
      %v471 = vld [vmem:[%s462 + $0x10] sm:$0xff]
      %v472 = vld [vmem:[%s462 + $0x18] sm:$0xff]
      %v473 = vld [vmem:[%s462 + $0x20] sm:$0xff]
      %v474 = vld [vmem:[%s462 + $0x28] sm:$0xff]
      %v475 = vld [vmem:[%s1] sm:$0xff]
      %v476 = vld [vmem:[%s2] sm:$0xf]
      %v477 = vld [vmem:[%s2 + $0x4] sm:$0xf]
      %v478 = vld [vmem:[%s2 + $0x8] sm:$0xf]
      %v479 = vld [vmem:[%s2 + $0xc] sm:$0xf]
      %v480 = vld [vmem:[%s3] sm:$0xf]
      %v481 = vld [vmem:[%s3 + $0x4] sm:$0xf]
      %v482 = vld [vmem:[%s3 + $0x8] sm:$0xf]
      %v483 = vld [vmem:[%s3 + $0xc] sm:$0xf]
      %v484 = vld [vmem:[%s4] sm:$0xf]
      %v485 = vld [vmem:[%s4 + $0x4] sm:$0xf]
      %v486 = vld [vmem:[%s4 + $0x8] sm:$0xf]
      %v487 = vld [vmem:[%s4 + $0xc] sm:$0xf]
      %v488 = vld [vmem:[%s5] sm:$0xf]
      %v489 = vld [vmem:[%s5 + $0x4] sm:$0xf]
      %v490 = vld [vmem:[%s5 + $0x8] sm:$0xf]
      %v491 = vld [vmem:[%s5 + $0xc] sm:$0xf]
      %v492 = vld [vmem:[%s5 + $0x10] sm:$0xf]
      %v493 = vld [vmem:[%s5 + $0x14] sm:$0xf]
      %v494 = vld [vmem:[%s5 + $0x18] sm:$0xf]
      %v495 = vld [vmem:[%s5 + $0x1c] sm:$0xf]
      %v496 = vld [vmem:[%s5 + $0x20] sm:$0xf]
      %v497 = vld [vmem:[%s5 + $0x24] sm:$0xf]
      %v498 = vld [vmem:[%s5 + $0x28] sm:$0xf]
      %v499 = vld [vmem:[%s5 + $0x2c] sm:$0xf]
      %v500 = vld [vmem:[%s5 + $0x30] sm:$0xf]
      %v501 = vld [vmem:[%s5 + $0x34] sm:$0xf]
      %v502 = vld [vmem:[%s5 + $0x38] sm:$0xf]
      %v503 = vld [vmem:[%s5 + $0x3c] sm:$0xf]
      %vm504 = vcmask 261120
      %v505 = vsel %vm504, %v469, 0.0
      %506 = vadd.xlane.f32.xlu0 %v505
      %v507 = vpop.xlane.xlu0 %506
      %v508 = vsel %vm504, %v470, 0.0
      %509 = vadd.xlane.f32.xlu0 %v508
      %v510 = vpop.xlane.xlu0 %509
      %v511 = vsel %vm504, %v471, 0.0
      %512 = vadd.xlane.f32.xlu0 %v511
      %v513 = vpop.xlane.xlu0 %512
      %v514 = vsel %vm504, %v472, 0.0
      %515 = vadd.xlane.f32.xlu0 %v514
      %v516 = vpop.xlane.xlu0 %515
      %v517 = vsel %vm504, %v473, 0.0
      %518 = vadd.xlane.f32.xlu0 %v517
      %v519 = vpop.xlane.xlu0 %518
      %v520 = vsel %vm504, %v474, 0.0
      %521 = vadd.xlane.f32.xlu0 %v520
      %v522 = vpop.xlane.xlu0 %521
      %v523 = vrcp.pop 32.0
      %v524 = vmul.f32 %v507, %v523
      %v525 = vmul.f32 %v510, %v523
      %v526 = vmul.f32 %v513, %v523
      %v527 = vmul.f32 %v516, %v523
      %v528 = vmul.f32 %v519, %v523
      %v529 = vmul.f32 %v522, %v523
      %v530 = vsub.f32 %v469, %v524
      %v531 = vsub.f32 %v470, %v525
      %v532 = vsub.f32 %v471, %v526
      %v533 = vsub.f32 %v472, %v527
      %v534 = vsub.f32 %v473, %v528
      %v535 = vsub.f32 %v474, %v529
      %v536 = vmul.f32 %v530, %v530
      %v537 = vmul.f32 %v531, %v531
      %v538 = vmul.f32 %v532, %v532
      %v539 = vmul.f32 %v533, %v533
      %v540 = vmul.f32 %v534, %v534
      %v541 = vmul.f32 %v535, %v535
      %v542 = vsel %vm504, %v536, 0.0
      %543 = vadd.xlane.f32.xlu0 %v542
      %v544 = vpop.xlane.xlu0 %543
      %v545 = vsel %vm504, %v537, 0.0
      %546 = vadd.xlane.f32.xlu0 %v545
      %v547 = vpop.xlane.xlu0 %546
      %v548 = vsel %vm504, %v538, 0.0
      %549 = vadd.xlane.f32.xlu0 %v548
      %v550 = vpop.xlane.xlu0 %549
      %v551 = vsel %vm504, %v539, 0.0
      %552 = vadd.xlane.f32.xlu0 %v551
      %v553 = vpop.xlane.xlu0 %552
      %v554 = vsel %vm504, %v540, 0.0
      %555 = vadd.xlane.f32.xlu0 %v554
      %v556 = vpop.xlane.xlu0 %555
      %v557 = vsel %vm504, %v541, 0.0
      %558 = vadd.xlane.f32.xlu0 %v557
      %v559 = vpop.xlane.xlu0 %558
      %v560 = vmul.f32 %v544, %v523
      %v561 = vmul.f32 %v547, %v523
      %v562 = vmul.f32 %v550, %v523
      %v563 = vmul.f32 %v553, %v523
      %v564 = vmul.f32 %v556, %v523
      %v565 = vmul.f32 %v559, %v523
      %v566 = vadd.f32 %v560, 1e-05
      %v567 = vadd.f32 %v561, 1e-05
      %v568 = vadd.f32 %v562, 1e-05
      %v569 = vadd.f32 %v563, 1e-05
      %v570 = vadd.f32 %v564, 1e-05
      %v571 = vadd.f32 %v565, 1e-05
      %v572 = vrsqrt.pop %v566
      %v573 = vrsqrt.pop %v567
      %v574 = vrsqrt.pop %v568
      %v575 = vrsqrt.pop %v569
      %v576 = vrsqrt.pop %v570
      %v577 = vrsqrt.pop %v571
      %v578 = vmul.f32 %v530, %v572
      %v579 = vmul.f32 %v531, %v573
      %v580 = vmul.f32 %v532, %v574
      %v581 = vmul.f32 %v533, %v575
      %v582 = vmul.f32 %v534, %v576
      %v583 = vmul.f32 %v535, %v577
      %v584 = vlaneseq
      %v585 = vshrl.u32 %v584, 7
      %v586 = vsub.s32 0, %v585
      %v587 = vrot.slane %v475, %v586
      %v588 = vmul.f32 %v578, %v587
      %v589 = vmul.f32 %v579, %v587
      %v590 = vmul.f32 %v580, %v587
      %v591 = vmul.f32 %v581, %v587
      %v592 = vmul.f32 %v582, %v587
      %v593 = vmul.f32 %v583, %v587
      %v594 = vlaneseq
      %v595 = vshrl.u32 %v594, 7
      %v596 = vsub.s32 1, %v595
      %v597 = vrot.slane %v475, %v596
      %v598 = vadd.f32 %v588, %v597
      %v599 = vadd.f32 %v589, %v597
      %v600 = vadd.f32 %v590, %v597
      %v601 = vadd.f32 %v591, %v597
      %v602 = vadd.f32 %v592, %v597
      %v603 = vadd.f32 %v593, %v597
      %v604 = vpack.c.bf16 %v599, %v598
      %v605 = vpack.c.bf16 %v601, %v600
      %v606 = vpack.c.bf16 %v603, %v602
      %v607 = vlaneseq
      %v608 = vshrl.u32 %v607, 7
      %v609 = vsub.s32 6, %v608
      %v610 = vrot.slane %v475, %v609
      %v615 = vunpack.c.l.b16 %v476
      %v616 = vunpack.c.l.b16 %v477
      %v617 = vunpack.c.l.b16 %v478
      %v618 = vunpack.c.l.b16 %v479
      %v619 = vpack.c.b16 %v616, %v615
      %v620 = vpack.c.b16 %v618, %v617
      %v624 = vsel %vm504, %v604, 0
      %v627 = vsel %vm504, %v605, 0
      %v630 = vsel %vm504, %v606, 0
      %632 = vmatprep.subr.bf16.mxu0 0
      %633 = vmatpush1.bf16.msra.mxu0 %v619
      %634 = vmatprep.subr.bf16.mxu0 0
      %635 = vmatpush1.bf16.msra.mxu0 %v620
      %636 = vmatprep.subr.bf16.mxu0 0
      %637 = vmatpush1.bf16.msra.mxu0 0
      %638 = vmatprep.subr.bf16.mxu0 0
      %639 = vmatpush1.bf16.msra.mxu0 0
      %640 = vmatprep.subr.bf16.mxu0 0
      %641 = vmatpush1.bf16.msra.mxu0 0
      %642 = vmatprep.subr.bf16.mxu0 0
      %643 = vmatpush1.bf16.msra.mxu0 0
      %644 = vmatprep.subr.bf16.mxu0 0
      %645 = vmatpush1.bf16.msra.mxu0 0
      %646 = vmatprep.subr.bf16.mxu0 0
      %647 = vmatpush1.bf16.msra.mxu0 0
      %648 = vmatprep.subr.bf16.mxu0 0
      %649 = vmatpush1.bf16.msra.mxu0 0
      %650 = vmatprep.subr.bf16.mxu0 0
      %651 = vmatpush1.bf16.msra.mxu0 0
      %652 = vmatprep.subr.bf16.mxu0 0
      %653 = vmatpush1.bf16.msra.mxu0 0
      %654 = vmatprep.subr.bf16.mxu0 0
      %655 = vmatpush1.bf16.msra.mxu0 0
      %656 = vmatprep.subr.bf16.mxu0 0
      %657 = vmatpush1.bf16.msra.mxu0 0
      %658 = vmatprep.subr.bf16.mxu0 0
      %659 = vmatpush1.bf16.msra.mxu0 0
      %660 = vmatprep.subr.bf16.mxu0 0
      %661 = vmatpush1.bf16.msra.mxu0 0
      %662 = vmatprep.subr.bf16.mxu0 0
      %663 = vmatpush1.bf16.msra.mxu0 0
      %664 = vmatprep.mubr.bf16.mxu0 0
      %665 = vmatmul.mubr.bf16.gmra.mrb[0].mxu0 %v624
      %v666 = vpop.f32.mrb[0].mxu0
      %v667 = vadd.f32 %v610, %v666
      %v668 = vpop.f32.mrb[0].mxu0
      %v669 = vpop.f32.mrb[0].mxu0
      %v670 = vadd.f32 %v610, %v669
      %v671 = vpop.f32.mrb[0].mxu0
      %672 = vmatprep.mubr.bf16.mxu0 0
      %673 = vmatmul.mubr.bf16.gmra.mrb[0].mxu0 %v627
      %v674 = vpop.f32.mrb[0].mxu0
      %v675 = vadd.f32 %v610, %v674
      %v676 = vpop.f32.mrb[0].mxu0
      %v677 = vpop.f32.mrb[0].mxu0
      %v678 = vadd.f32 %v610, %v677
      %v679 = vpop.f32.mrb[0].mxu0
      %680 = vmatprep.mubr.bf16.mxu0 0
      %681 = vmatmul.mubr.bf16.gmra.mrb[0].mxu0 %v630
      %v682 = vpop.f32.mrb[0].mxu0
      %v683 = vadd.f32 %v610, %v682
      %v684 = vpop.f32.mrb[0].mxu0
      %v685 = vpop.f32.mrb[0].mxu0
      %v686 = vadd.f32 %v610, %v685
      %v687 = vpop.f32.mrb[0].mxu0
      %688 = vdwg.mxu0
      %v689 = vlaneseq
      %v690 = vand.u32 %v689, 127
      %vm691 = vcmp.lt.s32.totalorder %v690, 34
      %v692 = vpack.c.bf16 %v670, %v667
      %v693 = vpack.c.bf16 %v678, %v675
      %v694 = vpack.c.bf16 %v686, %v683
      %698 = vrot.lane.b32.xlu0 %v692, 96
      %v699 = vpop.permute.xlu0 %698
      %700 = vrot.lane.b32.xlu0 %v693, 96
      %v701 = vpop.permute.xlu0 %700
      %702 = vrot.lane.b32.xlu0 %v694, 96
      %v703 = vpop.permute.xlu0 %702
      %vm704 = vcmask 64512
      %v706 = vsel %vm704, %v692, 0
      %v709 = vsel %vm704, %v693, 0
      %v712 = vsel %vm704, %v694, 0
      %v715 = vsel %vm704, %v699, 0
      %v718 = vsel %vm704, %v701, 0
      %v721 = vsel %vm704, %v703, 0
      %723 = vmatprep.subr.bf16.mxu0 0
      %724 = vmatpush1.bf16.xpose.msra.mxu0 %v715
      %725 = vmatprep.subr.bf16.mxu0 0
      %726 = vmatpush1.bf16.xpose.msra.mxu0 %v718
      %727 = vmatprep.subr.bf16.mxu0 0
      %728 = vmatpush1.bf16.xpose.msra.mxu0 %v721
      %729 = vmatprep.subr.bf16.mxu0 0
      %730 = vmatpush1.bf16.xpose.msra.mxu0 0
      %731 = vmatprep.subr.bf16.mxu0 0
      %732 = vmatpush1.bf16.xpose.msra.mxu0 0
      %733 = vmatprep.subr.bf16.mxu0 0
      %734 = vmatpush1.bf16.xpose.msra.mxu0 0
      %735 = vmatprep.subr.bf16.mxu0 0
      %736 = vmatpush1.bf16.xpose.msra.mxu0 0
      %737 = vmatprep.subr.bf16.mxu0 0
      %738 = vmatpush1.bf16.xpose.msra.mxu0 0
      %739 = vmatprep.subr.bf16.mxu0 0
      %740 = vmatpush1.bf16.xpose.msra.mxu0 0
      %741 = vmatprep.subr.bf16.mxu0 0
      %742 = vmatpush1.bf16.xpose.msra.mxu0 0
      %743 = vmatprep.subr.bf16.mxu0 0
      %744 = vmatpush1.bf16.xpose.msra.mxu0 0
      %745 = vmatprep.subr.bf16.mxu0 0
      %746 = vmatpush1.bf16.xpose.msra.mxu0 0
      %747 = vmatprep.subr.bf16.mxu0 0
      %748 = vmatpush1.bf16.xpose.msra.mxu0 0
      %749 = vmatprep.subr.bf16.mxu0 0
      %750 = vmatpush1.bf16.xpose.msra.mxu0 0
      %751 = vmatprep.subr.bf16.mxu0 0
      %752 = vmatpush1.bf16.xpose.msra.mxu0 0
      %753 = vmatprep.subr.bf16.mxu0 0
      %754 = vmatpush1.bf16.xpose.msra.mxu0 0
      %755 = vmatprep.mubr.bf16.mxu0 0
      %756 = vmatmul.mubr.bf16.gmra.mrb[0].mxu0 %v706
      %v757 = vpop.f32.mrb[0].mxu0
      %v758 = vadd.f32 0.0, %v757
      %v759 = vpop.f32.mrb[0].mxu0
      %v760 = vpop.f32.mrb[0].mxu0
      %v761 = vadd.f32 0.0, %v760
      %v762 = vpop.f32.mrb[0].mxu0
      %763 = vmatprep.mubr.bf16.mxu0 0
      %764 = vmatmul.mubr.bf16.gmra.mrb[0].mxu0 %v709
      %v765 = vpop.f32.mrb[0].mxu0
      %v766 = vadd.f32 0.0, %v765
      %v767 = vpop.f32.mrb[0].mxu0
      %v768 = vpop.f32.mrb[0].mxu0
      %v769 = vadd.f32 0.0, %v768
      %v770 = vpop.f32.mrb[0].mxu0
      %771 = vmatprep.mubr.bf16.mxu0 0
      %772 = vmatmul.mubr.bf16.gmra.mrb[0].mxu0 %v712
      %v773 = vpop.f32.mrb[0].mxu0
      %v774 = vadd.f32 0.0, %v773
      %v775 = vpop.f32.mrb[0].mxu0
      %v776 = vpop.f32.mrb[0].mxu0
      %v777 = vadd.f32 0.0, %v776
      %v778 = vpop.f32.mrb[0].mxu0
      %779 = vdwg.mxu0
      %v780 = vsel %vm691, 1, 0
      %vm781 = vcmp.eq.s32.totalorder %v780, 1
      %v782 = vsel %vm781, %v758, -1e+30
      %v783 = vsel %vm781, %v761, -1e+30
      %v784 = vsel %vm781, %v766, -1e+30
      %v785 = vsel %vm781, %v769, -1e+30
      %v786 = vsel %vm781, %v774, -1e+30
      %v787 = vsel %vm781, %v777, -1e+30
      %vm788 = vcmask 392192
      %v789 = vsel %vm788, %v782, -inf
      %790 = vmax.xlane.f32.xlu0 %v789
      %v791 = vpop.xlane.xlu0 %790
      %v792 = vsel %vm788, %v783, -inf
      %793 = vmax.xlane.f32.xlu0 %v792
      %v794 = vpop.xlane.xlu0 %793
      %v795 = vsel %vm788, %v784, -inf
      %796 = vmax.xlane.f32.xlu0 %v795
      %v797 = vpop.xlane.xlu0 %796
      %v798 = vsel %vm788, %v785, -inf
      %799 = vmax.xlane.f32.xlu0 %v798
      %v800 = vpop.xlane.xlu0 %799
      %v801 = vsel %vm788, %v786, -inf
      %802 = vmax.xlane.f32.xlu0 %v801
      %v803 = vpop.xlane.xlu0 %802
      %v804 = vsel %vm788, %v787, -inf
      %805 = vmax.xlane.f32.xlu0 %v804
      %v806 = vpop.xlane.xlu0 %805
      %v807 = vsub.f32 %v782, %v791
      %v808 = vsub.f32 %v783, %v794
      %v809 = vsub.f32 %v784, %v797
      %v810 = vsub.f32 %v785, %v800
      %v811 = vsub.f32 %v786, %v803
      %v812 = vsub.f32 %v787, %v806
      %v813 = vmul.f32 %v807, 1.442695
      %v814 = vpow.pop %v813
      %v815 = vmul.f32 %v808, 1.442695
      %v816 = vpow.pop %v815
      %v817 = vmul.f32 %v809, 1.442695
      %v818 = vpow.pop %v817
      %v819 = vmul.f32 %v810, 1.442695
      %v820 = vpow.pop %v819
      %v821 = vmul.f32 %v811, 1.442695
      %v822 = vpow.pop %v821
      %v823 = vmul.f32 %v812, 1.442695
      %v824 = vpow.pop %v823
      %v825 = vsel %vm788, %v814, 0.0
      %826 = vadd.xlane.f32.xlu0 %v825
      %v827 = vpop.xlane.xlu0 %826
      %v828 = vsel %vm788, %v816, 0.0
      %829 = vadd.xlane.f32.xlu0 %v828
      %v830 = vpop.xlane.xlu0 %829
      %v831 = vsel %vm788, %v818, 0.0
      %832 = vadd.xlane.f32.xlu0 %v831
      %v833 = vpop.xlane.xlu0 %832
      %v834 = vsel %vm788, %v820, 0.0
      %835 = vadd.xlane.f32.xlu0 %v834
      %v836 = vpop.xlane.xlu0 %835
      %v837 = vsel %vm788, %v822, 0.0
      %838 = vadd.xlane.f32.xlu0 %v837
      %v839 = vpop.xlane.xlu0 %838
      %v840 = vsel %vm788, %v824, 0.0
      %841 = vadd.xlane.f32.xlu0 %v840
      %v842 = vpop.xlane.xlu0 %841
      %v843 = vrcp.pop %v827
      %v844 = vrcp.pop %v830
      %v845 = vrcp.pop %v833
      %v846 = vrcp.pop %v836
      %v847 = vrcp.pop %v839
      %v848 = vrcp.pop %v842
      %v849 = vmul.f32 %v814, %v843
      %v850 = vmul.f32 %v816, %v844
      %v851 = vmul.f32 %v818, %v845
      %v852 = vmul.f32 %v820, %v846
      %v853 = vmul.f32 %v822, %v847
      %v854 = vmul.f32 %v824, %v848
      %v855 = vpack.c.bf16 %v850, %v849
      %v856 = vpack.c.bf16 %v852, %v851
      %v857 = vpack.c.bf16 %v854, %v853
      %858 = vrot.lane.b32.xlu0 %v692, 64
      %v859 = vpop.permute.xlu0 %858
      %860 = vrot.lane.b32.xlu0 %v693, 64
      %v861 = vpop.permute.xlu0 %860
      %862 = vrot.lane.b32.xlu0 %v694, 64
      %v863 = vpop.permute.xlu0 %862
      %v868 = vsel %vm788, %v855, 0
      %v871 = vsel %vm788, %v856, 0
      %v874 = vsel %vm788, %v857, 0
      %876 = vmatprep.subr.bf16.mxu0 0
      %877 = vmatpush1.bf16.msra.mxu0 %v859
      %878 = vmatprep.subr.bf16.mxu0 0
      %879 = vmatpush1.bf16.msra.mxu0 %v861
      %880 = vmatprep.subr.bf16.mxu0 0
      %881 = vmatpush1.bf16.msra.mxu0 %v863
      %882 = vmatprep.subr.bf16.mxu0 0
      %883 = vmatpush1.bf16.msra.mxu0 0
      %884 = vmatprep.subr.bf16.mxu0 0
      %885 = vmatpush1.bf16.msra.mxu0 0
      %886 = vmatprep.subr.bf16.mxu0 0
      %887 = vmatpush1.bf16.msra.mxu0 0
      %888 = vmatprep.subr.bf16.mxu0 0
      %889 = vmatpush1.bf16.msra.mxu0 0
      %890 = vmatprep.subr.bf16.mxu0 0
      %891 = vmatpush1.bf16.msra.mxu0 0
      %892 = vmatprep.subr.bf16.mxu0 0
      %893 = vmatpush1.bf16.msra.mxu0 0
      %894 = vmatprep.subr.bf16.mxu0 0
      %895 = vmatpush1.bf16.msra.mxu0 0
      %896 = vmatprep.subr.bf16.mxu0 0
      %897 = vmatpush1.bf16.msra.mxu0 0
      %898 = vmatprep.subr.bf16.mxu0 0
      %899 = vmatpush1.bf16.msra.mxu0 0
      %900 = vmatprep.subr.bf16.mxu0 0
      %901 = vmatpush1.bf16.msra.mxu0 0
      %902 = vmatprep.subr.bf16.mxu0 0
      %903 = vmatpush1.bf16.msra.mxu0 0
      %904 = vmatprep.subr.bf16.mxu0 0
      %905 = vmatpush1.bf16.msra.mxu0 0
      %906 = vmatprep.subr.bf16.mxu0 0
      %907 = vmatpush1.bf16.msra.mxu0 0
      %908 = vmatprep.mubr.bf16.mxu0 0
      %909 = vmatmul.mubr.bf16.gmra.mrb[0].mxu0 %v868
      %v910 = vpop.f32.mrb[0].mxu0
      %v911 = vadd.f32 0.0, %v910
      %v912 = vpop.f32.mrb[0].mxu0
      %v913 = vpop.f32.mrb[0].mxu0
      %v914 = vadd.f32 0.0, %v913
      %v915 = vpop.f32.mrb[0].mxu0
      %916 = vmatprep.mubr.bf16.mxu0 0
      %917 = vmatmul.mubr.bf16.gmra.mrb[0].mxu0 %v871
      %v918 = vpop.f32.mrb[0].mxu0
      %v919 = vadd.f32 0.0, %v918
      %v920 = vpop.f32.mrb[0].mxu0
      %v921 = vpop.f32.mrb[0].mxu0
      %v922 = vadd.f32 0.0, %v921
      %v923 = vpop.f32.mrb[0].mxu0
      %924 = vmatprep.mubr.bf16.mxu0 0
      %925 = vmatmul.mubr.bf16.gmra.mrb[0].mxu0 %v874
      %v926 = vpop.f32.mrb[0].mxu0
      %v927 = vadd.f32 0.0, %v926
      %v928 = vpop.f32.mrb[0].mxu0
      %v929 = vpop.f32.mrb[0].mxu0
      %v930 = vadd.f32 0.0, %v929
      %v931 = vpop.f32.mrb[0].mxu0
      %932 = vdwg.mxu0
      %933 = vrot.lane.b32.xlu0 %v692, 120
      %v934 = vpop.permute.xlu0 %933
      %935 = vrot.lane.b32.xlu0 %v693, 120
      %v936 = vpop.permute.xlu0 %935
      %937 = vrot.lane.b32.xlu0 %v694, 120
      %v938 = vpop.permute.xlu0 %937
      %939 = vrot.lane.b32.xlu0 %v692, 88
      %v940 = vpop.permute.xlu0 %939
      %941 = vrot.lane.b32.xlu0 %v693, 88
      %v942 = vpop.permute.xlu0 %941
      %943 = vrot.lane.b32.xlu0 %v694, 88
      %v944 = vpop.permute.xlu0 %943
      %v946 = vsel %vm704, %v934, 0
      %v949 = vsel %vm704, %v936, 0
      %v952 = vsel %vm704, %v938, 0
      %v955 = vsel %vm704, %v940, 0
      %v958 = vsel %vm704, %v942, 0
      %v961 = vsel %vm704, %v944, 0
      %963 = vmatprep.subr.bf16.mxu0 0
      %964 = vmatpush1.bf16.xpose.msra.mxu0 %v955
      %965 = vmatprep.subr.bf16.mxu0 0
      %966 = vmatpush1.bf16.xpose.msra.mxu0 %v958
      %967 = vmatprep.subr.bf16.mxu0 0
      %968 = vmatpush1.bf16.xpose.msra.mxu0 %v961
      %969 = vmatprep.subr.bf16.mxu0 0
      %970 = vmatpush1.bf16.xpose.msra.mxu0 0
      %971 = vmatprep.subr.bf16.mxu0 0
      %972 = vmatpush1.bf16.xpose.msra.mxu0 0
      %973 = vmatprep.subr.bf16.mxu0 0
      %974 = vmatpush1.bf16.xpose.msra.mxu0 0
      %975 = vmatprep.subr.bf16.mxu0 0
      %976 = vmatpush1.bf16.xpose.msra.mxu0 0
      %977 = vmatprep.subr.bf16.mxu0 0
      %978 = vmatpush1.bf16.xpose.msra.mxu0 0
      %979 = vmatprep.subr.bf16.mxu0 0
      %980 = vmatpush1.bf16.xpose.msra.mxu0 0
      %981 = vmatprep.subr.bf16.mxu0 0
      %982 = vmatpush1.bf16.xpose.msra.mxu0 0
      %983 = vmatprep.subr.bf16.mxu0 0
      %984 = vmatpush1.bf16.xpose.msra.mxu0 0
      %985 = vmatprep.subr.bf16.mxu0 0
      %986 = vmatpush1.bf16.xpose.msra.mxu0 0
      %987 = vmatprep.subr.bf16.mxu0 0
      %988 = vmatpush1.bf16.xpose.msra.mxu0 0
      %989 = vmatprep.subr.bf16.mxu0 0
      %990 = vmatpush1.bf16.xpose.msra.mxu0 0
      %991 = vmatprep.subr.bf16.mxu0 0
      %992 = vmatpush1.bf16.xpose.msra.mxu0 0
      %993 = vmatprep.subr.bf16.mxu0 0
      %994 = vmatpush1.bf16.xpose.msra.mxu0 0
      %995 = vmatprep.mubr.bf16.mxu0 0
      %996 = vmatmul.mubr.bf16.gmra.mrb[0].mxu0 %v946
      %v997 = vpop.f32.mrb[0].mxu0
      %v998 = vadd.f32 0.0, %v997
      %v999 = vpop.f32.mrb[0].mxu0
      %v1000 = vpop.f32.mrb[0].mxu0
      %v1001 = vadd.f32 0.0, %v1000
      %v1002 = vpop.f32.mrb[0].mxu0
      %1003 = vmatprep.mubr.bf16.mxu0 0
      %1004 = vmatmul.mubr.bf16.gmra.mrb[0].mxu0 %v949
      %v1005 = vpop.f32.mrb[0].mxu0
      %v1006 = vadd.f32 0.0, %v1005
      %v1007 = vpop.f32.mrb[0].mxu0
      %v1008 = vpop.f32.mrb[0].mxu0
      %v1009 = vadd.f32 0.0, %v1008
      %v1010 = vpop.f32.mrb[0].mxu0
      %1011 = vmatprep.mubr.bf16.mxu0 0
      %1012 = vmatmul.mubr.bf16.gmra.mrb[0].mxu0 %v952
      %v1013 = vpop.f32.mrb[0].mxu0
      %v1014 = vadd.f32 0.0, %v1013
      %v1015 = vpop.f32.mrb[0].mxu0
      %v1016 = vpop.f32.mrb[0].mxu0
      %v1017 = vadd.f32 0.0, %v1016
      %v1018 = vpop.f32.mrb[0].mxu0
      %1019 = vdwg.mxu0
      %v1020 = vsel %vm781, %v998, -1e+30
      %v1021 = vsel %vm781, %v1001, -1e+30
      %v1022 = vsel %vm781, %v1006, -1e+30
      %v1023 = vsel %vm781, %v1009, -1e+30
      %v1024 = vsel %vm781, %v1014, -1e+30
      %v1025 = vsel %vm781, %v1017, -1e+30
      %v1026 = vsel %vm788, %v1020, -inf
      %1027 = vmax.xlane.f32.xlu0 %v1026
      %v1028 = vpop.xlane.xlu0 %1027
      %v1029 = vsel %vm788, %v1021, -inf
      %1030 = vmax.xlane.f32.xlu0 %v1029
      %v1031 = vpop.xlane.xlu0 %1030
      %v1032 = vsel %vm788, %v1022, -inf
      %1033 = vmax.xlane.f32.xlu0 %v1032
      %v1034 = vpop.xlane.xlu0 %1033
      %v1035 = vsel %vm788, %v1023, -inf
      %1036 = vmax.xlane.f32.xlu0 %v1035
      %v1037 = vpop.xlane.xlu0 %1036
      %v1038 = vsel %vm788, %v1024, -inf
      %1039 = vmax.xlane.f32.xlu0 %v1038
      %v1040 = vpop.xlane.xlu0 %1039
      %v1041 = vsel %vm788, %v1025, -inf
      %1042 = vmax.xlane.f32.xlu0 %v1041
      %v1043 = vpop.xlane.xlu0 %1042
      %v1044 = vsub.f32 %v1020, %v1028
      %v1045 = vsub.f32 %v1021, %v1031
      %v1046 = vsub.f32 %v1022, %v1034
      %v1047 = vsub.f32 %v1023, %v1037
      %v1048 = vsub.f32 %v1024, %v1040
      %v1049 = vsub.f32 %v1025, %v1043
      %v1050 = vmul.f32 %v1044, 1.442695
      %v1051 = vpow.pop %v1050
      %v1052 = vmul.f32 %v1045, 1.442695
      %v1053 = vpow.pop %v1052
      %v1054 = vmul.f32 %v1046, 1.442695
      %v1055 = vpow.pop %v1054
      %v1056 = vmul.f32 %v1047, 1.442695
      %v1057 = vpow.pop %v1056
      %v1058 = vmul.f32 %v1048, 1.442695
      %v1059 = vpow.pop %v1058
      %v1060 = vmul.f32 %v1049, 1.442695
      %v1061 = vpow.pop %v1060
      %v1062 = vsel %vm788, %v1051, 0.0
      %1063 = vadd.xlane.f32.xlu0 %v1062
      %v1064 = vpop.xlane.xlu0 %1063
      %v1065 = vsel %vm788, %v1053, 0.0
      %1066 = vadd.xlane.f32.xlu0 %v1065
      %v1067 = vpop.xlane.xlu0 %1066
      %v1068 = vsel %vm788, %v1055, 0.0
      %1069 = vadd.xlane.f32.xlu0 %v1068
      %v1070 = vpop.xlane.xlu0 %1069
      %v1071 = vsel %vm788, %v1057, 0.0
      %1072 = vadd.xlane.f32.xlu0 %v1071
      %v1073 = vpop.xlane.xlu0 %1072
      %v1074 = vsel %vm788, %v1059, 0.0
      %1075 = vadd.xlane.f32.xlu0 %v1074
      %v1076 = vpop.xlane.xlu0 %1075
      %v1077 = vsel %vm788, %v1061, 0.0
      %1078 = vadd.xlane.f32.xlu0 %v1077
      %v1079 = vpop.xlane.xlu0 %1078
      %v1080 = vrcp.pop %v1064
      %v1081 = vrcp.pop %v1067
      %v1082 = vrcp.pop %v1070
      %v1083 = vrcp.pop %v1073
      %v1084 = vrcp.pop %v1076
      %v1085 = vrcp.pop %v1079
      %v1086 = vmul.f32 %v1051, %v1080
      %v1087 = vmul.f32 %v1053, %v1081
      %v1088 = vmul.f32 %v1055, %v1082
      %v1089 = vmul.f32 %v1057, %v1083
      %v1090 = vmul.f32 %v1059, %v1084
      %v1091 = vmul.f32 %v1061, %v1085
      %v1092 = vpack.c.bf16 %v1087, %v1086
      %v1093 = vpack.c.bf16 %v1089, %v1088
      %v1094 = vpack.c.bf16 %v1091, %v1090
      %1095 = vrot.lane.b32.xlu0 %v692, 56
      %v1096 = vpop.permute.xlu0 %1095
      %1097 = vrot.lane.b32.xlu0 %v693, 56
      %v1098 = vpop.permute.xlu0 %1097
      %1099 = vrot.lane.b32.xlu0 %v694, 56
      %v1100 = vpop.permute.xlu0 %1099
      %v1105 = vsel %vm788, %v1092, 0
      %v1108 = vsel %vm788, %v1093, 0
      %v1111 = vsel %vm788, %v1094, 0
      %1113 = vmatprep.subr.bf16.mxu0 0
      %1114 = vmatpush1.bf16.msra.mxu0 %v1096
      %1115 = vmatprep.subr.bf16.mxu0 0
      %1116 = vmatpush1.bf16.msra.mxu0 %v1098
      %1117 = vmatprep.subr.bf16.mxu0 0
      %1118 = vmatpush1.bf16.msra.mxu0 %v1100
      %1119 = vmatprep.subr.bf16.mxu0 0
      %1120 = vmatpush1.bf16.msra.mxu0 0
      %1121 = vmatprep.subr.bf16.mxu0 0
      %1122 = vmatpush1.bf16.msra.mxu0 0
      %1123 = vmatprep.subr.bf16.mxu0 0
      %1124 = vmatpush1.bf16.msra.mxu0 0
      %1125 = vmatprep.subr.bf16.mxu0 0
      %1126 = vmatpush1.bf16.msra.mxu0 0
      %1127 = vmatprep.subr.bf16.mxu0 0
      %1128 = vmatpush1.bf16.msra.mxu0 0
      %1129 = vmatprep.subr.bf16.mxu0 0
      %1130 = vmatpush1.bf16.msra.mxu0 0
      %1131 = vmatprep.subr.bf16.mxu0 0
      %1132 = vmatpush1.bf16.msra.mxu0 0
      %1133 = vmatprep.subr.bf16.mxu0 0
      %1134 = vmatpush1.bf16.msra.mxu0 0
      %1135 = vmatprep.subr.bf16.mxu0 0
      %1136 = vmatpush1.bf16.msra.mxu0 0
      %1137 = vmatprep.subr.bf16.mxu0 0
      %1138 = vmatpush1.bf16.msra.mxu0 0
      %1139 = vmatprep.subr.bf16.mxu0 0
      %1140 = vmatpush1.bf16.msra.mxu0 0
      %1141 = vmatprep.subr.bf16.mxu0 0
      %1142 = vmatpush1.bf16.msra.mxu0 0
      %1143 = vmatprep.subr.bf16.mxu0 0
      %1144 = vmatpush1.bf16.msra.mxu0 0
      %1145 = vmatprep.mubr.bf16.mxu0 0
      %1146 = vmatmul.mubr.bf16.gmra.mrb[0].mxu0 %v1105
      %v1147 = vpop.f32.mrb[0].mxu0
      %v1148 = vadd.f32 0.0, %v1147
      %v1149 = vpop.f32.mrb[0].mxu0
      %v1150 = vpop.f32.mrb[0].mxu0
      %v1151 = vadd.f32 0.0, %v1150
      %v1152 = vpop.f32.mrb[0].mxu0
      %1153 = vmatprep.mubr.bf16.mxu0 0
      %1154 = vmatmul.mubr.bf16.gmra.mrb[0].mxu0 %v1108
      %v1155 = vpop.f32.mrb[0].mxu0
      %v1156 = vadd.f32 0.0, %v1155
      %v1157 = vpop.f32.mrb[0].mxu0
      %v1158 = vpop.f32.mrb[0].mxu0
      %v1159 = vadd.f32 0.0, %v1158
      %v1160 = vpop.f32.mrb[0].mxu0
      %1161 = vmatprep.mubr.bf16.mxu0 0
      %1162 = vmatmul.mubr.bf16.gmra.mrb[0].mxu0 %v1111
      %v1163 = vpop.f32.mrb[0].mxu0
      %v1164 = vadd.f32 0.0, %v1163
      %v1165 = vpop.f32.mrb[0].mxu0
      %v1166 = vpop.f32.mrb[0].mxu0
      %v1167 = vadd.f32 0.0, %v1166
      %v1168 = vpop.f32.mrb[0].mxu0
      %1169 = vdwg.mxu0
      %1170 = vrot.lane.b32.xlu0 %v692, 112
      %v1171 = vpop.permute.xlu0 %1170
      %1172 = vrot.lane.b32.xlu0 %v693, 112
      %v1173 = vpop.permute.xlu0 %1172
      %1174 = vrot.lane.b32.xlu0 %v694, 112
      %v1175 = vpop.permute.xlu0 %1174
      %1176 = vrot.lane.b32.xlu0 %v692, 80
      %v1177 = vpop.permute.xlu0 %1176
      %1178 = vrot.lane.b32.xlu0 %v693, 80
      %v1179 = vpop.permute.xlu0 %1178
      %1180 = vrot.lane.b32.xlu0 %v694, 80
      %v1181 = vpop.permute.xlu0 %1180
      %v1183 = vsel %vm704, %v1171, 0
      %v1186 = vsel %vm704, %v1173, 0
      %v1189 = vsel %vm704, %v1175, 0
      %v1192 = vsel %vm704, %v1177, 0
      %v1195 = vsel %vm704, %v1179, 0
      %v1198 = vsel %vm704, %v1181, 0
      %1200 = vmatprep.subr.bf16.mxu0 0
      %1201 = vmatpush1.bf16.xpose.msra.mxu0 %v1192
      %1202 = vmatprep.subr.bf16.mxu0 0
      %1203 = vmatpush1.bf16.xpose.msra.mxu0 %v1195
      %1204 = vmatprep.subr.bf16.mxu0 0
      %1205 = vmatpush1.bf16.xpose.msra.mxu0 %v1198
      %1206 = vmatprep.subr.bf16.mxu0 0
      %1207 = vmatpush1.bf16.xpose.msra.mxu0 0
      %1208 = vmatprep.subr.bf16.mxu0 0
      %1209 = vmatpush1.bf16.xpose.msra.mxu0 0
      %1210 = vmatprep.subr.bf16.mxu0 0
      %1211 = vmatpush1.bf16.xpose.msra.mxu0 0
      %1212 = vmatprep.subr.bf16.mxu0 0
      %1213 = vmatpush1.bf16.xpose.msra.mxu0 0
      %1214 = vmatprep.subr.bf16.mxu0 0
      %1215 = vmatpush1.bf16.xpose.msra.mxu0 0
      %1216 = vmatprep.subr.bf16.mxu0 0
      %1217 = vmatpush1.bf16.xpose.msra.mxu0 0
      %1218 = vmatprep.subr.bf16.mxu0 0
      %1219 = vmatpush1.bf16.xpose.msra.mxu0 0
      %1220 = vmatprep.subr.bf16.mxu0 0
      %1221 = vmatpush1.bf16.xpose.msra.mxu0 0
      %1222 = vmatprep.subr.bf16.mxu0 0
      %1223 = vmatpush1.bf16.xpose.msra.mxu0 0
      %1224 = vmatprep.subr.bf16.mxu0 0
      %1225 = vmatpush1.bf16.xpose.msra.mxu0 0
      %1226 = vmatprep.subr.bf16.mxu0 0
      %1227 = vmatpush1.bf16.xpose.msra.mxu0 0
      %1228 = vmatprep.subr.bf16.mxu0 0
      %1229 = vmatpush1.bf16.xpose.msra.mxu0 0
      %1230 = vmatprep.subr.bf16.mxu0 0
      %1231 = vmatpush1.bf16.xpose.msra.mxu0 0
      %1232 = vmatprep.mubr.bf16.mxu0 0
      %1233 = vmatmul.mubr.bf16.gmra.mrb[0].mxu0 %v1183
      %v1234 = vpop.f32.mrb[0].mxu0
      %v1235 = vadd.f32 0.0, %v1234
      %v1236 = vpop.f32.mrb[0].mxu0
      %v1237 = vpop.f32.mrb[0].mxu0
      %v1238 = vadd.f32 0.0, %v1237
      %v1239 = vpop.f32.mrb[0].mxu0
      %1240 = vmatprep.mubr.bf16.mxu0 0
      %1241 = vmatmul.mubr.bf16.gmra.mrb[0].mxu0 %v1186
      %v1242 = vpop.f32.mrb[0].mxu0
      %v1243 = vadd.f32 0.0, %v1242
      %v1244 = vpop.f32.mrb[0].mxu0
      %v1245 = vpop.f32.mrb[0].mxu0
      %v1246 = vadd.f32 0.0, %v1245
      %v1247 = vpop.f32.mrb[0].mxu0
      %1248 = vmatprep.mubr.bf16.mxu0 0
      %1249 = vmatmul.mubr.bf16.gmra.mrb[0].mxu0 %v1189
      %v1250 = vpop.f32.mrb[0].mxu0
      %v1251 = vadd.f32 0.0, %v1250
      %v1252 = vpop.f32.mrb[0].mxu0
      %v1253 = vpop.f32.mrb[0].mxu0
      %v1254 = vadd.f32 0.0, %v1253
      %v1255 = vpop.f32.mrb[0].mxu0
      %1256 = vdwg.mxu0
      %v1257 = vsel %vm781, %v1235, -1e+30
      %v1258 = vsel %vm781, %v1238, -1e+30
      %v1259 = vsel %vm781, %v1243, -1e+30
      %v1260 = vsel %vm781, %v1246, -1e+30
      %v1261 = vsel %vm781, %v1251, -1e+30
      %v1262 = vsel %vm781, %v1254, -1e+30
      %v1263 = vsel %vm788, %v1257, -inf
      %1264 = vmax.xlane.f32.xlu0 %v1263
      %v1265 = vpop.xlane.xlu0 %1264
      %v1266 = vsel %vm788, %v1258, -inf
      %1267 = vmax.xlane.f32.xlu0 %v1266
      %v1268 = vpop.xlane.xlu0 %1267
      %v1269 = vsel %vm788, %v1259, -inf
      %1270 = vmax.xlane.f32.xlu0 %v1269
      %v1271 = vpop.xlane.xlu0 %1270
      %v1272 = vsel %vm788, %v1260, -inf
      %1273 = vmax.xlane.f32.xlu0 %v1272
      %v1274 = vpop.xlane.xlu0 %1273
      %v1275 = vsel %vm788, %v1261, -inf
      %1276 = vmax.xlane.f32.xlu0 %v1275
      %v1277 = vpop.xlane.xlu0 %1276
      %v1278 = vsel %vm788, %v1262, -inf
      %1279 = vmax.xlane.f32.xlu0 %v1278
      %v1280 = vpop.xlane.xlu0 %1279
      %v1281 = vsub.f32 %v1257, %v1265
      %v1282 = vsub.f32 %v1258, %v1268
      %v1283 = vsub.f32 %v1259, %v1271
      %v1284 = vsub.f32 %v1260, %v1274
      %v1285 = vsub.f32 %v1261, %v1277
      %v1286 = vsub.f32 %v1262, %v1280
      %v1287 = vmul.f32 %v1281, 1.442695
      %v1288 = vpow.pop %v1287
      %v1289 = vmul.f32 %v1282, 1.442695
      %v1290 = vpow.pop %v1289
      %v1291 = vmul.f32 %v1283, 1.442695
      %v1292 = vpow.pop %v1291
      %v1293 = vmul.f32 %v1284, 1.442695
      %v1294 = vpow.pop %v1293
      %v1295 = vmul.f32 %v1285, 1.442695
      %v1296 = vpow.pop %v1295
      %v1297 = vmul.f32 %v1286, 1.442695
      %v1298 = vpow.pop %v1297
      %v1299 = vsel %vm788, %v1288, 0.0
      %1300 = vadd.xlane.f32.xlu0 %v1299
      %v1301 = vpop.xlane.xlu0 %1300
      %v1302 = vsel %vm788, %v1290, 0.0
      %1303 = vadd.xlane.f32.xlu0 %v1302
      %v1304 = vpop.xlane.xlu0 %1303
      %v1305 = vsel %vm788, %v1292, 0.0
      %1306 = vadd.xlane.f32.xlu0 %v1305
      %v1307 = vpop.xlane.xlu0 %1306
      %v1308 = vsel %vm788, %v1294, 0.0
      %1309 = vadd.xlane.f32.xlu0 %v1308
      %v1310 = vpop.xlane.xlu0 %1309
      %v1311 = vsel %vm788, %v1296, 0.0
      %1312 = vadd.xlane.f32.xlu0 %v1311
      %v1313 = vpop.xlane.xlu0 %1312
      %v1314 = vsel %vm788, %v1298, 0.0
      %1315 = vadd.xlane.f32.xlu0 %v1314
      %v1316 = vpop.xlane.xlu0 %1315
      %v1317 = vrcp.pop %v1301
      %v1318 = vrcp.pop %v1304
      %v1319 = vrcp.pop %v1307
      %v1320 = vrcp.pop %v1310
      %v1321 = vrcp.pop %v1313
      %v1322 = vrcp.pop %v1316
      %v1323 = vmul.f32 %v1288, %v1317
      %v1324 = vmul.f32 %v1290, %v1318
      %v1325 = vmul.f32 %v1292, %v1319
      %v1326 = vmul.f32 %v1294, %v1320
      %v1327 = vmul.f32 %v1296, %v1321
      %v1328 = vmul.f32 %v1298, %v1322
      %v1329 = vpack.c.bf16 %v1324, %v1323
      %v1330 = vpack.c.bf16 %v1326, %v1325
      %v1331 = vpack.c.bf16 %v1328, %v1327
      %1332 = vrot.lane.b32.xlu0 %v692, 48
      %v1333 = vpop.permute.xlu0 %1332
      %1334 = vrot.lane.b32.xlu0 %v693, 48
      %v1335 = vpop.permute.xlu0 %1334
      %1336 = vrot.lane.b32.xlu0 %v694, 48
      %v1337 = vpop.permute.xlu0 %1336
      %v1342 = vsel %vm788, %v1329, 0
      %v1345 = vsel %vm788, %v1330, 0
      %v1348 = vsel %vm788, %v1331, 0
      %1350 = vmatprep.subr.bf16.mxu0 0
      %1351 = vmatpush1.bf16.msra.mxu0 %v1333
      %1352 = vmatprep.subr.bf16.mxu0 0
      %1353 = vmatpush1.bf16.msra.mxu0 %v1335
      %1354 = vmatprep.subr.bf16.mxu0 0
      %1355 = vmatpush1.bf16.msra.mxu0 %v1337
      %1356 = vmatprep.subr.bf16.mxu0 0
      %1357 = vmatpush1.bf16.msra.mxu0 0
      %1358 = vmatprep.subr.bf16.mxu0 0
      %1359 = vmatpush1.bf16.msra.mxu0 0
      %1360 = vmatprep.subr.bf16.mxu0 0
      %1361 = vmatpush1.bf16.msra.mxu0 0
      %1362 = vmatprep.subr.bf16.mxu0 0
      %1363 = vmatpush1.bf16.msra.mxu0 0
      %1364 = vmatprep.subr.bf16.mxu0 0
      %1365 = vmatpush1.bf16.msra.mxu0 0
      %1366 = vmatprep.subr.bf16.mxu0 0
      %1367 = vmatpush1.bf16.msra.mxu0 0
      %1368 = vmatprep.subr.bf16.mxu0 0
      %1369 = vmatpush1.bf16.msra.mxu0 0
      %1370 = vmatprep.subr.bf16.mxu0 0
      %1371 = vmatpush1.bf16.msra.mxu0 0
      %1372 = vmatprep.subr.bf16.mxu0 0
      %1373 = vmatpush1.bf16.msra.mxu0 0
      %1374 = vmatprep.subr.bf16.mxu0 0
      %1375 = vmatpush1.bf16.msra.mxu0 0
      %1376 = vmatprep.subr.bf16.mxu0 0
      %1377 = vmatpush1.bf16.msra.mxu0 0
      %1378 = vmatprep.subr.bf16.mxu0 0
      %1379 = vmatpush1.bf16.msra.mxu0 0
      %1380 = vmatprep.subr.bf16.mxu0 0
      %1381 = vmatpush1.bf16.msra.mxu0 0
      %1382 = vmatprep.mubr.bf16.mxu0 0
      %1383 = vmatmul.mubr.bf16.gmra.mrb[0].mxu0 %v1342
      %v1384 = vpop.f32.mrb[0].mxu0
      %v1385 = vadd.f32 0.0, %v1384
      %v1386 = vpop.f32.mrb[0].mxu0
      %v1387 = vpop.f32.mrb[0].mxu0
      %v1388 = vadd.f32 0.0, %v1387
      %v1389 = vpop.f32.mrb[0].mxu0
      %1390 = vmatprep.mubr.bf16.mxu0 0
      %1391 = vmatmul.mubr.bf16.gmra.mrb[0].mxu0 %v1345
      %v1392 = vpop.f32.mrb[0].mxu0
      %v1393 = vadd.f32 0.0, %v1392
      %v1394 = vpop.f32.mrb[0].mxu0
      %v1395 = vpop.f32.mrb[0].mxu0
      %v1396 = vadd.f32 0.0, %v1395
      %v1397 = vpop.f32.mrb[0].mxu0
      %1398 = vmatprep.mubr.bf16.mxu0 0
      %1399 = vmatmul.mubr.bf16.gmra.mrb[0].mxu0 %v1348
      %v1400 = vpop.f32.mrb[0].mxu0
      %v1401 = vadd.f32 0.0, %v1400
      %v1402 = vpop.f32.mrb[0].mxu0
      %v1403 = vpop.f32.mrb[0].mxu0
      %v1404 = vadd.f32 0.0, %v1403
      %v1405 = vpop.f32.mrb[0].mxu0
      %1406 = vdwg.mxu0
      %1407 = vrot.lane.b32.xlu0 %v692, 104
      %v1408 = vpop.permute.xlu0 %1407
      %1409 = vrot.lane.b32.xlu0 %v693, 104
      %v1410 = vpop.permute.xlu0 %1409
      %1411 = vrot.lane.b32.xlu0 %v694, 104
      %v1412 = vpop.permute.xlu0 %1411
      %1413 = vrot.lane.b32.xlu0 %v692, 72
      %v1414 = vpop.permute.xlu0 %1413
      %1415 = vrot.lane.b32.xlu0 %v693, 72
      %v1416 = vpop.permute.xlu0 %1415
      %1417 = vrot.lane.b32.xlu0 %v694, 72
      %v1418 = vpop.permute.xlu0 %1417
      %v1420 = vsel %vm704, %v1408, 0
      %v1423 = vsel %vm704, %v1410, 0
      %v1426 = vsel %vm704, %v1412, 0
      %v1429 = vsel %vm704, %v1414, 0
      %v1432 = vsel %vm704, %v1416, 0
      %v1435 = vsel %vm704, %v1418, 0
      %1437 = vmatprep.subr.bf16.mxu0 0
      %1438 = vmatpush1.bf16.xpose.msra.mxu0 %v1429
      %1439 = vmatprep.subr.bf16.mxu0 0
      %1440 = vmatpush1.bf16.xpose.msra.mxu0 %v1432
      %1441 = vmatprep.subr.bf16.mxu0 0
      %1442 = vmatpush1.bf16.xpose.msra.mxu0 %v1435
      %1443 = vmatprep.subr.bf16.mxu0 0
      %1444 = vmatpush1.bf16.xpose.msra.mxu0 0
      %1445 = vmatprep.subr.bf16.mxu0 0
      %1446 = vmatpush1.bf16.xpose.msra.mxu0 0
      %1447 = vmatprep.subr.bf16.mxu0 0
      %1448 = vmatpush1.bf16.xpose.msra.mxu0 0
      %1449 = vmatprep.subr.bf16.mxu0 0
      %1450 = vmatpush1.bf16.xpose.msra.mxu0 0
      %1451 = vmatprep.subr.bf16.mxu0 0
      %1452 = vmatpush1.bf16.xpose.msra.mxu0 0
      %1453 = vmatprep.subr.bf16.mxu0 0
      %1454 = vmatpush1.bf16.xpose.msra.mxu0 0
      %1455 = vmatprep.subr.bf16.mxu0 0
      %1456 = vmatpush1.bf16.xpose.msra.mxu0 0
      %1457 = vmatprep.subr.bf16.mxu0 0
      %1458 = vmatpush1.bf16.xpose.msra.mxu0 0
      %1459 = vmatprep.subr.bf16.mxu0 0
      %1460 = vmatpush1.bf16.xpose.msra.mxu0 0
      %1461 = vmatprep.subr.bf16.mxu0 0
      %1462 = vmatpush1.bf16.xpose.msra.mxu0 0
      %1463 = vmatprep.subr.bf16.mxu0 0
      %1464 = vmatpush1.bf16.xpose.msra.mxu0 0
      %1465 = vmatprep.subr.bf16.mxu0 0
      %1466 = vmatpush1.bf16.xpose.msra.mxu0 0
      %1467 = vmatprep.subr.bf16.mxu0 0
      %1468 = vmatpush1.bf16.xpose.msra.mxu0 0
      %1469 = vmatprep.mubr.bf16.mxu0 0
      %1470 = vmatmul.mubr.bf16.gmra.mrb[0].mxu0 %v1420
      %v1471 = vpop.f32.mrb[0].mxu0
      %v1472 = vadd.f32 0.0, %v1471
      %v1473 = vpop.f32.mrb[0].mxu0
      %v1474 = vpop.f32.mrb[0].mxu0
      %v1475 = vadd.f32 0.0, %v1474
      %v1476 = vpop.f32.mrb[0].mxu0
      %1477 = vmatprep.mubr.bf16.mxu0 0
      %1478 = vmatmul.mubr.bf16.gmra.mrb[0].mxu0 %v1423
      %v1479 = vpop.f32.mrb[0].mxu0
      %v1480 = vadd.f32 0.0, %v1479
      %v1481 = vpop.f32.mrb[0].mxu0
      %v1482 = vpop.f32.mrb[0].mxu0
      %v1483 = vadd.f32 0.0, %v1482
      %v1484 = vpop.f32.mrb[0].mxu0
      %1485 = vmatprep.mubr.bf16.mxu0 0
      %1486 = vmatmul.mubr.bf16.gmra.mrb[0].mxu0 %v1426
      %v1487 = vpop.f32.mrb[0].mxu0
      %v1488 = vadd.f32 0.0, %v1487
      %v1489 = vpop.f32.mrb[0].mxu0
      %v1490 = vpop.f32.mrb[0].mxu0
      %v1491 = vadd.f32 0.0, %v1490
      %v1492 = vpop.f32.mrb[0].mxu0
      %1493 = vdwg.mxu0
      %v1494 = vsel %vm781, %v1472, -1e+30
      %v1495 = vsel %vm781, %v1475, -1e+30
      %v1496 = vsel %vm781, %v1480, -1e+30
      %v1497 = vsel %vm781, %v1483, -1e+30
      %v1498 = vsel %vm781, %v1488, -1e+30
      %v1499 = vsel %vm781, %v1491, -1e+30
      %v1500 = vsel %vm788, %v1494, -inf
      %1501 = vmax.xlane.f32.xlu0 %v1500
      %v1502 = vpop.xlane.xlu0 %1501
      %v1503 = vsel %vm788, %v1495, -inf
      %1504 = vmax.xlane.f32.xlu0 %v1503
      %v1505 = vpop.xlane.xlu0 %1504
      %v1506 = vsel %vm788, %v1496, -inf
      %1507 = vmax.xlane.f32.xlu0 %v1506
      %v1508 = vpop.xlane.xlu0 %1507
      %v1509 = vsel %vm788, %v1497, -inf
      %1510 = vmax.xlane.f32.xlu0 %v1509
      %v1511 = vpop.xlane.xlu0 %1510
      %v1512 = vsel %vm788, %v1498, -inf
      %1513 = vmax.xlane.f32.xlu0 %v1512
      %v1514 = vpop.xlane.xlu0 %1513
      %v1515 = vsel %vm788, %v1499, -inf
      %1516 = vmax.xlane.f32.xlu0 %v1515
      %v1517 = vpop.xlane.xlu0 %1516
      %v1518 = vsub.f32 %v1494, %v1502
      %v1519 = vsub.f32 %v1495, %v1505
      %v1520 = vsub.f32 %v1496, %v1508
      %v1521 = vsub.f32 %v1497, %v1511
      %v1522 = vsub.f32 %v1498, %v1514
      %v1523 = vsub.f32 %v1499, %v1517
      %v1524 = vmul.f32 %v1518, 1.442695
      %v1525 = vpow.pop %v1524
      %v1526 = vmul.f32 %v1519, 1.442695
      %v1527 = vpow.pop %v1526
      %v1528 = vmul.f32 %v1520, 1.442695
      %v1529 = vpow.pop %v1528
      %v1530 = vmul.f32 %v1521, 1.442695
      %v1531 = vpow.pop %v1530
      %v1532 = vmul.f32 %v1522, 1.442695
      %v1533 = vpow.pop %v1532
      %v1534 = vmul.f32 %v1523, 1.442695
      %v1535 = vpow.pop %v1534
      %v1536 = vsel %vm788, %v1525, 0.0
      %1537 = vadd.xlane.f32.xlu0 %v1536
      %v1538 = vpop.xlane.xlu0 %1537
      %v1539 = vsel %vm788, %v1527, 0.0
      %1540 = vadd.xlane.f32.xlu0 %v1539
      %v1541 = vpop.xlane.xlu0 %1540
      %v1542 = vsel %vm788, %v1529, 0.0
      %1543 = vadd.xlane.f32.xlu0 %v1542
      %v1544 = vpop.xlane.xlu0 %1543
      %v1545 = vsel %vm788, %v1531, 0.0
      %1546 = vadd.xlane.f32.xlu0 %v1545
      %v1547 = vpop.xlane.xlu0 %1546
      %v1548 = vsel %vm788, %v1533, 0.0
      %1549 = vadd.xlane.f32.xlu0 %v1548
      %v1550 = vpop.xlane.xlu0 %1549
      %v1551 = vsel %vm788, %v1535, 0.0
      %1552 = vadd.xlane.f32.xlu0 %v1551
      %v1553 = vpop.xlane.xlu0 %1552
      %v1554 = vrcp.pop %v1538
      %v1555 = vrcp.pop %v1541
      %v1556 = vrcp.pop %v1544
      %v1557 = vrcp.pop %v1547
      %v1558 = vrcp.pop %v1550
      %v1559 = vrcp.pop %v1553
      %v1560 = vmul.f32 %v1525, %v1554
      %v1561 = vmul.f32 %v1527, %v1555
      %v1562 = vmul.f32 %v1529, %v1556
      %v1563 = vmul.f32 %v1531, %v1557
      %v1564 = vmul.f32 %v1533, %v1558
      %v1565 = vmul.f32 %v1535, %v1559
      %v1566 = vpack.c.bf16 %v1561, %v1560
      %v1567 = vpack.c.bf16 %v1563, %v1562
      %v1568 = vpack.c.bf16 %v1565, %v1564
      %1569 = vrot.lane.b32.xlu0 %v692, 40
      %v1570 = vpop.permute.xlu0 %1569
      %1571 = vrot.lane.b32.xlu0 %v693, 40
      %v1572 = vpop.permute.xlu0 %1571
      %1573 = vrot.lane.b32.xlu0 %v694, 40
      %v1574 = vpop.permute.xlu0 %1573
      %v1579 = vsel %vm788, %v1566, 0
      %v1582 = vsel %vm788, %v1567, 0
      %v1585 = vsel %vm788, %v1568, 0
      %1587 = vmatprep.subr.bf16.mxu0 0
      %1588 = vmatpush1.bf16.msra.mxu0 %v1570
      %1589 = vmatprep.subr.bf16.mxu0 0
      %1590 = vmatpush1.bf16.msra.mxu0 %v1572
      %1591 = vmatprep.subr.bf16.mxu0 0
      %1592 = vmatpush1.bf16.msra.mxu0 %v1574
      %1593 = vmatprep.subr.bf16.mxu0 0
      %1594 = vmatpush1.bf16.msra.mxu0 0
      %1595 = vmatprep.subr.bf16.mxu0 0
      %1596 = vmatpush1.bf16.msra.mxu0 0
      %1597 = vmatprep.subr.bf16.mxu0 0
      %1598 = vmatpush1.bf16.msra.mxu0 0
      %1599 = vmatprep.subr.bf16.mxu0 0
      %1600 = vmatpush1.bf16.msra.mxu0 0
      %1601 = vmatprep.subr.bf16.mxu0 0
      %1602 = vmatpush1.bf16.msra.mxu0 0
      %1603 = vmatprep.subr.bf16.mxu0 0
      %1604 = vmatpush1.bf16.msra.mxu0 0
      %1605 = vmatprep.subr.bf16.mxu0 0
      %1606 = vmatpush1.bf16.msra.mxu0 0
      %1607 = vmatprep.subr.bf16.mxu0 0
      %1608 = vmatpush1.bf16.msra.mxu0 0
      %1609 = vmatprep.subr.bf16.mxu0 0
      %1610 = vmatpush1.bf16.msra.mxu0 0
      %1611 = vmatprep.subr.bf16.mxu0 0
      %1612 = vmatpush1.bf16.msra.mxu0 0
      %1613 = vmatprep.subr.bf16.mxu0 0
      %1614 = vmatpush1.bf16.msra.mxu0 0
      %1615 = vmatprep.subr.bf16.mxu0 0
      %1616 = vmatpush1.bf16.msra.mxu0 0
      %1617 = vmatprep.subr.bf16.mxu0 0
      %1618 = vmatpush1.bf16.msra.mxu0 0
      %1619 = vmatprep.mubr.bf16.mxu0 0
      %1620 = vmatmul.mubr.bf16.gmra.mrb[0].mxu0 %v1579
      %v1621 = vpop.f32.mrb[0].mxu0
      %v1622 = vadd.f32 0.0, %v1621
      %v1623 = vpop.f32.mrb[0].mxu0
      %v1624 = vpop.f32.mrb[0].mxu0
      %v1625 = vadd.f32 0.0, %v1624
      %v1626 = vpop.f32.mrb[0].mxu0
      %1627 = vmatprep.mubr.bf16.mxu0 0
      %1628 = vmatmul.mubr.bf16.gmra.mrb[0].mxu0 %v1582
      %v1629 = vpop.f32.mrb[0].mxu0
      %v1630 = vadd.f32 0.0, %v1629
      %v1631 = vpop.f32.mrb[0].mxu0
      %v1632 = vpop.f32.mrb[0].mxu0
      %v1633 = vadd.f32 0.0, %v1632
      %v1634 = vpop.f32.mrb[0].mxu0
      %1635 = vmatprep.mubr.bf16.mxu0 0
      %1636 = vmatmul.mubr.bf16.gmra.mrb[0].mxu0 %v1585
      %v1637 = vpop.f32.mrb[0].mxu0
      %v1638 = vadd.f32 0.0, %v1637
      %v1639 = vpop.f32.mrb[0].mxu0
      %v1640 = vpop.f32.mrb[0].mxu0
      %v1641 = vadd.f32 0.0, %v1640
      %v1642 = vpop.f32.mrb[0].mxu0
      %1643 = vdwg.mxu0
      %1650 = vrot.lane.b32.xlu0 %v1148, 8
      %v1651 = vpop.permute.xlu0 %1650
      %1652 = vrot.lane.b32.xlu0 %v1151, 8
      %v1653 = vpop.permute.xlu0 %1652
      %1654 = vrot.lane.b32.xlu0 %v1156, 8
      %v1655 = vpop.permute.xlu0 %1654
      %1656 = vrot.lane.b32.xlu0 %v1159, 8
      %v1657 = vpop.permute.xlu0 %1656
      %1658 = vrot.lane.b32.xlu0 %v1164, 8
      %v1659 = vpop.permute.xlu0 %1658
      %1660 = vrot.lane.b32.xlu0 %v1167, 8
      %v1661 = vpop.permute.xlu0 %1660
      %1674 = vrot.lane.b32.xlu0 %v1385, 16
      %v1675 = vpop.permute.xlu0 %1674
      %1676 = vrot.lane.b32.xlu0 %v1388, 16
      %v1677 = vpop.permute.xlu0 %1676
      %1678 = vrot.lane.b32.xlu0 %v1393, 16
      %v1679 = vpop.permute.xlu0 %1678
      %1680 = vrot.lane.b32.xlu0 %v1396, 16
      %v1681 = vpop.permute.xlu0 %1680
      %1682 = vrot.lane.b32.xlu0 %v1401, 16
      %v1683 = vpop.permute.xlu0 %1682
      %1684 = vrot.lane.b32.xlu0 %v1404, 16
      %v1685 = vpop.permute.xlu0 %1684
      %1698 = vrot.lane.b32.xlu0 %v1622, 24
      %v1699 = vpop.permute.xlu0 %1698
      %1700 = vrot.lane.b32.xlu0 %v1625, 24
      %v1701 = vpop.permute.xlu0 %1700
      %1702 = vrot.lane.b32.xlu0 %v1630, 24
      %v1703 = vpop.permute.xlu0 %1702
      %1704 = vrot.lane.b32.xlu0 %v1633, 24
      %v1705 = vpop.permute.xlu0 %1704
      %1706 = vrot.lane.b32.xlu0 %v1638, 24
      %v1707 = vpop.permute.xlu0 %1706
      %1708 = vrot.lane.b32.xlu0 %v1641, 24
      %v1709 = vpop.permute.xlu0 %1708
      %v1716 = vsel %vm704, %v911, %v1651
      %v1717 = vsel %vm704, %v914, %v1653
      %v1718 = vsel %vm704, %v919, %v1655
      %v1719 = vsel %vm704, %v922, %v1657
      %v1720 = vsel %vm704, %v927, %v1659
      %v1721 = vsel %vm704, %v930, %v1661
      %vm1722 = vcmask 130048
      %v1723 = vsel %vm1722, %v1716, %v1675
      %v1724 = vsel %vm1722, %v1717, %v1677
      %v1725 = vsel %vm1722, %v1718, %v1679
      %v1726 = vsel %vm1722, %v1719, %v1681
      %v1727 = vsel %vm1722, %v1720, %v1683
      %v1728 = vsel %vm1722, %v1721, %v1685
      %vm1729 = vcmask 195584
      %v1730 = vsel %vm1729, %v1723, %v1699
      %v1731 = vsel %vm1729, %v1724, %v1701
      %v1732 = vsel %vm1729, %v1725, %v1703
      %v1733 = vsel %vm1729, %v1726, %v1705
      %v1734 = vsel %vm1729, %v1727, %v1707
      %v1735 = vsel %vm1729, %v1728, %v1709
      %v1736 = vpack.c.bf16 %v1731, %v1730
      %v1737 = vpack.c.bf16 %v1733, %v1732
      %v1738 = vpack.c.bf16 %v1735, %v1734
      %v1743 = vunpack.c.l.b16 %v480
      %v1744 = vunpack.c.l.b16 %v481
      %v1745 = vunpack.c.l.b16 %v482
      %v1746 = vunpack.c.l.b16 %v483
      %v1747 = vpack.c.b16 %v1744, %v1743
      %v1748 = vpack.c.b16 %v1746, %v1745
      %v1752 = vsel %vm504, %v1736, 0
      %v1755 = vsel %vm504, %v1737, 0
      %v1758 = vsel %vm504, %v1738, 0
      %1760 = vmatprep.subr.bf16.mxu0 0
      %1761 = vmatpush1.bf16.msra.mxu0 %v1747
      %1762 = vmatprep.subr.bf16.mxu0 0
      %1763 = vmatpush1.bf16.msra.mxu0 %v1748
      %1764 = vmatprep.subr.bf16.mxu0 0
      %1765 = vmatpush1.bf16.msra.mxu0 0
      %1766 = vmatprep.subr.bf16.mxu0 0
      %1767 = vmatpush1.bf16.msra.mxu0 0
      %1768 = vmatprep.subr.bf16.mxu0 0
      %1769 = vmatpush1.bf16.msra.mxu0 0
      %1770 = vmatprep.subr.bf16.mxu0 0
      %1771 = vmatpush1.bf16.msra.mxu0 0
      %1772 = vmatprep.subr.bf16.mxu0 0
      %1773 = vmatpush1.bf16.msra.mxu0 0
      %1774 = vmatprep.subr.bf16.mxu0 0
      %1775 = vmatpush1.bf16.msra.mxu0 0
      %1776 = vmatprep.subr.bf16.mxu0 0
      %1777 = vmatpush1.bf16.msra.mxu0 0
      %1778 = vmatprep.subr.bf16.mxu0 0
      %1779 = vmatpush1.bf16.msra.mxu0 0
      %1780 = vmatprep.subr.bf16.mxu0 0
      %1781 = vmatpush1.bf16.msra.mxu0 0
      %1782 = vmatprep.subr.bf16.mxu0 0
      %1783 = vmatpush1.bf16.msra.mxu0 0
      %1784 = vmatprep.subr.bf16.mxu0 0
      %1785 = vmatpush1.bf16.msra.mxu0 0
      %1786 = vmatprep.subr.bf16.mxu0 0
      %1787 = vmatpush1.bf16.msra.mxu0 0
      %1788 = vmatprep.subr.bf16.mxu0 0
      %1789 = vmatpush1.bf16.msra.mxu0 0
      %1790 = vmatprep.subr.bf16.mxu0 0
      %1791 = vmatpush1.bf16.msra.mxu0 0
      %1792 = vmatprep.mubr.bf16.mxu0 0
      %1793 = vmatmul.mubr.bf16.gmra.mrb[0].mxu0 %v1752
      %v1794 = vpop.f32.mrb[0].mxu0
      %v1795 = vadd.f32 0.0, %v1794
      %v1796 = vpop.f32.mrb[0].mxu0
      %v1797 = vpop.f32.mrb[0].mxu0
      %v1798 = vadd.f32 0.0, %v1797
      %v1799 = vpop.f32.mrb[0].mxu0
      %1800 = vmatprep.mubr.bf16.mxu0 0
      %1801 = vmatmul.mubr.bf16.gmra.mrb[0].mxu0 %v1755
      %v1802 = vpop.f32.mrb[0].mxu0
      %v1803 = vadd.f32 0.0, %v1802
      %v1804 = vpop.f32.mrb[0].mxu0
      %v1805 = vpop.f32.mrb[0].mxu0
      %v1806 = vadd.f32 0.0, %v1805
      %v1807 = vpop.f32.mrb[0].mxu0
      %1808 = vmatprep.mubr.bf16.mxu0 0
      %1809 = vmatmul.mubr.bf16.gmra.mrb[0].mxu0 %v1758
      %v1810 = vpop.f32.mrb[0].mxu0
      %v1811 = vadd.f32 0.0, %v1810
      %v1812 = vpop.f32.mrb[0].mxu0
      %v1813 = vpop.f32.mrb[0].mxu0
      %v1814 = vadd.f32 0.0, %v1813
      %v1815 = vpop.f32.mrb[0].mxu0
      %1816 = vdwg.mxu0
      %v1817 = vadd.f32 %v469, %v1795
      %v1818 = vadd.f32 %v470, %v1798
      %v1819 = vadd.f32 %v471, %v1803
      %v1820 = vadd.f32 %v472, %v1806
      %v1821 = vadd.f32 %v473, %v1811
      %v1822 = vadd.f32 %v474, %v1814
      %v1823 = vlaneseq
      %v1824 = vshrl.u32 %v1823, 7
      %v1825 = vsub.s32 4, %v1824
      %v1826 = vrot.slane %v475, %v1825
      %v1827 = vadd.f32 %v1817, %v1826
      %v1828 = vadd.f32 %v1818, %v1826
      %v1829 = vadd.f32 %v1819, %v1826
      %v1830 = vadd.f32 %v1820, %v1826
      %v1831 = vadd.f32 %v1821, %v1826
      %v1832 = vadd.f32 %v1822, %v1826
      %v1833 = vsel %vm504, %v1827, 0.0
      %1834 = vadd.xlane.f32.xlu0 %v1833
      %v1835 = vpop.xlane.xlu0 %1834
      %v1836 = vsel %vm504, %v1828, 0.0
      %1837 = vadd.xlane.f32.xlu0 %v1836
      %v1838 = vpop.xlane.xlu0 %1837
      %v1839 = vsel %vm504, %v1829, 0.0
      %1840 = vadd.xlane.f32.xlu0 %v1839
      %v1841 = vpop.xlane.xlu0 %1840
      %v1842 = vsel %vm504, %v1830, 0.0
      %1843 = vadd.xlane.f32.xlu0 %v1842
      %v1844 = vpop.xlane.xlu0 %1843
      %v1845 = vsel %vm504, %v1831, 0.0
      %1846 = vadd.xlane.f32.xlu0 %v1845
      %v1847 = vpop.xlane.xlu0 %1846
      %v1848 = vsel %vm504, %v1832, 0.0
      %1849 = vadd.xlane.f32.xlu0 %v1848
      %v1850 = vpop.xlane.xlu0 %1849
      %v1851 = vmul.f32 %v1835, %v523
      %v1852 = vmul.f32 %v1838, %v523
      %v1853 = vmul.f32 %v1841, %v523
      %v1854 = vmul.f32 %v1844, %v523
      %v1855 = vmul.f32 %v1847, %v523
      %v1856 = vmul.f32 %v1850, %v523
      %v1857 = vsub.f32 %v1827, %v1851
      %v1858 = vsub.f32 %v1828, %v1852
      %v1859 = vsub.f32 %v1829, %v1853
      %v1860 = vsub.f32 %v1830, %v1854
      %v1861 = vsub.f32 %v1831, %v1855
      %v1862 = vsub.f32 %v1832, %v1856
      %v1863 = vmul.f32 %v1857, %v1857
      %v1864 = vmul.f32 %v1858, %v1858
      %v1865 = vmul.f32 %v1859, %v1859
      %v1866 = vmul.f32 %v1860, %v1860
      %v1867 = vmul.f32 %v1861, %v1861
      %v1868 = vmul.f32 %v1862, %v1862
      %v1869 = vsel %vm504, %v1863, 0.0
      %1870 = vadd.xlane.f32.xlu0 %v1869
      %v1871 = vpop.xlane.xlu0 %1870
      %v1872 = vsel %vm504, %v1864, 0.0
      %1873 = vadd.xlane.f32.xlu0 %v1872
      %v1874 = vpop.xlane.xlu0 %1873
      %v1875 = vsel %vm504, %v1865, 0.0
      %1876 = vadd.xlane.f32.xlu0 %v1875
      %v1877 = vpop.xlane.xlu0 %1876
      %v1878 = vsel %vm504, %v1866, 0.0
      %1879 = vadd.xlane.f32.xlu0 %v1878
      %v1880 = vpop.xlane.xlu0 %1879
      %v1881 = vsel %vm504, %v1867, 0.0
      %1882 = vadd.xlane.f32.xlu0 %v1881
      %v1883 = vpop.xlane.xlu0 %1882
      %v1884 = vsel %vm504, %v1868, 0.0
      %1885 = vadd.xlane.f32.xlu0 %v1884
      %v1886 = vpop.xlane.xlu0 %1885
      %v1887 = vmul.f32 %v1871, %v523
      %v1888 = vmul.f32 %v1874, %v523
      %v1889 = vmul.f32 %v1877, %v523
      %v1890 = vmul.f32 %v1880, %v523
      %v1891 = vmul.f32 %v1883, %v523
      %v1892 = vmul.f32 %v1886, %v523
      %v1893 = vadd.f32 %v1887, 1e-05
      %v1894 = vadd.f32 %v1888, 1e-05
      %v1895 = vadd.f32 %v1889, 1e-05
      %v1896 = vadd.f32 %v1890, 1e-05
      %v1897 = vadd.f32 %v1891, 1e-05
      %v1898 = vadd.f32 %v1892, 1e-05
      %v1899 = vrsqrt.pop %v1893
      %v1900 = vrsqrt.pop %v1894
      %v1901 = vrsqrt.pop %v1895
      %v1902 = vrsqrt.pop %v1896
      %v1903 = vrsqrt.pop %v1897
      %v1904 = vrsqrt.pop %v1898
      %v1905 = vmul.f32 %v1857, %v1899
      %v1906 = vmul.f32 %v1858, %v1900
      %v1907 = vmul.f32 %v1859, %v1901
      %v1908 = vmul.f32 %v1860, %v1902
      %v1909 = vmul.f32 %v1861, %v1903
      %v1910 = vmul.f32 %v1862, %v1904
      %v1911 = vlaneseq
      %v1912 = vshrl.u32 %v1911, 7
      %v1913 = vsub.s32 2, %v1912
      %v1914 = vrot.slane %v475, %v1913
      %v1915 = vmul.f32 %v1905, %v1914
      %v1916 = vmul.f32 %v1906, %v1914
      %v1917 = vmul.f32 %v1907, %v1914
      %v1918 = vmul.f32 %v1908, %v1914
      %v1919 = vmul.f32 %v1909, %v1914
      %v1920 = vmul.f32 %v1910, %v1914
      %v1921 = vlaneseq
      %v1922 = vshrl.u32 %v1921, 7
      %v1923 = vsub.s32 3, %v1922
      %v1924 = vrot.slane %v475, %v1923
      %v1925 = vadd.f32 %v1915, %v1924
      %v1926 = vadd.f32 %v1916, %v1924
      %v1927 = vadd.f32 %v1917, %v1924
      %v1928 = vadd.f32 %v1918, %v1924
      %v1929 = vadd.f32 %v1919, %v1924
      %v1930 = vadd.f32 %v1920, %v1924
      %v1931 = vpack.c.bf16 %v1926, %v1925
      %v1932 = vpack.c.bf16 %v1928, %v1927
      %v1933 = vpack.c.bf16 %v1930, %v1929
      %v1934 = vlaneseq
      %v1935 = vshrl.u32 %v1934, 7
      %v1936 = vsub.s32 7, %v1935
      %v1937 = vrot.slane %v475, %v1936
      %v1942 = vunpack.c.l.b16 %v484
      %v1943 = vunpack.c.l.b16 %v485
      %v1944 = vunpack.c.l.b16 %v486
      %v1945 = vunpack.c.l.b16 %v487
      %v1946 = vpack.c.b16 %v1943, %v1942
      %v1947 = vpack.c.b16 %v1945, %v1944
      %v1951 = vsel %vm504, %v1931, 0
      %v1954 = vsel %vm504, %v1932, 0
      %v1957 = vsel %vm504, %v1933, 0
      %1959 = vmatprep.subr.bf16.mxu0 0
      %1960 = vmatpush1.bf16.msra.mxu0 %v1946
      %1961 = vmatprep.subr.bf16.mxu0 0
      %1962 = vmatpush1.bf16.msra.mxu0 %v1947
      %1963 = vmatprep.subr.bf16.mxu0 0
      %1964 = vmatpush1.bf16.msra.mxu0 0
      %1965 = vmatprep.subr.bf16.mxu0 0
      %1966 = vmatpush1.bf16.msra.mxu0 0
      %1967 = vmatprep.subr.bf16.mxu0 0
      %1968 = vmatpush1.bf16.msra.mxu0 0
      %1969 = vmatprep.subr.bf16.mxu0 0
      %1970 = vmatpush1.bf16.msra.mxu0 0
      %1971 = vmatprep.subr.bf16.mxu0 0
      %1972 = vmatpush1.bf16.msra.mxu0 0
      %1973 = vmatprep.subr.bf16.mxu0 0
      %1974 = vmatpush1.bf16.msra.mxu0 0
      %1975 = vmatprep.subr.bf16.mxu0 0
      %1976 = vmatpush1.bf16.msra.mxu0 0
      %1977 = vmatprep.subr.bf16.mxu0 0
      %1978 = vmatpush1.bf16.msra.mxu0 0
      %1979 = vmatprep.subr.bf16.mxu0 0
      %1980 = vmatpush1.bf16.msra.mxu0 0
      %1981 = vmatprep.subr.bf16.mxu0 0
      %1982 = vmatpush1.bf16.msra.mxu0 0
      %1983 = vmatprep.subr.bf16.mxu0 0
      %1984 = vmatpush1.bf16.msra.mxu0 0
      %1985 = vmatprep.subr.bf16.mxu0 0
      %1986 = vmatpush1.bf16.msra.mxu0 0
      %1987 = vmatprep.subr.bf16.mxu0 0
      %1988 = vmatpush1.bf16.msra.mxu0 0
      %1989 = vmatprep.subr.bf16.mxu0 0
      %1990 = vmatpush1.bf16.msra.mxu0 0
      %1991 = vmatprep.mubr.bf16.mxu0 0
      %1992 = vmatmul.mubr.bf16.gmra.mrb[0].mxu0 %v1951
      %v1993 = vpop.f32.mrb[0].mxu0
      %v1994 = vadd.f32 %v1937, %v1993
      %v1995 = vpop.f32.mrb[0].mxu0
      %v1996 = vpop.f32.mrb[0].mxu0
      %v1997 = vadd.f32 %v1937, %v1996
      %v1998 = vpop.f32.mrb[0].mxu0
      %1999 = vmatprep.mubr.bf16.mxu0 0
      %2000 = vmatmul.mubr.bf16.gmra.mrb[0].mxu0 %v1954
      %v2001 = vpop.f32.mrb[0].mxu0
      %v2002 = vadd.f32 %v1937, %v2001
      %v2003 = vpop.f32.mrb[0].mxu0
      %v2004 = vpop.f32.mrb[0].mxu0
      %v2005 = vadd.f32 %v1937, %v2004
      %v2006 = vpop.f32.mrb[0].mxu0
      %2007 = vmatprep.mubr.bf16.mxu0 0
      %2008 = vmatmul.mubr.bf16.gmra.mrb[0].mxu0 %v1957
      %v2009 = vpop.f32.mrb[0].mxu0
      %v2010 = vadd.f32 %v1937, %v2009
      %v2011 = vpop.f32.mrb[0].mxu0
      %v2012 = vpop.f32.mrb[0].mxu0
      %v2013 = vadd.f32 %v1937, %v2012
      %v2014 = vpop.f32.mrb[0].mxu0
      %2015 = vdwg.mxu0
      %v2016 = vmul.f32 %v1994, %v1994
      %v2017 = vmul.f32 %v1997, %v1997
      %v2018 = vmul.f32 %v2002, %v2002
      %v2019 = vmul.f32 %v2005, %v2005
      %v2020 = vmul.f32 %v2010, %v2010
      %v2021 = vmul.f32 %v2013, %v2013
      %v2022 = vmul.f32 %v1994, %v2016
      %v2023 = vmul.f32 %v1997, %v2017
      %v2024 = vmul.f32 %v2002, %v2018
      %v2025 = vmul.f32 %v2005, %v2019
      %v2026 = vmul.f32 %v2010, %v2020
      %v2027 = vmul.f32 %v2013, %v2021
      %v2028 = vmul.f32 %v2022, 0.044715
      %v2029 = vmul.f32 %v2023, 0.044715
      %v2030 = vmul.f32 %v2024, 0.044715
      %v2031 = vmul.f32 %v2025, 0.044715
      %v2032 = vmul.f32 %v2026, 0.044715
      %v2033 = vmul.f32 %v2027, 0.044715
      %v2034 = vadd.f32 %v1994, %v2028
      %v2035 = vadd.f32 %v1997, %v2029
      %v2036 = vadd.f32 %v2002, %v2030
      %v2037 = vadd.f32 %v2005, %v2031
      %v2038 = vadd.f32 %v2010, %v2032
      %v2039 = vadd.f32 %v2013, %v2033
      %v2040 = vmul.f32 %v2034, 0.7978846
      %v2041 = vmul.f32 %v2035, 0.7978846
      %v2042 = vmul.f32 %v2036, 0.7978846
      %v2043 = vmul.f32 %v2037, 0.7978846
      %v2044 = vmul.f32 %v2038, 0.7978846
      %v2045 = vmul.f32 %v2039, 0.7978846
      %v2046 = vtanh.pop %v2040
      %v2047 = vtanh.pop %v2041
      %v2048 = vtanh.pop %v2042
      %v2049 = vtanh.pop %v2043
      %v2050 = vtanh.pop %v2044
      %v2051 = vtanh.pop %v2045
      %v2052 = vadd.f32 %v2046, 1.0
      %v2053 = vadd.f32 %v2047, 1.0
      %v2054 = vadd.f32 %v2048, 1.0
      %v2055 = vadd.f32 %v2049, 1.0
      %v2056 = vadd.f32 %v2050, 1.0
      %v2057 = vadd.f32 %v2051, 1.0
      %v2058 = vmul.f32 %v2052, 0.5
      %v2059 = vmul.f32 %v2053, 0.5
      %v2060 = vmul.f32 %v2054, 0.5
      %v2061 = vmul.f32 %v2055, 0.5
      %v2062 = vmul.f32 %v2056, 0.5
      %v2063 = vmul.f32 %v2057, 0.5
      %v2064 = vmul.f32 %v1994, %v2058
      %v2065 = vmul.f32 %v1997, %v2059
      %v2066 = vmul.f32 %v2002, %v2060
      %v2067 = vmul.f32 %v2005, %v2061
      %v2068 = vmul.f32 %v2010, %v2062
      %v2069 = vmul.f32 %v2013, %v2063
      %v2070 = vpack.c.bf16 %v2065, %v2064
      %v2071 = vpack.c.bf16 %v2067, %v2066
      %v2072 = vpack.c.bf16 %v2069, %v2068
      %v2089 = vunpack.c.l.b16 %v488
      %v2090 = vunpack.c.l.b16 %v489
      %v2091 = vunpack.c.l.b16 %v490
      %v2092 = vunpack.c.l.b16 %v491
      %v2093 = vunpack.c.l.b16 %v492
      %v2094 = vunpack.c.l.b16 %v493
      %v2095 = vunpack.c.l.b16 %v494
      %v2096 = vunpack.c.l.b16 %v495
      %v2097 = vunpack.c.l.b16 %v496
      %v2098 = vunpack.c.l.b16 %v497
      %v2099 = vunpack.c.l.b16 %v498
      %v2100 = vunpack.c.l.b16 %v499
      %v2101 = vunpack.c.l.b16 %v500
      %v2102 = vunpack.c.l.b16 %v501
      %v2103 = vunpack.c.l.b16 %v502
      %v2104 = vunpack.c.l.b16 %v503
      %v2105 = vpack.c.b16 %v2090, %v2089
      %v2106 = vpack.c.b16 %v2092, %v2091
      %v2107 = vpack.c.b16 %v2094, %v2093
      %v2108 = vpack.c.b16 %v2096, %v2095
      %v2109 = vpack.c.b16 %v2098, %v2097
      %v2110 = vpack.c.b16 %v2100, %v2099
      %v2111 = vpack.c.b16 %v2102, %v2101
      %v2112 = vpack.c.b16 %v2104, %v2103
      %2121 = vmatprep.subr.bf16.mxu0 0
      %2122 = vmatpush1.bf16.msra.mxu0 %v2105
      %2123 = vmatprep.subr.bf16.mxu0 0
      %2124 = vmatpush1.bf16.msra.mxu0 %v2106
      %2125 = vmatprep.subr.bf16.mxu0 0
      %2126 = vmatpush1.bf16.msra.mxu0 %v2107
      %2127 = vmatprep.subr.bf16.mxu0 0
      %2128 = vmatpush1.bf16.msra.mxu0 %v2108
      %2129 = vmatprep.subr.bf16.mxu0 0
      %2130 = vmatpush1.bf16.msra.mxu0 %v2109
      %2131 = vmatprep.subr.bf16.mxu0 0
      %2132 = vmatpush1.bf16.msra.mxu0 %v2110
      %2133 = vmatprep.subr.bf16.mxu0 0
      %2134 = vmatpush1.bf16.msra.mxu0 %v2111
      %2135 = vmatprep.subr.bf16.mxu0 0
      %2136 = vmatpush1.bf16.msra.mxu0 %v2112
      %2137 = vmatprep.subr.bf16.mxu0 0
      %2138 = vmatpush1.bf16.msra.mxu0 0
      %2139 = vmatprep.subr.bf16.mxu0 0
      %2140 = vmatpush1.bf16.msra.mxu0 0
      %2141 = vmatprep.subr.bf16.mxu0 0
      %2142 = vmatpush1.bf16.msra.mxu0 0
      %2143 = vmatprep.subr.bf16.mxu0 0
      %2144 = vmatpush1.bf16.msra.mxu0 0
      %2145 = vmatprep.subr.bf16.mxu0 0
      %2146 = vmatpush1.bf16.msra.mxu0 0
      %2147 = vmatprep.subr.bf16.mxu0 0
      %2148 = vmatpush1.bf16.msra.mxu0 0
      %2149 = vmatprep.subr.bf16.mxu0 0
      %2150 = vmatpush1.bf16.msra.mxu0 0
      %2151 = vmatprep.subr.bf16.mxu0 0
      %2152 = vmatpush1.bf16.msra.mxu0 0
      %2153 = vmatprep.mubr.bf16.mxu0 0
      %2154 = vmatmul.mubr.bf16.gmra.mrb[0].mxu0 %v2070
      %v2155 = vpop.f32.mrb[0].mxu0
      %v2156 = vadd.f32 0.0, %v2155
      %v2157 = vpop.f32.mrb[0].mxu0
      %v2158 = vpop.f32.mrb[0].mxu0
      %v2159 = vadd.f32 0.0, %v2158
      %v2160 = vpop.f32.mrb[0].mxu0
      %2161 = vmatprep.mubr.bf16.mxu0 0
      %2162 = vmatmul.mubr.bf16.gmra.mrb[0].mxu0 %v2071
      %v2163 = vpop.f32.mrb[0].mxu0
      %v2164 = vadd.f32 0.0, %v2163
      %v2165 = vpop.f32.mrb[0].mxu0
      %v2166 = vpop.f32.mrb[0].mxu0
      %v2167 = vadd.f32 0.0, %v2166
      %v2168 = vpop.f32.mrb[0].mxu0
      %2169 = vmatprep.mubr.bf16.mxu0 0
      %2170 = vmatmul.mubr.bf16.gmra.mrb[0].mxu0 %v2072
      %v2171 = vpop.f32.mrb[0].mxu0
      %v2172 = vadd.f32 0.0, %v2171
      %v2173 = vpop.f32.mrb[0].mxu0
      %v2174 = vpop.f32.mrb[0].mxu0
      %v2175 = vadd.f32 0.0, %v2174
      %v2176 = vpop.f32.mrb[0].mxu0
      %2177 = vdwg.mxu0
      %v2178 = vadd.f32 %v1827, %v2156
      %v2179 = vadd.f32 %v1828, %v2159
      %v2180 = vadd.f32 %v1829, %v2164
      %v2181 = vadd.f32 %v1830, %v2167
      %v2182 = vadd.f32 %v1831, %v2172
      %v2183 = vadd.f32 %v1832, %v2175
      %v2184 = vlaneseq
      %v2185 = vshrl.u32 %v2184, 7
      %v2186 = vsub.s32 5, %v2185
      %v2187 = vrot.slane %v475, %v2186
      %v2188 = vadd.f32 %v2178, %v2187
      %v2189 = vadd.f32 %v2179, %v2187
      %v2190 = vadd.f32 %v2180, %v2187
      %v2191 = vadd.f32 %v2181, %v2187
      %v2192 = vadd.f32 %v2182, %v2187
      %v2193 = vadd.f32 %v2183, %v2187
      %v2194 = vld [vmem:[%s6] sm:$0xf]
      %v2195 = vld [vmem:[%s6 + $0x4] sm:$0xf]
      %v2196 = vld [vmem:[%s6 + $0x8] sm:$0xf]
      %v2197 = vld [vmem:[%s6 + $0xc] sm:$0xf]
      %v2198 = vld [vmem:[%s6 + $0x10] sm:$0xf]
      %v2199 = vld [vmem:[%s6 + $0x14] sm:$0xf]
      %v2200 = vld [vmem:[%s6 + $0x18] sm:$0xf]
      %v2201 = vld [vmem:[%s6 + $0x1c] sm:$0xf]
      %v2202 = vld [vmem:[%s6 + $0x20] sm:$0xf]
      %v2203 = vld [vmem:[%s6 + $0x24] sm:$0xf]
      %v2204 = vld [vmem:[%s7] sm:$0xf]
      %v2205 = vld [vmem:[%s7 + $0x4] sm:$0xf]
      %v2206 = vld [vmem:[%s7 + $0x8] sm:$0xf]
      %v2207 = vld [vmem:[%s7 + $0xc] sm:$0xf]
      %v2208 = vld [vmem:[%s7 + $0x10] sm:$0xf]
      %v2209 = vld [vmem:[%s7 + $0x14] sm:$0xf]
      %v2210 = vld [vmem:[%s7 + $0x18] sm:$0xf]
      %v2211 = vld [vmem:[%s7 + $0x1c] sm:$0xf]
      %v2212 = vld [vmem:[%s7 + $0x20] sm:$0xf]
      %v2213 = vld [vmem:[%s7 + $0x24] sm:$0xf]
      %v2214 = vld [vmem:[%s7 + $0x28] sm:$0xf]
      %v2215 = vld [vmem:[%s7 + $0x2c] sm:$0xf]
      %v2216 = vld [vmem:[%s7 + $0x30] sm:$0xf]
      %v2217 = vld [vmem:[%s7 + $0x34] sm:$0xf]
      %v2218 = vld [vmem:[%s7 + $0x38] sm:$0xf]
      %v2219 = vld [vmem:[%s7 + $0x3c] sm:$0xf]
      %v2220 = vld [vmem:[%s7 + $0x40] sm:$0xf]
      %v2221 = vld [vmem:[%s7 + $0x44] sm:$0xf]
      %v2222 = vld [vmem:[%s7 + $0x48] sm:$0xf]
      %v2223 = vld [vmem:[%s7 + $0x4c] sm:$0xf]
      %v2224 = vld [vmem:[%s8] sm:$0x3]
      %v2225 = vpack.c.bf16 %v2189, %v2188
      %v2226 = vpack.c.bf16 %v2191, %v2190
      %v2227 = vpack.c.bf16 %v2193, %v2192
      %v2230 = vunpack.c.l.b16 %v2194
      %v2231 = vunpack.c.l.b16 %v2195
      %v2232 = vpack.c.b16 %v2231, %v2230
      %v2234 = vsel %vm788, %v2232, 0
      %2236 = vmatprep.subr.bf16.mxu0 0
      %2237 = vmatpush1.bf16.msra.mxu0 %v2225
      %2238 = vmatprep.subr.bf16.mxu0 0
      %2239 = vmatpush1.bf16.msra.mxu0 %v2226
      %2240 = vmatprep.subr.bf16.mxu0 0
      %2241 = vmatpush1.bf16.msra.mxu0 %v2227
      %2242 = vmatprep.subr.bf16.mxu0 0
      %2243 = vmatpush1.bf16.msra.mxu0 0
      %2244 = vmatprep.subr.bf16.mxu0 0
      %2245 = vmatpush1.bf16.msra.mxu0 0
      %2246 = vmatprep.subr.bf16.mxu0 0
      %2247 = vmatpush1.bf16.msra.mxu0 0
      %2248 = vmatprep.subr.bf16.mxu0 0
      %2249 = vmatpush1.bf16.msra.mxu0 0
      %2250 = vmatprep.subr.bf16.mxu0 0
      %2251 = vmatpush1.bf16.msra.mxu0 0
      %2252 = vmatprep.subr.bf16.mxu0 0
      %2253 = vmatpush1.bf16.msra.mxu0 0
      %2254 = vmatprep.subr.bf16.mxu0 0
      %2255 = vmatpush1.bf16.msra.mxu0 0
      %2256 = vmatprep.subr.bf16.mxu0 0
      %2257 = vmatpush1.bf16.msra.mxu0 0
      %2258 = vmatprep.subr.bf16.mxu0 0
      %2259 = vmatpush1.bf16.msra.mxu0 0
      %2260 = vmatprep.subr.bf16.mxu0 0
      %2261 = vmatpush1.bf16.msra.mxu0 0
      %2262 = vmatprep.subr.bf16.mxu0 0
      %2263 = vmatpush1.bf16.msra.mxu0 0
      %2264 = vmatprep.subr.bf16.mxu0 0
      %2265 = vmatpush1.bf16.msra.mxu0 0
      %2266 = vmatprep.subr.bf16.mxu0 0
      %2267 = vmatpush1.bf16.msra.mxu0 0
      %2268 = vmatprep.mubr.bf16.mxu0 0
      %2269 = vmatmul.mubr.bf16.gmra.mrb[0].mxu0 %v2234
      %v2270 = vpop.f32.mrb[0].mxu0
      %v2271 = vadd.f32 0.0, %v2270
      %v2272 = vpop.f32.mrb[0].mxu0
      %v2273 = vpop.f32.mrb[0].mxu0
      %v2274 = vadd.f32 0.0, %v2273
      %v2275 = vpop.f32.mrb[0].mxu0
      %2276 = vdwg.mxu0
      %v2277 = vpack.c.bf16 %v2274, %v2271
      %v2280 = vunpack.c.l.b16 %v2196
      %v2281 = vunpack.c.l.b16 %v2197
      %v2282 = vpack.c.b16 %v2281, %v2280
      %v2284 = vsel %vm788, %v2282, 0
      %2286 = vmatprep.subr.bf16.mxu0 0
      %2287 = vmatpush1.bf16.msra.mxu0 %v2225
      %2288 = vmatprep.subr.bf16.mxu0 0
      %2289 = vmatpush1.bf16.msra.mxu0 %v2226
      %2290 = vmatprep.subr.bf16.mxu0 0
      %2291 = vmatpush1.bf16.msra.mxu0 %v2227
      %2292 = vmatprep.subr.bf16.mxu0 0
      %2293 = vmatpush1.bf16.msra.mxu0 0
      %2294 = vmatprep.subr.bf16.mxu0 0
      %2295 = vmatpush1.bf16.msra.mxu0 0
      %2296 = vmatprep.subr.bf16.mxu0 0
      %2297 = vmatpush1.bf16.msra.mxu0 0
      %2298 = vmatprep.subr.bf16.mxu0 0
      %2299 = vmatpush1.bf16.msra.mxu0 0
      %2300 = vmatprep.subr.bf16.mxu0 0
      %2301 = vmatpush1.bf16.msra.mxu0 0
      %2302 = vmatprep.subr.bf16.mxu0 0
      %2303 = vmatpush1.bf16.msra.mxu0 0
      %2304 = vmatprep.subr.bf16.mxu0 0
      %2305 = vmatpush1.bf16.msra.mxu0 0
      %2306 = vmatprep.subr.bf16.mxu0 0
      %2307 = vmatpush1.bf16.msra.mxu0 0
      %2308 = vmatprep.subr.bf16.mxu0 0
      %2309 = vmatpush1.bf16.msra.mxu0 0
      %2310 = vmatprep.subr.bf16.mxu0 0
      %2311 = vmatpush1.bf16.msra.mxu0 0
      %2312 = vmatprep.subr.bf16.mxu0 0
      %2313 = vmatpush1.bf16.msra.mxu0 0
      %2314 = vmatprep.subr.bf16.mxu0 0
      %2315 = vmatpush1.bf16.msra.mxu0 0
      %2316 = vmatprep.subr.bf16.mxu0 0
      %2317 = vmatpush1.bf16.msra.mxu0 0
      %2318 = vmatprep.mubr.bf16.mxu0 0
      %2319 = vmatmul.mubr.bf16.gmra.mrb[0].mxu0 %v2284
      %v2320 = vpop.f32.mrb[0].mxu0
      %v2321 = vadd.f32 0.0, %v2320
      %v2322 = vpop.f32.mrb[0].mxu0
      %v2323 = vpop.f32.mrb[0].mxu0
      %v2324 = vadd.f32 0.0, %v2323
      %v2325 = vpop.f32.mrb[0].mxu0
      %2326 = vdwg.mxu0
      %v2327 = vpack.c.bf16 %v2324, %v2321
      %v2332 = vunpack.c.l.b16 %v2208
      %v2333 = vunpack.c.l.b16 %v2209
      %v2334 = vunpack.c.l.b16 %v2210
      %v2335 = vunpack.c.l.b16 %v2211
      %v2336 = vpack.c.b16 %v2333, %v2332
      %v2337 = vpack.c.b16 %v2335, %v2334
      %v2341 = vsel %vm504, %v2327, 0
      %2343 = vmatprep.subr.bf16.mxu0 0
      %2344 = vmatpush1.bf16.msra.mxu0 %v2336
      %2345 = vmatprep.subr.bf16.mxu0 0
      %2346 = vmatpush1.bf16.msra.mxu0 %v2337
      %2347 = vmatprep.subr.bf16.mxu0 0
      %2348 = vmatpush1.bf16.msra.mxu0 0
      %2349 = vmatprep.subr.bf16.mxu0 0
      %2350 = vmatpush1.bf16.msra.mxu0 0
      %2351 = vmatprep.subr.bf16.mxu0 0
      %2352 = vmatpush1.bf16.msra.mxu0 0
      %2353 = vmatprep.subr.bf16.mxu0 0
      %2354 = vmatpush1.bf16.msra.mxu0 0
      %2355 = vmatprep.subr.bf16.mxu0 0
      %2356 = vmatpush1.bf16.msra.mxu0 0
      %2357 = vmatprep.subr.bf16.mxu0 0
      %2358 = vmatpush1.bf16.msra.mxu0 0
      %2359 = vmatprep.subr.bf16.mxu0 0
      %2360 = vmatpush1.bf16.msra.mxu0 0
      %2361 = vmatprep.subr.bf16.mxu0 0
      %2362 = vmatpush1.bf16.msra.mxu0 0
      %2363 = vmatprep.subr.bf16.mxu0 0
      %2364 = vmatpush1.bf16.msra.mxu0 0
      %2365 = vmatprep.subr.bf16.mxu0 0
      %2366 = vmatpush1.bf16.msra.mxu0 0
      %2367 = vmatprep.subr.bf16.mxu0 0
      %2368 = vmatpush1.bf16.msra.mxu0 0
      %2369 = vmatprep.subr.bf16.mxu0 0
      %2370 = vmatpush1.bf16.msra.mxu0 0
      %2371 = vmatprep.subr.bf16.mxu0 0
      %2372 = vmatpush1.bf16.msra.mxu0 0
      %2373 = vmatprep.subr.bf16.mxu0 0
      %2374 = vmatpush1.bf16.msra.mxu0 0
      %2375 = vmatprep.mubr.bf16.mxu0 0
      %2376 = vmatmul.mubr.bf16.gmra.mrb[0].mxu0 %v2341
      %v2377 = vpop.f32.mrb[0].mxu0
      %v2378 = vadd.f32 0.0, %v2377
      %v2379 = vpop.f32.mrb[0].mxu0
      %v2380 = vpop.f32.mrb[0].mxu0
      %v2381 = vadd.f32 0.0, %v2380
      %v2382 = vpop.f32.mrb[0].mxu0
      %2383 = vdwg.mxu0
      %v2388 = vunpack.c.l.b16 %v2204
      %v2389 = vunpack.c.l.b16 %v2205
      %v2390 = vunpack.c.l.b16 %v2206
      %v2391 = vunpack.c.l.b16 %v2207
      %v2392 = vpack.c.b16 %v2389, %v2388
      %v2393 = vpack.c.b16 %v2391, %v2390
      %v2397 = vsel %vm504, %v2277, 0
      %2399 = vmatprep.subr.bf16.mxu0 0
      %2400 = vmatpush1.bf16.msra.mxu0 %v2392
      %2401 = vmatprep.subr.bf16.mxu0 0
      %2402 = vmatpush1.bf16.msra.mxu0 %v2393
      %2403 = vmatprep.subr.bf16.mxu0 0
      %2404 = vmatpush1.bf16.msra.mxu0 0
      %2405 = vmatprep.subr.bf16.mxu0 0
      %2406 = vmatpush1.bf16.msra.mxu0 0
      %2407 = vmatprep.subr.bf16.mxu0 0
      %2408 = vmatpush1.bf16.msra.mxu0 0
      %2409 = vmatprep.subr.bf16.mxu0 0
      %2410 = vmatpush1.bf16.msra.mxu0 0
      %2411 = vmatprep.subr.bf16.mxu0 0
      %2412 = vmatpush1.bf16.msra.mxu0 0
      %2413 = vmatprep.subr.bf16.mxu0 0
      %2414 = vmatpush1.bf16.msra.mxu0 0
      %2415 = vmatprep.subr.bf16.mxu0 0
      %2416 = vmatpush1.bf16.msra.mxu0 0
      %2417 = vmatprep.subr.bf16.mxu0 0
      %2418 = vmatpush1.bf16.msra.mxu0 0
      %2419 = vmatprep.subr.bf16.mxu0 0
      %2420 = vmatpush1.bf16.msra.mxu0 0
      %2421 = vmatprep.subr.bf16.mxu0 0
      %2422 = vmatpush1.bf16.msra.mxu0 0
      %2423 = vmatprep.subr.bf16.mxu0 0
      %2424 = vmatpush1.bf16.msra.mxu0 0
      %2425 = vmatprep.subr.bf16.mxu0 0
      %2426 = vmatpush1.bf16.msra.mxu0 0
      %2427 = vmatprep.subr.bf16.mxu0 0
      %2428 = vmatpush1.bf16.msra.mxu0 0
      %2429 = vmatprep.subr.bf16.mxu0 0
      %2430 = vmatpush1.bf16.msra.mxu0 0
      %2431 = vmatprep.mubr.bf16.mxu0 0
      %2432 = vmatmul.mubr.bf16.gmra.mrb[0].mxu0 %v2397
      %v2433 = vpop.f32.mrb[0].mxu0
      %v2434 = vadd.f32 %v2378, %v2433
      %v2435 = vpop.f32.mrb[0].mxu0
      %v2436 = vpop.f32.mrb[0].mxu0
      %v2437 = vadd.f32 %v2381, %v2436
      %v2438 = vpop.f32.mrb[0].mxu0
      %2439 = vdwg.mxu0
      %v2442 = vunpack.c.l.b16 %v2198
      %v2443 = vunpack.c.l.b16 %v2199
      %v2444 = vpack.c.b16 %v2443, %v2442
      %v2446 = vsel %vm788, %v2444, 0
      %2448 = vmatprep.subr.bf16.mxu0 0
      %2449 = vmatpush1.bf16.msra.mxu0 %v2225
      %2450 = vmatprep.subr.bf16.mxu0 0
      %2451 = vmatpush1.bf16.msra.mxu0 %v2226
      %2452 = vmatprep.subr.bf16.mxu0 0
      %2453 = vmatpush1.bf16.msra.mxu0 %v2227
      %2454 = vmatprep.subr.bf16.mxu0 0
      %2455 = vmatpush1.bf16.msra.mxu0 0
      %2456 = vmatprep.subr.bf16.mxu0 0
      %2457 = vmatpush1.bf16.msra.mxu0 0
      %2458 = vmatprep.subr.bf16.mxu0 0
      %2459 = vmatpush1.bf16.msra.mxu0 0
      %2460 = vmatprep.subr.bf16.mxu0 0
      %2461 = vmatpush1.bf16.msra.mxu0 0
      %2462 = vmatprep.subr.bf16.mxu0 0
      %2463 = vmatpush1.bf16.msra.mxu0 0
      %2464 = vmatprep.subr.bf16.mxu0 0
      %2465 = vmatpush1.bf16.msra.mxu0 0
      %2466 = vmatprep.subr.bf16.mxu0 0
      %2467 = vmatpush1.bf16.msra.mxu0 0
      %2468 = vmatprep.subr.bf16.mxu0 0
      %2469 = vmatpush1.bf16.msra.mxu0 0
      %2470 = vmatprep.subr.bf16.mxu0 0
      %2471 = vmatpush1.bf16.msra.mxu0 0
      %2472 = vmatprep.subr.bf16.mxu0 0
      %2473 = vmatpush1.bf16.msra.mxu0 0
      %2474 = vmatprep.subr.bf16.mxu0 0
      %2475 = vmatpush1.bf16.msra.mxu0 0
      %2476 = vmatprep.subr.bf16.mxu0 0
      %2477 = vmatpush1.bf16.msra.mxu0 0
      %2478 = vmatprep.subr.bf16.mxu0 0
      %2479 = vmatpush1.bf16.msra.mxu0 0
      %2480 = vmatprep.mubr.bf16.mxu0 0
      %2481 = vmatmul.mubr.bf16.gmra.mrb[0].mxu0 %v2446
      %v2482 = vpop.f32.mrb[0].mxu0
      %v2483 = vadd.f32 0.0, %v2482
      %v2484 = vpop.f32.mrb[0].mxu0
      %v2485 = vpop.f32.mrb[0].mxu0
      %v2486 = vadd.f32 0.0, %v2485
      %v2487 = vpop.f32.mrb[0].mxu0
      %2488 = vdwg.mxu0
      %v2489 = vpack.c.bf16 %v2486, %v2483
      %v2494 = vunpack.c.l.b16 %v2212
      %v2495 = vunpack.c.l.b16 %v2213
      %v2496 = vunpack.c.l.b16 %v2214
      %v2497 = vunpack.c.l.b16 %v2215
      %v2498 = vpack.c.b16 %v2495, %v2494
      %v2499 = vpack.c.b16 %v2497, %v2496
      %v2503 = vsel %vm504, %v2489, 0
      %2505 = vmatprep.subr.bf16.mxu0 0
      %2506 = vmatpush1.bf16.msra.mxu0 %v2498
      %2507 = vmatprep.subr.bf16.mxu0 0
      %2508 = vmatpush1.bf16.msra.mxu0 %v2499
      %2509 = vmatprep.subr.bf16.mxu0 0
      %2510 = vmatpush1.bf16.msra.mxu0 0
      %2511 = vmatprep.subr.bf16.mxu0 0
      %2512 = vmatpush1.bf16.msra.mxu0 0
      %2513 = vmatprep.subr.bf16.mxu0 0
      %2514 = vmatpush1.bf16.msra.mxu0 0
      %2515 = vmatprep.subr.bf16.mxu0 0
      %2516 = vmatpush1.bf16.msra.mxu0 0
      %2517 = vmatprep.subr.bf16.mxu0 0
      %2518 = vmatpush1.bf16.msra.mxu0 0
      %2519 = vmatprep.subr.bf16.mxu0 0
      %2520 = vmatpush1.bf16.msra.mxu0 0
      %2521 = vmatprep.subr.bf16.mxu0 0
      %2522 = vmatpush1.bf16.msra.mxu0 0
      %2523 = vmatprep.subr.bf16.mxu0 0
      %2524 = vmatpush1.bf16.msra.mxu0 0
      %2525 = vmatprep.subr.bf16.mxu0 0
      %2526 = vmatpush1.bf16.msra.mxu0 0
      %2527 = vmatprep.subr.bf16.mxu0 0
      %2528 = vmatpush1.bf16.msra.mxu0 0
      %2529 = vmatprep.subr.bf16.mxu0 0
      %2530 = vmatpush1.bf16.msra.mxu0 0
      %2531 = vmatprep.subr.bf16.mxu0 0
      %2532 = vmatpush1.bf16.msra.mxu0 0
      %2533 = vmatprep.subr.bf16.mxu0 0
      %2534 = vmatpush1.bf16.msra.mxu0 0
      %2535 = vmatprep.subr.bf16.mxu0 0
      %2536 = vmatpush1.bf16.msra.mxu0 0
      %2537 = vmatprep.mubr.bf16.mxu0 0
      %2538 = vmatmul.mubr.bf16.gmra.mrb[0].mxu0 %v2503
      %v2539 = vpop.f32.mrb[0].mxu0
      %v2540 = vadd.f32 0.0, %v2539
      %v2541 = vpop.f32.mrb[0].mxu0
      %v2542 = vpop.f32.mrb[0].mxu0
      %v2543 = vadd.f32 0.0, %v2542
      %v2544 = vpop.f32.mrb[0].mxu0
      %2545 = vdwg.mxu0
      %v2546 = vadd.f32 %v2434, %v2540
      %v2547 = vadd.f32 %v2437, %v2543
      %v2550 = vunpack.c.l.b16 %v2200
      %v2551 = vunpack.c.l.b16 %v2201
      %v2552 = vpack.c.b16 %v2551, %v2550
      %v2554 = vsel %vm788, %v2552, 0
      %2556 = vmatprep.subr.bf16.mxu0 0
      %2557 = vmatpush1.bf16.msra.mxu0 %v2225
      %2558 = vmatprep.subr.bf16.mxu0 0
      %2559 = vmatpush1.bf16.msra.mxu0 %v2226
      %2560 = vmatprep.subr.bf16.mxu0 0
      %2561 = vmatpush1.bf16.msra.mxu0 %v2227
      %2562 = vmatprep.subr.bf16.mxu0 0
      %2563 = vmatpush1.bf16.msra.mxu0 0
      %2564 = vmatprep.subr.bf16.mxu0 0
      %2565 = vmatpush1.bf16.msra.mxu0 0
      %2566 = vmatprep.subr.bf16.mxu0 0
      %2567 = vmatpush1.bf16.msra.mxu0 0
      %2568 = vmatprep.subr.bf16.mxu0 0
      %2569 = vmatpush1.bf16.msra.mxu0 0
      %2570 = vmatprep.subr.bf16.mxu0 0
      %2571 = vmatpush1.bf16.msra.mxu0 0
      %2572 = vmatprep.subr.bf16.mxu0 0
      %2573 = vmatpush1.bf16.msra.mxu0 0
      %2574 = vmatprep.subr.bf16.mxu0 0
      %2575 = vmatpush1.bf16.msra.mxu0 0
      %2576 = vmatprep.subr.bf16.mxu0 0
      %2577 = vmatpush1.bf16.msra.mxu0 0
      %2578 = vmatprep.subr.bf16.mxu0 0
      %2579 = vmatpush1.bf16.msra.mxu0 0
      %2580 = vmatprep.subr.bf16.mxu0 0
      %2581 = vmatpush1.bf16.msra.mxu0 0
      %2582 = vmatprep.subr.bf16.mxu0 0
      %2583 = vmatpush1.bf16.msra.mxu0 0
      %2584 = vmatprep.subr.bf16.mxu0 0
      %2585 = vmatpush1.bf16.msra.mxu0 0
      %2586 = vmatprep.subr.bf16.mxu0 0
      %2587 = vmatpush1.bf16.msra.mxu0 0
      %2588 = vmatprep.mubr.bf16.mxu0 0
      %2589 = vmatmul.mubr.bf16.gmra.mrb[0].mxu0 %v2554
      %v2590 = vpop.f32.mrb[0].mxu0
      %v2591 = vadd.f32 0.0, %v2590
      %v2592 = vpop.f32.mrb[0].mxu0
      %v2593 = vpop.f32.mrb[0].mxu0
      %v2594 = vadd.f32 0.0, %v2593
      %v2595 = vpop.f32.mrb[0].mxu0
      %2596 = vdwg.mxu0
      %v2597 = vpack.c.bf16 %v2594, %v2591
      %v2602 = vunpack.c.l.b16 %v2216
      %v2603 = vunpack.c.l.b16 %v2217
      %v2604 = vunpack.c.l.b16 %v2218
      %v2605 = vunpack.c.l.b16 %v2219
      %v2606 = vpack.c.b16 %v2603, %v2602
      %v2607 = vpack.c.b16 %v2605, %v2604
      %v2611 = vsel %vm504, %v2597, 0
      %2613 = vmatprep.subr.bf16.mxu0 0
      %2614 = vmatpush1.bf16.msra.mxu0 %v2606
      %2615 = vmatprep.subr.bf16.mxu0 0
      %2616 = vmatpush1.bf16.msra.mxu0 %v2607
      %2617 = vmatprep.subr.bf16.mxu0 0
      %2618 = vmatpush1.bf16.msra.mxu0 0
      %2619 = vmatprep.subr.bf16.mxu0 0
      %2620 = vmatpush1.bf16.msra.mxu0 0
      %2621 = vmatprep.subr.bf16.mxu0 0
      %2622 = vmatpush1.bf16.msra.mxu0 0
      %2623 = vmatprep.subr.bf16.mxu0 0
      %2624 = vmatpush1.bf16.msra.mxu0 0
      %2625 = vmatprep.subr.bf16.mxu0 0
      %2626 = vmatpush1.bf16.msra.mxu0 0
      %2627 = vmatprep.subr.bf16.mxu0 0
      %2628 = vmatpush1.bf16.msra.mxu0 0
      %2629 = vmatprep.subr.bf16.mxu0 0
      %2630 = vmatpush1.bf16.msra.mxu0 0
      %2631 = vmatprep.subr.bf16.mxu0 0
      %2632 = vmatpush1.bf16.msra.mxu0 0
      %2633 = vmatprep.subr.bf16.mxu0 0
      %2634 = vmatpush1.bf16.msra.mxu0 0
      %2635 = vmatprep.subr.bf16.mxu0 0
      %2636 = vmatpush1.bf16.msra.mxu0 0
      %2637 = vmatprep.subr.bf16.mxu0 0
      %2638 = vmatpush1.bf16.msra.mxu0 0
      %2639 = vmatprep.subr.bf16.mxu0 0
      %2640 = vmatpush1.bf16.msra.mxu0 0
      %2641 = vmatprep.subr.bf16.mxu0 0
      %2642 = vmatpush1.bf16.msra.mxu0 0
      %2643 = vmatprep.subr.bf16.mxu0 0
      %2644 = vmatpush1.bf16.msra.mxu0 0
      %2645 = vmatprep.mubr.bf16.mxu0 0
      %2646 = vmatmul.mubr.bf16.gmra.mrb[0].mxu0 %v2611
      %v2647 = vpop.f32.mrb[0].mxu0
      %v2648 = vadd.f32 0.0, %v2647
      %v2649 = vpop.f32.mrb[0].mxu0
      %v2650 = vpop.f32.mrb[0].mxu0
      %v2651 = vadd.f32 0.0, %v2650
      %v2652 = vpop.f32.mrb[0].mxu0
      %2653 = vdwg.mxu0
      %v2654 = vadd.f32 %v2546, %v2648
      %v2655 = vadd.f32 %v2547, %v2651
      %v2658 = vunpack.c.l.b16 %v2202
      %v2659 = vunpack.c.l.b16 %v2203
      %v2660 = vpack.c.b16 %v2659, %v2658
      %v2662 = vsel %vm788, %v2660, 0
      %2664 = vmatprep.subr.bf16.mxu0 0
      %2665 = vmatpush1.bf16.msra.mxu0 %v2225
      %2666 = vmatprep.subr.bf16.mxu0 0
      %2667 = vmatpush1.bf16.msra.mxu0 %v2226
      %2668 = vmatprep.subr.bf16.mxu0 0
      %2669 = vmatpush1.bf16.msra.mxu0 %v2227
      %2670 = vmatprep.subr.bf16.mxu0 0
      %2671 = vmatpush1.bf16.msra.mxu0 0
      %2672 = vmatprep.subr.bf16.mxu0 0
      %2673 = vmatpush1.bf16.msra.mxu0 0
      %2674 = vmatprep.subr.bf16.mxu0 0
      %2675 = vmatpush1.bf16.msra.mxu0 0
      %2676 = vmatprep.subr.bf16.mxu0 0
      %2677 = vmatpush1.bf16.msra.mxu0 0
      %2678 = vmatprep.subr.bf16.mxu0 0
      %2679 = vmatpush1.bf16.msra.mxu0 0
      %2680 = vmatprep.subr.bf16.mxu0 0
      %2681 = vmatpush1.bf16.msra.mxu0 0
      %2682 = vmatprep.subr.bf16.mxu0 0
      %2683 = vmatpush1.bf16.msra.mxu0 0
      %2684 = vmatprep.subr.bf16.mxu0 0
      %2685 = vmatpush1.bf16.msra.mxu0 0
      %2686 = vmatprep.subr.bf16.mxu0 0
      %2687 = vmatpush1.bf16.msra.mxu0 0
      %2688 = vmatprep.subr.bf16.mxu0 0
      %2689 = vmatpush1.bf16.msra.mxu0 0
      %2690 = vmatprep.subr.bf16.mxu0 0
      %2691 = vmatpush1.bf16.msra.mxu0 0
      %2692 = vmatprep.subr.bf16.mxu0 0
      %2693 = vmatpush1.bf16.msra.mxu0 0
      %2694 = vmatprep.subr.bf16.mxu0 0
      %2695 = vmatpush1.bf16.msra.mxu0 0
      %2696 = vmatprep.mubr.bf16.mxu0 0
      %2697 = vmatmul.mubr.bf16.gmra.mrb[0].mxu0 %v2662
      %v2698 = vpop.f32.mrb[0].mxu0
      %v2699 = vadd.f32 0.0, %v2698
      %v2700 = vpop.f32.mrb[0].mxu0
      %v2701 = vpop.f32.mrb[0].mxu0
      %v2702 = vadd.f32 0.0, %v2701
      %v2703 = vpop.f32.mrb[0].mxu0
      %2704 = vdwg.mxu0
      %v2705 = vpack.c.bf16 %v2702, %v2699
      %v2710 = vunpack.c.l.b16 %v2220
      %v2711 = vunpack.c.l.b16 %v2221
      %v2712 = vunpack.c.l.b16 %v2222
      %v2713 = vunpack.c.l.b16 %v2223
      %v2714 = vpack.c.b16 %v2711, %v2710
      %v2715 = vpack.c.b16 %v2713, %v2712
      %v2719 = vsel %vm504, %v2705, 0
      %2721 = vmatprep.subr.bf16.mxu0 0
      %2722 = vmatpush1.bf16.msra.mxu0 %v2714
      %2723 = vmatprep.subr.bf16.mxu0 0
      %2724 = vmatpush1.bf16.msra.mxu0 %v2715
      %2725 = vmatprep.subr.bf16.mxu0 0
      %2726 = vmatpush1.bf16.msra.mxu0 0
      %2727 = vmatprep.subr.bf16.mxu0 0
      %2728 = vmatpush1.bf16.msra.mxu0 0
      %2729 = vmatprep.subr.bf16.mxu0 0
      %2730 = vmatpush1.bf16.msra.mxu0 0
      %2731 = vmatprep.subr.bf16.mxu0 0
      %2732 = vmatpush1.bf16.msra.mxu0 0
      %2733 = vmatprep.subr.bf16.mxu0 0
      %2734 = vmatpush1.bf16.msra.mxu0 0
      %2735 = vmatprep.subr.bf16.mxu0 0
      %2736 = vmatpush1.bf16.msra.mxu0 0
      %2737 = vmatprep.subr.bf16.mxu0 0
      %2738 = vmatpush1.bf16.msra.mxu0 0
      %2739 = vmatprep.subr.bf16.mxu0 0
      %2740 = vmatpush1.bf16.msra.mxu0 0
      %2741 = vmatprep.subr.bf16.mxu0 0
      %2742 = vmatpush1.bf16.msra.mxu0 0
      %2743 = vmatprep.subr.bf16.mxu0 0
      %2744 = vmatpush1.bf16.msra.mxu0 0
      %2745 = vmatprep.subr.bf16.mxu0 0
      %2746 = vmatpush1.bf16.msra.mxu0 0
      %2747 = vmatprep.subr.bf16.mxu0 0
      %2748 = vmatpush1.bf16.msra.mxu0 0
      %2749 = vmatprep.subr.bf16.mxu0 0
      %2750 = vmatpush1.bf16.msra.mxu0 0
      %2751 = vmatprep.subr.bf16.mxu0 0
      %2752 = vmatpush1.bf16.msra.mxu0 0
      %2753 = vmatprep.mubr.bf16.mxu0 0
      %2754 = vmatmul.mubr.bf16.gmra.mrb[0].mxu0 %v2719
      %v2755 = vpop.f32.mrb[0].mxu0
      %v2756 = vadd.f32 0.0, %v2755
      %v2757 = vpop.f32.mrb[0].mxu0
      %v2758 = vpop.f32.mrb[0].mxu0
      %v2759 = vadd.f32 0.0, %v2758
      %v2760 = vpop.f32.mrb[0].mxu0
      %2761 = vdwg.mxu0
      %v2762 = vadd.f32 %v2654, %v2756
      %v2763 = vadd.f32 %v2655, %v2759
      %v2764 = vlaneseq
      %v2765 = vshrl.u32 %v2764, 7
      %v2766 = vadd.s32 %v2765, 8
      %vm2767 = vcmp.lt.s32.totalorder %v2765, 2
      %vm2768 = vcmp.lt.s32.totalorder %v2766, 2
      %v2769 = vsel %vm2767, 1, 0
      %v2770 = vsel %vm2768, 1, 0
      %vm2771 = vcmp.eq.s32.totalorder %v2769, 1
      %vm2772 = vcmp.eq.s32.totalorder %v2770, 1
      %v2773 = vlaneseq
      %v2774 = vshrl.u32 %v2773, 7
      %v2775 = vsub.s32 0, %v2774
      %v2776 = vrot.slane %v2224, %v2775
      %v2777 = vlaneseq
      %v2778 = vshrl.u32 %v2777, 7
      %v2779 = vsub.s32 1, %v2778
      %v2780 = vrot.slane %v2224, %v2779
      %v2781 = vsel %vm2771, %v2776, %v2780
      %v2782 = vsel %vm2772, %v2776, %v2780
      %v2783 = vadd.f32 %v2762, %v2781
      %v2784 = vadd.f32 %v2763, %v2782
      %v2785 = vld [vmem:[%s9] sm:$0xff]
      %v2786 = vld [vmem:[%s9 + $0x8] sm:$0xff]
      %v2787 = vld [vmem:[%s10] sm:$0xff]
      %v2788 = vld [vmem:[%s10 + $0x8] sm:$0xff]
      %v2789 = vld [vmem:[%s10 + $0x10] sm:$0xff]
      %v2790 = vld [vmem:[%s10 + $0x18] sm:$0xff]
      %v2791 = vld [vmem:[%s10 + $0x20] sm:$0xff]
      %v2792 = vld [vmem:[%s10 + $0x28] sm:$0xff]
      %v2793 = vld [vmem:[%s10 + $0x30] sm:$0xff]
      %v2794 = vld [vmem:[%s10 + $0x38] sm:$0xff]
      %v2795 = vld [vmem:[%s11] sm:$0xf]
      %v2796 = vld [vmem:[%s11 + $0x4] sm:$0xf]
      %v2797 = vld [vmem:[%s11 + $0x8] sm:$0xf]
      %v2798 = vld [vmem:[%s11 + $0xc] sm:$0xf]
      %v2799 = vld [vmem:[%s11 + $0x10] sm:$0xf]
      %v2800 = vld [vmem:[%s11 + $0x14] sm:$0xf]
      %v2801 = vld [vmem:[%s11 + $0x18] sm:$0xf]
      %v2802 = vld [vmem:[%s11 + $0x1c] sm:$0xf]
      %v2803 = vld [vmem:[%s12] sm:$0xff]
      %v2804 = vld [vmem:[%s12 + $0x8] sm:$0xff]
      %v2805 = vld [vmem:[%s12 + $0x10] sm:$0xff]
      %v2806 = vld [vmem:[%s12 + $0x18] sm:$0xff]
      %v2807 = vld [vmem:[%s12 + $0x20] sm:$0xff]
      %v2808 = vld [vmem:[%s12 + $0x28] sm:$0xff]
      %v2809 = vld [vmem:[%s12 + $0x30] sm:$0xff]
      %v2810 = vld [vmem:[%s12 + $0x38] sm:$0xff]
      %v2811 = vld [vmem:[%s13] sm:$0xf]
      %v2812 = vld [vmem:[%s13 + $0x4] sm:$0xf]
      %v2813 = vld [vmem:[%s13 + $0x8] sm:$0xf]
      %v2814 = vld [vmem:[%s13 + $0xc] sm:$0xf]
      %v2815 = vld [vmem:[%s13 + $0x10] sm:$0xf]
      %v2816 = vld [vmem:[%s13 + $0x14] sm:$0xf]
      %v2817 = vld [vmem:[%s13 + $0x18] sm:$0xf]
      %v2818 = vld [vmem:[%s13 + $0x1c] sm:$0xf]
      %v2819 = vld [vmem:[%s13 + $0x20] sm:$0xf]
      %v2820 = vld [vmem:[%s13 + $0x24] sm:$0xf]
      %v2821 = vld [vmem:[%s13 + $0x28] sm:$0xf]
      %v2822 = vld [vmem:[%s13 + $0x2c] sm:$0xf]
      %v2823 = vld [vmem:[%s13 + $0x30] sm:$0xf]
      %v2824 = vld [vmem:[%s13 + $0x34] sm:$0xf]
      %v2825 = vld [vmem:[%s13 + $0x38] sm:$0xf]
      %v2826 = vld [vmem:[%s13 + $0x3c] sm:$0xf]
      %v2827 = vld [vmem:[%s13 + $0x40] sm:$0xf]
      %v2828 = vld [vmem:[%s13 + $0x44] sm:$0xf]
      %v2829 = vld [vmem:[%s13 + $0x48] sm:$0xf]
      %v2830 = vld [vmem:[%s13 + $0x4c] sm:$0xf]
      %v2831 = vld [vmem:[%s13 + $0x50] sm:$0xf]
      %v2832 = vld [vmem:[%s13 + $0x54] sm:$0xf]
      %v2833 = vld [vmem:[%s13 + $0x58] sm:$0xf]
      %v2834 = vld [vmem:[%s13 + $0x5c] sm:$0xf]
      %v2835 = vld [vmem:[%s13 + $0x60] sm:$0xf]
      %v2836 = vld [vmem:[%s13 + $0x64] sm:$0xf]
      %v2837 = vld [vmem:[%s13 + $0x68] sm:$0xf]
      %v2838 = vld [vmem:[%s13 + $0x6c] sm:$0xf]
      %v2839 = vld [vmem:[%s13 + $0x70] sm:$0xf]
      %v2840 = vld [vmem:[%s13 + $0x74] sm:$0xf]
      %v2841 = vld [vmem:[%s13 + $0x78] sm:$0xf]
      %v2842 = vld [vmem:[%s13 + $0x7c] sm:$0xf]
      %vm2843 = vcmask 523264
      %v2844 = vsel %vm2843, %v2783, 0.0
      %2845 = vadd.xlane.f32.xlu0 %v2844
      %v2846 = vpop.xlane.xlu0 %2845
      %v2847 = vsel %vm2843, %v2784, 0.0
      %2848 = vadd.xlane.f32.xlu0 %v2847
      %v2849 = vpop.xlane.xlu0 %2848
      %v2850 = vrcp.pop 64.0
      %v2851 = vmul.f32 %v2846, %v2850
      %v2852 = vmul.f32 %v2849, %v2850
      %v2853 = vsub.f32 %v2783, %v2851
      %v2854 = vsub.f32 %v2784, %v2852
      %v2855 = vmul.f32 %v2853, %v2853
      %v2856 = vmul.f32 %v2854, %v2854
      %v2857 = vsel %vm2843, %v2855, 0.0
      %2858 = vadd.xlane.f32.xlu0 %v2857
      %v2859 = vpop.xlane.xlu0 %2858
      %v2860 = vsel %vm2843, %v2856, 0.0
      %2861 = vadd.xlane.f32.xlu0 %v2860
      %v2862 = vpop.xlane.xlu0 %2861
      %v2863 = vmul.f32 %v2859, %v2850
      %v2864 = vmul.f32 %v2862, %v2850
      %v2865 = vadd.f32 %v2863, 1e-05
      %v2866 = vadd.f32 %v2864, 1e-05
      %v2867 = vrsqrt.pop %v2865
      %v2868 = vrsqrt.pop %v2866
      %v2869 = vmul.f32 %v2853, %v2867
      %v2870 = vmul.f32 %v2854, %v2868
      %v2871 = vlaneseq
      %v2872 = vshrl.u32 %v2871, 7
      %v2873 = vsub.s32 0, %v2872
      %v2874 = vrot.slane %v2785, %v2873
      %v2875 = vmul.f32 %v2869, %v2874
      %v2876 = vmul.f32 %v2870, %v2874
      %v2877 = vlaneseq
      %v2878 = vshrl.u32 %v2877, 7
      %v2879 = vsub.s32 1, %v2878
      %v2880 = vrot.slane %v2785, %v2879
      %v2881 = vadd.f32 %v2875, %v2880
      %v2882 = vadd.f32 %v2876, %v2880
      %v2883 = vpack.c.bf16 %v2882, %v2881
      %v2884 = vlaneseq
      %v2885 = vshrl.u32 %v2884, 7
      %v2886 = vsub.s32 6, %v2885
      %v2887 = vrot.slane %v2785, %v2886
      %v2888 = vlaneseq
      %v2889 = vshrl.u32 %v2888, 7
      %v2890 = vsub.s32 6, %v2889
      %v2891 = vrot.slane %v2786, %v2890
      %v2900 = vunpack.c.l.b16 %v2787
      %v2901 = vunpack.c.h.b16 %v2787
      %v2902 = vunpack.c.l.b16 %v2788
      %v2903 = vunpack.c.h.b16 %v2788
      %v2904 = vunpack.c.l.b16 %v2789
      %v2905 = vunpack.c.h.b16 %v2789
      %v2906 = vunpack.c.l.b16 %v2790
      %v2907 = vunpack.c.h.b16 %v2790
      %v2908 = vunpack.c.l.b16 %v2791
      %v2909 = vunpack.c.h.b16 %v2791
      %v2910 = vunpack.c.l.b16 %v2792
      %v2911 = vunpack.c.h.b16 %v2792
      %v2912 = vunpack.c.l.b16 %v2793
      %v2913 = vunpack.c.h.b16 %v2793
      %v2914 = vunpack.c.l.b16 %v2794
      %v2915 = vunpack.c.h.b16 %v2794
      %v2916 = vpack.c.b16 %v2902, %v2900
      %v2917 = vpack.c.b16 %v2903, %v2901
      %v2918 = vpack.c.b16 %v2906, %v2904
      %v2919 = vpack.c.b16 %v2907, %v2905
      %v2920 = vpack.c.b16 %v2910, %v2908
      %v2921 = vpack.c.b16 %v2911, %v2909
      %v2922 = vpack.c.b16 %v2914, %v2912
      %v2923 = vpack.c.b16 %v2915, %v2913
      %v2933 = vsel %vm2843, %v2883, 0
      %2935 = vmatprep.subr.bf16.mxu0 %v2917
      %2936 = vmatpush1.bf16.msra.mxu0 %v2916
      %2937 = vmatprep.subr.bf16.mxu0 %v2919
      %2938 = vmatpush1.bf16.msra.mxu0 %v2918
      %2939 = vmatprep.subr.bf16.mxu0 %v2921
      %2940 = vmatpush1.bf16.msra.mxu0 %v2920
      %2941 = vmatprep.subr.bf16.mxu0 %v2923
      %2942 = vmatpush1.bf16.msra.mxu0 %v2922
      %2943 = vmatprep.subr.bf16.mxu0 0
      %2944 = vmatpush1.bf16.msra.mxu0 0
      %2945 = vmatprep.subr.bf16.mxu0 0
      %2946 = vmatpush1.bf16.msra.mxu0 0
      %2947 = vmatprep.subr.bf16.mxu0 0
      %2948 = vmatpush1.bf16.msra.mxu0 0
      %2949 = vmatprep.subr.bf16.mxu0 0
      %2950 = vmatpush1.bf16.msra.mxu0 0
      %2951 = vmatprep.subr.bf16.mxu0 0
      %2952 = vmatpush1.bf16.msra.mxu0 0
      %2953 = vmatprep.subr.bf16.mxu0 0
      %2954 = vmatpush1.bf16.msra.mxu0 0
      %2955 = vmatprep.subr.bf16.mxu0 0
      %2956 = vmatpush1.bf16.msra.mxu0 0
      %2957 = vmatprep.subr.bf16.mxu0 0
      %2958 = vmatpush1.bf16.msra.mxu0 0
      %2959 = vmatprep.subr.bf16.mxu0 0
      %2960 = vmatpush1.bf16.msra.mxu0 0
      %2961 = vmatprep.subr.bf16.mxu0 0
      %2962 = vmatpush1.bf16.msra.mxu0 0
      %2963 = vmatprep.subr.bf16.mxu0 0
      %2964 = vmatpush1.bf16.msra.mxu0 0
      %2965 = vmatprep.subr.bf16.mxu0 0
      %2966 = vmatpush1.bf16.msra.mxu0 0
      %2967 = vmatprep.mubr.bf16.mxu0 0
      %2968 = vmatmul.mubr.bf16.gmra.mrb[0].mxu0 %v2933
      %v2969 = vpop.f32.mrb[0].mxu0
      %v2970 = vadd.f32 %v2887, %v2969
      %v2971 = vpop.f32.mrb[0].mxu0
      %v2972 = vadd.f32 %v2891, %v2971
      %v2973 = vpop.f32.mrb[0].mxu0
      %v2974 = vadd.f32 %v2887, %v2973
      %v2975 = vpop.f32.mrb[0].mxu0
      %v2976 = vadd.f32 %v2891, %v2975
      %2977 = vdwg.mxu0
      %vm2978 = vcmp.lt.s32.totalorder %v690, 10
      %v2979 = vpack.c.bf16 %v2974, %v2970
      %v2980 = vpack.c.bf16 %v2976, %v2972
      %2982 = vrot.lane.b32.xlu0 %v2979, 64
      %v2983 = vpop.permute.xlu0 %2982
      %v2985 = vsel %vm1722, %v2979, 0
      %v2988 = vsel %vm1722, %v2983, 0
      %2990 = vmatprep.subr.bf16.mxu0 0
      %2991 = vmatpush1.bf16.xpose.msra.mxu0 %v2988
      %2992 = vmatprep.subr.bf16.mxu0 0
      %2993 = vmatpush1.bf16.xpose.msra.mxu0 0
      %2994 = vmatprep.subr.bf16.mxu0 0
      %2995 = vmatpush1.bf16.xpose.msra.mxu0 0
      %2996 = vmatprep.subr.bf16.mxu0 0
      %2997 = vmatpush1.bf16.xpose.msra.mxu0 0
      %2998 = vmatprep.subr.bf16.mxu0 0
      %2999 = vmatpush1.bf16.xpose.msra.mxu0 0
      %3000 = vmatprep.subr.bf16.mxu0 0
      %3001 = vmatpush1.bf16.xpose.msra.mxu0 0
      %3002 = vmatprep.subr.bf16.mxu0 0
      %3003 = vmatpush1.bf16.xpose.msra.mxu0 0
      %3004 = vmatprep.subr.bf16.mxu0 0
      %3005 = vmatpush1.bf16.xpose.msra.mxu0 0
      %3006 = vmatprep.subr.bf16.mxu0 0
      %3007 = vmatpush1.bf16.xpose.msra.mxu0 0
      %3008 = vmatprep.subr.bf16.mxu0 0
      %3009 = vmatpush1.bf16.xpose.msra.mxu0 0
      %3010 = vmatprep.subr.bf16.mxu0 0
      %3011 = vmatpush1.bf16.xpose.msra.mxu0 0
      %3012 = vmatprep.subr.bf16.mxu0 0
      %3013 = vmatpush1.bf16.xpose.msra.mxu0 0
      %3014 = vmatprep.subr.bf16.mxu0 0
      %3015 = vmatpush1.bf16.xpose.msra.mxu0 0
      %3016 = vmatprep.subr.bf16.mxu0 0
      %3017 = vmatpush1.bf16.xpose.msra.mxu0 0
      %3018 = vmatprep.subr.bf16.mxu0 0
      %3019 = vmatpush1.bf16.xpose.msra.mxu0 0
      %3020 = vmatprep.subr.bf16.mxu0 0
      %3021 = vmatpush1.bf16.xpose.msra.mxu0 0
      %3022 = vmatprep.mubr.bf16.mxu0 0
      %3023 = vmatmul.mubr.bf16.gmra.mrb[0].mxu0 %v2985
      %v3024 = vpop.f32.mrb[0].mxu0
      %v3025 = vadd.f32 0.0, %v3024
      %v3026 = vpop.f32.mrb[0].mxu0
      %v3027 = vpop.f32.mrb[0].mxu0
      %v3028 = vadd.f32 0.0, %v3027
      %v3029 = vpop.f32.mrb[0].mxu0
      %3030 = vdwg.mxu0
      %v3031 = vsel %vm2978, 1, 0
      %vm3032 = vcmp.eq.s32.totalorder %v3031, 1
      %v3033 = vsel %vm3032, %v3025, -1e+30
      %v3034 = vsel %vm3032, %v3028, -1e+30
      %v3035 = vsel %vm1722, %v3033, -inf
      %3036 = vmax.xlane.f32.xlu0 %v3035
      %v3037 = vpop.xlane.xlu0 %3036
      %v3038 = vsel %vm1722, %v3034, -inf
      %3039 = vmax.xlane.f32.xlu0 %v3038
      %v3040 = vpop.xlane.xlu0 %3039
      %v3041 = vsub.f32 %v3033, %v3037
      %v3042 = vsub.f32 %v3034, %v3040
      %v3043 = vmul.f32 %v3041, 1.442695
      %v3044 = vpow.pop %v3043
      %v3045 = vmul.f32 %v3042, 1.442695
      %v3046 = vpow.pop %v3045
      %v3047 = vsel %vm1722, %v3044, 0.0
      %3048 = vadd.xlane.f32.xlu0 %v3047
      %v3049 = vpop.xlane.xlu0 %3048
      %v3050 = vsel %vm1722, %v3046, 0.0
      %3051 = vadd.xlane.f32.xlu0 %v3050
      %v3052 = vpop.xlane.xlu0 %3051
      %v3053 = vrcp.pop %v3049
      %v3054 = vrcp.pop %v3052
      %v3055 = vmul.f32 %v3044, %v3053
      %v3056 = vmul.f32 %v3046, %v3054
      %v3057 = vpack.c.bf16 %v3056, %v3055
      %v3059 = vsel %vm1722, %v3057, 0
      %3061 = vmatprep.subr.bf16.mxu0 0
      %3062 = vmatpush1.bf16.msra.mxu0 %v2980
      %3063 = vmatprep.subr.bf16.mxu0 0
      %3064 = vmatpush1.bf16.msra.mxu0 0
      %3065 = vmatprep.subr.bf16.mxu0 0
      %3066 = vmatpush1.bf16.msra.mxu0 0
      %3067 = vmatprep.subr.bf16.mxu0 0
      %3068 = vmatpush1.bf16.msra.mxu0 0
      %3069 = vmatprep.subr.bf16.mxu0 0
      %3070 = vmatpush1.bf16.msra.mxu0 0
      %3071 = vmatprep.subr.bf16.mxu0 0
      %3072 = vmatpush1.bf16.msra.mxu0 0
      %3073 = vmatprep.subr.bf16.mxu0 0
      %3074 = vmatpush1.bf16.msra.mxu0 0
      %3075 = vmatprep.subr.bf16.mxu0 0
      %3076 = vmatpush1.bf16.msra.mxu0 0
      %3077 = vmatprep.subr.bf16.mxu0 0
      %3078 = vmatpush1.bf16.msra.mxu0 0
      %3079 = vmatprep.subr.bf16.mxu0 0
      %3080 = vmatpush1.bf16.msra.mxu0 0
      %3081 = vmatprep.subr.bf16.mxu0 0
      %3082 = vmatpush1.bf16.msra.mxu0 0
      %3083 = vmatprep.subr.bf16.mxu0 0
      %3084 = vmatpush1.bf16.msra.mxu0 0
      %3085 = vmatprep.subr.bf16.mxu0 0
      %3086 = vmatpush1.bf16.msra.mxu0 0
      %3087 = vmatprep.subr.bf16.mxu0 0
      %3088 = vmatpush1.bf16.msra.mxu0 0
      %3089 = vmatprep.subr.bf16.mxu0 0
      %3090 = vmatpush1.bf16.msra.mxu0 0
      %3091 = vmatprep.subr.bf16.mxu0 0
      %3092 = vmatpush1.bf16.msra.mxu0 0
      %3093 = vmatprep.mubr.bf16.mxu0 0
      %3094 = vmatmul.mubr.bf16.gmra.mrb[0].mxu0 %v3059
      %v3095 = vpop.f32.mrb[0].mxu0
      %v3096 = vadd.f32 0.0, %v3095
      %v3097 = vpop.f32.mrb[0].mxu0
      %v3098 = vpop.f32.mrb[0].mxu0
      %v3099 = vadd.f32 0.0, %v3098
      %v3100 = vpop.f32.mrb[0].mxu0
      %3101 = vdwg.mxu0
      %3102 = vrot.lane.b32.xlu0 %v2979, 112
      %v3103 = vpop.permute.xlu0 %3102
      %3104 = vrot.lane.b32.xlu0 %v2979, 48
      %v3105 = vpop.permute.xlu0 %3104
      %v3107 = vsel %vm1722, %v3103, 0
      %v3110 = vsel %vm1722, %v3105, 0
      %3112 = vmatprep.subr.bf16.mxu0 0
      %3113 = vmatpush1.bf16.xpose.msra.mxu0 %v3110
      %3114 = vmatprep.subr.bf16.mxu0 0
      %3115 = vmatpush1.bf16.xpose.msra.mxu0 0
      %3116 = vmatprep.subr.bf16.mxu0 0
      %3117 = vmatpush1.bf16.xpose.msra.mxu0 0
      %3118 = vmatprep.subr.bf16.mxu0 0
      %3119 = vmatpush1.bf16.xpose.msra.mxu0 0
      %3120 = vmatprep.subr.bf16.mxu0 0
      %3121 = vmatpush1.bf16.xpose.msra.mxu0 0
      %3122 = vmatprep.subr.bf16.mxu0 0
      %3123 = vmatpush1.bf16.xpose.msra.mxu0 0
      %3124 = vmatprep.subr.bf16.mxu0 0
      %3125 = vmatpush1.bf16.xpose.msra.mxu0 0
      %3126 = vmatprep.subr.bf16.mxu0 0
      %3127 = vmatpush1.bf16.xpose.msra.mxu0 0
      %3128 = vmatprep.subr.bf16.mxu0 0
      %3129 = vmatpush1.bf16.xpose.msra.mxu0 0
      %3130 = vmatprep.subr.bf16.mxu0 0
      %3131 = vmatpush1.bf16.xpose.msra.mxu0 0
      %3132 = vmatprep.subr.bf16.mxu0 0
      %3133 = vmatpush1.bf16.xpose.msra.mxu0 0
      %3134 = vmatprep.subr.bf16.mxu0 0
      %3135 = vmatpush1.bf16.xpose.msra.mxu0 0
      %3136 = vmatprep.subr.bf16.mxu0 0
      %3137 = vmatpush1.bf16.xpose.msra.mxu0 0
      %3138 = vmatprep.subr.bf16.mxu0 0
      %3139 = vmatpush1.bf16.xpose.msra.mxu0 0
      %3140 = vmatprep.subr.bf16.mxu0 0
      %3141 = vmatpush1.bf16.xpose.msra.mxu0 0
      %3142 = vmatprep.subr.bf16.mxu0 0
      %3143 = vmatpush1.bf16.xpose.msra.mxu0 0
      %3144 = vmatprep.mubr.bf16.mxu0 0
      %3145 = vmatmul.mubr.bf16.gmra.mrb[0].mxu0 %v3107
      %v3146 = vpop.f32.mrb[0].mxu0
      %v3147 = vadd.f32 0.0, %v3146
      %v3148 = vpop.f32.mrb[0].mxu0
      %v3149 = vpop.f32.mrb[0].mxu0
      %v3150 = vadd.f32 0.0, %v3149
      %v3151 = vpop.f32.mrb[0].mxu0
      %3152 = vdwg.mxu0
      %v3153 = vsel %vm3032, %v3147, -1e+30
      %v3154 = vsel %vm3032, %v3150, -1e+30
      %v3155 = vsel %vm1722, %v3153, -inf
      %3156 = vmax.xlane.f32.xlu0 %v3155
      %v3157 = vpop.xlane.xlu0 %3156
      %v3158 = vsel %vm1722, %v3154, -inf
      %3159 = vmax.xlane.f32.xlu0 %v3158
      %v3160 = vpop.xlane.xlu0 %3159
      %v3161 = vsub.f32 %v3153, %v3157
      %v3162 = vsub.f32 %v3154, %v3160
      %v3163 = vmul.f32 %v3161, 1.442695
      %v3164 = vpow.pop %v3163
      %v3165 = vmul.f32 %v3162, 1.442695
      %v3166 = vpow.pop %v3165
      %v3167 = vsel %vm1722, %v3164, 0.0
      %3168 = vadd.xlane.f32.xlu0 %v3167
      %v3169 = vpop.xlane.xlu0 %3168
      %v3170 = vsel %vm1722, %v3166, 0.0
      %3171 = vadd.xlane.f32.xlu0 %v3170
      %v3172 = vpop.xlane.xlu0 %3171
      %v3173 = vrcp.pop %v3169
      %v3174 = vrcp.pop %v3172
      %v3175 = vmul.f32 %v3164, %v3173
      %v3176 = vmul.f32 %v3166, %v3174
      %v3177 = vpack.c.bf16 %v3176, %v3175
      %3179 = vrot.lane.b32.xlu0 %v2980, 112
      %v3180 = vpop.permute.xlu0 %3179
      %v3183 = vsel %vm1722, %v3177, 0
      %3185 = vmatprep.subr.bf16.mxu0 0
      %3186 = vmatpush1.bf16.msra.mxu0 %v3180
      %3187 = vmatprep.subr.bf16.mxu0 0
      %3188 = vmatpush1.bf16.msra.mxu0 0
      %3189 = vmatprep.subr.bf16.mxu0 0
      %3190 = vmatpush1.bf16.msra.mxu0 0
      %3191 = vmatprep.subr.bf16.mxu0 0
      %3192 = vmatpush1.bf16.msra.mxu0 0
      %3193 = vmatprep.subr.bf16.mxu0 0
      %3194 = vmatpush1.bf16.msra.mxu0 0
      %3195 = vmatprep.subr.bf16.mxu0 0
      %3196 = vmatpush1.bf16.msra.mxu0 0
      %3197 = vmatprep.subr.bf16.mxu0 0
      %3198 = vmatpush1.bf16.msra.mxu0 0
      %3199 = vmatprep.subr.bf16.mxu0 0
      %3200 = vmatpush1.bf16.msra.mxu0 0
      %3201 = vmatprep.subr.bf16.mxu0 0
      %3202 = vmatpush1.bf16.msra.mxu0 0
      %3203 = vmatprep.subr.bf16.mxu0 0
      %3204 = vmatpush1.bf16.msra.mxu0 0
      %3205 = vmatprep.subr.bf16.mxu0 0
      %3206 = vmatpush1.bf16.msra.mxu0 0
      %3207 = vmatprep.subr.bf16.mxu0 0
      %3208 = vmatpush1.bf16.msra.mxu0 0
      %3209 = vmatprep.subr.bf16.mxu0 0
      %3210 = vmatpush1.bf16.msra.mxu0 0
      %3211 = vmatprep.subr.bf16.mxu0 0
      %3212 = vmatpush1.bf16.msra.mxu0 0
      %3213 = vmatprep.subr.bf16.mxu0 0
      %3214 = vmatpush1.bf16.msra.mxu0 0
      %3215 = vmatprep.subr.bf16.mxu0 0
      %3216 = vmatpush1.bf16.msra.mxu0 0
      %3217 = vmatprep.mubr.bf16.mxu0 0
      %3218 = vmatmul.mubr.bf16.gmra.mrb[0].mxu0 %v3183
      %v3219 = vpop.f32.mrb[0].mxu0
      %v3220 = vadd.f32 0.0, %v3219
      %v3221 = vpop.f32.mrb[0].mxu0
      %v3222 = vpop.f32.mrb[0].mxu0
      %v3223 = vadd.f32 0.0, %v3222
      %v3224 = vpop.f32.mrb[0].mxu0
      %3225 = vdwg.mxu0
      %3226 = vrot.lane.b32.xlu0 %v2979, 96
      %v3227 = vpop.permute.xlu0 %3226
      %3228 = vrot.lane.b32.xlu0 %v2979, 32
      %v3229 = vpop.permute.xlu0 %3228
      %v3231 = vsel %vm1722, %v3227, 0
      %v3234 = vsel %vm1722, %v3229, 0
      %3236 = vmatprep.subr.bf16.mxu0 0
      %3237 = vmatpush1.bf16.xpose.msra.mxu0 %v3234
      %3238 = vmatprep.subr.bf16.mxu0 0
      %3239 = vmatpush1.bf16.xpose.msra.mxu0 0
      %3240 = vmatprep.subr.bf16.mxu0 0
      %3241 = vmatpush1.bf16.xpose.msra.mxu0 0
      %3242 = vmatprep.subr.bf16.mxu0 0
      %3243 = vmatpush1.bf16.xpose.msra.mxu0 0
      %3244 = vmatprep.subr.bf16.mxu0 0
      %3245 = vmatpush1.bf16.xpose.msra.mxu0 0
      %3246 = vmatprep.subr.bf16.mxu0 0
      %3247 = vmatpush1.bf16.xpose.msra.mxu0 0
      %3248 = vmatprep.subr.bf16.mxu0 0
      %3249 = vmatpush1.bf16.xpose.msra.mxu0 0
      %3250 = vmatprep.subr.bf16.mxu0 0
      %3251 = vmatpush1.bf16.xpose.msra.mxu0 0
      %3252 = vmatprep.subr.bf16.mxu0 0
      %3253 = vmatpush1.bf16.xpose.msra.mxu0 0
      %3254 = vmatprep.subr.bf16.mxu0 0
      %3255 = vmatpush1.bf16.xpose.msra.mxu0 0
      %3256 = vmatprep.subr.bf16.mxu0 0
      %3257 = vmatpush1.bf16.xpose.msra.mxu0 0
      %3258 = vmatprep.subr.bf16.mxu0 0
      %3259 = vmatpush1.bf16.xpose.msra.mxu0 0
      %3260 = vmatprep.subr.bf16.mxu0 0
      %3261 = vmatpush1.bf16.xpose.msra.mxu0 0
      %3262 = vmatprep.subr.bf16.mxu0 0
      %3263 = vmatpush1.bf16.xpose.msra.mxu0 0
      %3264 = vmatprep.subr.bf16.mxu0 0
      %3265 = vmatpush1.bf16.xpose.msra.mxu0 0
      %3266 = vmatprep.subr.bf16.mxu0 0
      %3267 = vmatpush1.bf16.xpose.msra.mxu0 0
      %3268 = vmatprep.mubr.bf16.mxu0 0
      %3269 = vmatmul.mubr.bf16.gmra.mrb[0].mxu0 %v3231
      %v3270 = vpop.f32.mrb[0].mxu0
      %v3271 = vadd.f32 0.0, %v3270
      %v3272 = vpop.f32.mrb[0].mxu0
      %v3273 = vpop.f32.mrb[0].mxu0
      %v3274 = vadd.f32 0.0, %v3273
      %v3275 = vpop.f32.mrb[0].mxu0
      %3276 = vdwg.mxu0
      %v3277 = vsel %vm3032, %v3271, -1e+30
      %v3278 = vsel %vm3032, %v3274, -1e+30
      %v3279 = vsel %vm1722, %v3277, -inf
      %3280 = vmax.xlane.f32.xlu0 %v3279
      %v3281 = vpop.xlane.xlu0 %3280
      %v3282 = vsel %vm1722, %v3278, -inf
      %3283 = vmax.xlane.f32.xlu0 %v3282
      %v3284 = vpop.xlane.xlu0 %3283
      %v3285 = vsub.f32 %v3277, %v3281
      %v3286 = vsub.f32 %v3278, %v3284
      %v3287 = vmul.f32 %v3285, 1.442695
      %v3288 = vpow.pop %v3287
      %v3289 = vmul.f32 %v3286, 1.442695
      %v3290 = vpow.pop %v3289
      %v3291 = vsel %vm1722, %v3288, 0.0
      %3292 = vadd.xlane.f32.xlu0 %v3291
      %v3293 = vpop.xlane.xlu0 %3292
      %v3294 = vsel %vm1722, %v3290, 0.0
      %3295 = vadd.xlane.f32.xlu0 %v3294
      %v3296 = vpop.xlane.xlu0 %3295
      %v3297 = vrcp.pop %v3293
      %v3298 = vrcp.pop %v3296
      %v3299 = vmul.f32 %v3288, %v3297
      %v3300 = vmul.f32 %v3290, %v3298
      %v3301 = vpack.c.bf16 %v3300, %v3299
      %3302 = vrot.lane.b32.xlu0 %v2980, 96
      %v3303 = vpop.permute.xlu0 %3302
      %v3306 = vsel %vm1722, %v3301, 0
      %3308 = vmatprep.subr.bf16.mxu0 0
      %3309 = vmatpush1.bf16.msra.mxu0 %v3303
      %3310 = vmatprep.subr.bf16.mxu0 0
      %3311 = vmatpush1.bf16.msra.mxu0 0
      %3312 = vmatprep.subr.bf16.mxu0 0
      %3313 = vmatpush1.bf16.msra.mxu0 0
      %3314 = vmatprep.subr.bf16.mxu0 0
      %3315 = vmatpush1.bf16.msra.mxu0 0
      %3316 = vmatprep.subr.bf16.mxu0 0
      %3317 = vmatpush1.bf16.msra.mxu0 0
      %3318 = vmatprep.subr.bf16.mxu0 0
      %3319 = vmatpush1.bf16.msra.mxu0 0
      %3320 = vmatprep.subr.bf16.mxu0 0
      %3321 = vmatpush1.bf16.msra.mxu0 0
      %3322 = vmatprep.subr.bf16.mxu0 0
      %3323 = vmatpush1.bf16.msra.mxu0 0
      %3324 = vmatprep.subr.bf16.mxu0 0
      %3325 = vmatpush1.bf16.msra.mxu0 0
      %3326 = vmatprep.subr.bf16.mxu0 0
      %3327 = vmatpush1.bf16.msra.mxu0 0
      %3328 = vmatprep.subr.bf16.mxu0 0
      %3329 = vmatpush1.bf16.msra.mxu0 0
      %3330 = vmatprep.subr.bf16.mxu0 0
      %3331 = vmatpush1.bf16.msra.mxu0 0
      %3332 = vmatprep.subr.bf16.mxu0 0
      %3333 = vmatpush1.bf16.msra.mxu0 0
      %3334 = vmatprep.subr.bf16.mxu0 0
      %3335 = vmatpush1.bf16.msra.mxu0 0
      %3336 = vmatprep.subr.bf16.mxu0 0
      %3337 = vmatpush1.bf16.msra.mxu0 0
      %3338 = vmatprep.subr.bf16.mxu0 0
      %3339 = vmatpush1.bf16.msra.mxu0 0
      %3340 = vmatprep.mubr.bf16.mxu0 0
      %3341 = vmatmul.mubr.bf16.gmra.mrb[0].mxu0 %v3306
      %v3342 = vpop.f32.mrb[0].mxu0
      %v3343 = vadd.f32 0.0, %v3342
      %v3344 = vpop.f32.mrb[0].mxu0
      %v3345 = vpop.f32.mrb[0].mxu0
      %v3346 = vadd.f32 0.0, %v3345
      %v3347 = vpop.f32.mrb[0].mxu0
      %3348 = vdwg.mxu0
      %3349 = vrot.lane.b32.xlu0 %v2979, 80
      %v3350 = vpop.permute.xlu0 %3349
      %3351 = vrot.lane.b32.xlu0 %v2979, 16
      %v3352 = vpop.permute.xlu0 %3351
      %v3354 = vsel %vm1722, %v3350, 0
      %v3357 = vsel %vm1722, %v3352, 0
      %3359 = vmatprep.subr.bf16.mxu0 0
      %3360 = vmatpush1.bf16.xpose.msra.mxu0 %v3357
      %3361 = vmatprep.subr.bf16.mxu0 0
      %3362 = vmatpush1.bf16.xpose.msra.mxu0 0
      %3363 = vmatprep.subr.bf16.mxu0 0
      %3364 = vmatpush1.bf16.xpose.msra.mxu0 0
      %3365 = vmatprep.subr.bf16.mxu0 0
      %3366 = vmatpush1.bf16.xpose.msra.mxu0 0
      %3367 = vmatprep.subr.bf16.mxu0 0
      %3368 = vmatpush1.bf16.xpose.msra.mxu0 0
      %3369 = vmatprep.subr.bf16.mxu0 0
      %3370 = vmatpush1.bf16.xpose.msra.mxu0 0
      %3371 = vmatprep.subr.bf16.mxu0 0
      %3372 = vmatpush1.bf16.xpose.msra.mxu0 0
      %3373 = vmatprep.subr.bf16.mxu0 0
      %3374 = vmatpush1.bf16.xpose.msra.mxu0 0
      %3375 = vmatprep.subr.bf16.mxu0 0
      %3376 = vmatpush1.bf16.xpose.msra.mxu0 0
      %3377 = vmatprep.subr.bf16.mxu0 0
      %3378 = vmatpush1.bf16.xpose.msra.mxu0 0
      %3379 = vmatprep.subr.bf16.mxu0 0
      %3380 = vmatpush1.bf16.xpose.msra.mxu0 0
      %3381 = vmatprep.subr.bf16.mxu0 0
      %3382 = vmatpush1.bf16.xpose.msra.mxu0 0
      %3383 = vmatprep.subr.bf16.mxu0 0
      %3384 = vmatpush1.bf16.xpose.msra.mxu0 0
      %3385 = vmatprep.subr.bf16.mxu0 0
      %3386 = vmatpush1.bf16.xpose.msra.mxu0 0
      %3387 = vmatprep.subr.bf16.mxu0 0
      %3388 = vmatpush1.bf16.xpose.msra.mxu0 0
      %3389 = vmatprep.subr.bf16.mxu0 0
      %3390 = vmatpush1.bf16.xpose.msra.mxu0 0
      %3391 = vmatprep.mubr.bf16.mxu0 0
      %3392 = vmatmul.mubr.bf16.gmra.mrb[0].mxu0 %v3354
      %v3393 = vpop.f32.mrb[0].mxu0
      %v3394 = vadd.f32 0.0, %v3393
      %v3395 = vpop.f32.mrb[0].mxu0
      %v3396 = vpop.f32.mrb[0].mxu0
      %v3397 = vadd.f32 0.0, %v3396
      %v3398 = vpop.f32.mrb[0].mxu0
      %3399 = vdwg.mxu0
      %v3400 = vsel %vm3032, %v3394, -1e+30
      %v3401 = vsel %vm3032, %v3397, -1e+30
      %v3402 = vsel %vm1722, %v3400, -inf
      %3403 = vmax.xlane.f32.xlu0 %v3402
      %v3404 = vpop.xlane.xlu0 %3403
      %v3405 = vsel %vm1722, %v3401, -inf
      %3406 = vmax.xlane.f32.xlu0 %v3405
      %v3407 = vpop.xlane.xlu0 %3406
      %v3408 = vsub.f32 %v3400, %v3404
      %v3409 = vsub.f32 %v3401, %v3407
      %v3410 = vmul.f32 %v3408, 1.442695
      %v3411 = vpow.pop %v3410
      %v3412 = vmul.f32 %v3409, 1.442695
      %v3413 = vpow.pop %v3412
      %v3414 = vsel %vm1722, %v3411, 0.0
      %3415 = vadd.xlane.f32.xlu0 %v3414
      %v3416 = vpop.xlane.xlu0 %3415
      %v3417 = vsel %vm1722, %v3413, 0.0
      %3418 = vadd.xlane.f32.xlu0 %v3417
      %v3419 = vpop.xlane.xlu0 %3418
      %v3420 = vrcp.pop %v3416
      %v3421 = vrcp.pop %v3419
      %v3422 = vmul.f32 %v3411, %v3420
      %v3423 = vmul.f32 %v3413, %v3421
      %v3424 = vpack.c.bf16 %v3423, %v3422
      %3425 = vrot.lane.b32.xlu0 %v2980, 80
      %v3426 = vpop.permute.xlu0 %3425
      %v3429 = vsel %vm1722, %v3424, 0
      %3431 = vmatprep.subr.bf16.mxu0 0
      %3432 = vmatpush1.bf16.msra.mxu0 %v3426
      %3433 = vmatprep.subr.bf16.mxu0 0
      %3434 = vmatpush1.bf16.msra.mxu0 0
      %3435 = vmatprep.subr.bf16.mxu0 0
      %3436 = vmatpush1.bf16.msra.mxu0 0
      %3437 = vmatprep.subr.bf16.mxu0 0
      %3438 = vmatpush1.bf16.msra.mxu0 0
      %3439 = vmatprep.subr.bf16.mxu0 0
      %3440 = vmatpush1.bf16.msra.mxu0 0
      %3441 = vmatprep.subr.bf16.mxu0 0
      %3442 = vmatpush1.bf16.msra.mxu0 0
      %3443 = vmatprep.subr.bf16.mxu0 0
      %3444 = vmatpush1.bf16.msra.mxu0 0
      %3445 = vmatprep.subr.bf16.mxu0 0
      %3446 = vmatpush1.bf16.msra.mxu0 0
      %3447 = vmatprep.subr.bf16.mxu0 0
      %3448 = vmatpush1.bf16.msra.mxu0 0
      %3449 = vmatprep.subr.bf16.mxu0 0
      %3450 = vmatpush1.bf16.msra.mxu0 0
      %3451 = vmatprep.subr.bf16.mxu0 0
      %3452 = vmatpush1.bf16.msra.mxu0 0
      %3453 = vmatprep.subr.bf16.mxu0 0
      %3454 = vmatpush1.bf16.msra.mxu0 0
      %3455 = vmatprep.subr.bf16.mxu0 0
      %3456 = vmatpush1.bf16.msra.mxu0 0
      %3457 = vmatprep.subr.bf16.mxu0 0
      %3458 = vmatpush1.bf16.msra.mxu0 0
      %3459 = vmatprep.subr.bf16.mxu0 0
      %3460 = vmatpush1.bf16.msra.mxu0 0
      %3461 = vmatprep.subr.bf16.mxu0 0
      %3462 = vmatpush1.bf16.msra.mxu0 0
      %3463 = vmatprep.mubr.bf16.mxu0 0
      %3464 = vmatmul.mubr.bf16.gmra.mrb[0].mxu0 %v3429
      %v3465 = vpop.f32.mrb[0].mxu0
      %v3466 = vadd.f32 0.0, %v3465
      %v3467 = vpop.f32.mrb[0].mxu0
      %v3468 = vpop.f32.mrb[0].mxu0
      %v3469 = vadd.f32 0.0, %v3468
      %v3470 = vpop.f32.mrb[0].mxu0
      %3471 = vdwg.mxu0
      %3474 = vrot.lane.b32.xlu0 %v3220, 16
      %v3475 = vpop.permute.xlu0 %3474
      %3476 = vrot.lane.b32.xlu0 %v3223, 16
      %v3477 = vpop.permute.xlu0 %3476
      %3482 = vrot.lane.b32.xlu0 %v3343, 32
      %v3483 = vpop.permute.xlu0 %3482
      %3484 = vrot.lane.b32.xlu0 %v3346, 32
      %v3485 = vpop.permute.xlu0 %3484
      %3490 = vrot.lane.b32.xlu0 %v3466, 48
      %v3491 = vpop.permute.xlu0 %3490
      %3492 = vrot.lane.b32.xlu0 %v3469, 48
      %v3493 = vpop.permute.xlu0 %3492
      %v3496 = vsel %vm1722, %v3096, %v3475
      %v3497 = vsel %vm1722, %v3099, %v3477
      %v3498 = vsel %vm504, %v3496, %v3483
      %v3499 = vsel %vm504, %v3497, %v3485
      %v3500 = vsel %vm788, %v3498, %v3491
      %v3501 = vsel %vm788, %v3499, %v3493
      %v3502 = vpack.c.bf16 %v3501, %v3500
      %v3511 = vunpack.c.l.b16 %v2795
      %v3512 = vunpack.c.l.b16 %v2796
      %v3513 = vunpack.c.l.b16 %v2797
      %v3514 = vunpack.c.l.b16 %v2798
      %v3515 = vunpack.c.l.b16 %v2799
      %v3516 = vunpack.c.l.b16 %v2800
      %v3517 = vunpack.c.l.b16 %v2801
      %v3518 = vunpack.c.l.b16 %v2802
      %v3519 = vpack.c.b16 %v3512, %v3511
      %v3520 = vpack.c.b16 %v3514, %v3513
      %v3521 = vpack.c.b16 %v3516, %v3515
      %v3522 = vpack.c.b16 %v3518, %v3517
      %v3528 = vsel %vm2843, %v3502, 0
      %3530 = vmatprep.subr.bf16.mxu0 0
      %3531 = vmatpush1.bf16.msra.mxu0 %v3519
      %3532 = vmatprep.subr.bf16.mxu0 0
      %3533 = vmatpush1.bf16.msra.mxu0 %v3520
      %3534 = vmatprep.subr.bf16.mxu0 0
      %3535 = vmatpush1.bf16.msra.mxu0 %v3521
      %3536 = vmatprep.subr.bf16.mxu0 0
      %3537 = vmatpush1.bf16.msra.mxu0 %v3522
      %3538 = vmatprep.subr.bf16.mxu0 0
      %3539 = vmatpush1.bf16.msra.mxu0 0
      %3540 = vmatprep.subr.bf16.mxu0 0
      %3541 = vmatpush1.bf16.msra.mxu0 0
      %3542 = vmatprep.subr.bf16.mxu0 0
      %3543 = vmatpush1.bf16.msra.mxu0 0
      %3544 = vmatprep.subr.bf16.mxu0 0
      %3545 = vmatpush1.bf16.msra.mxu0 0
      %3546 = vmatprep.subr.bf16.mxu0 0
      %3547 = vmatpush1.bf16.msra.mxu0 0
      %3548 = vmatprep.subr.bf16.mxu0 0
      %3549 = vmatpush1.bf16.msra.mxu0 0
      %3550 = vmatprep.subr.bf16.mxu0 0
      %3551 = vmatpush1.bf16.msra.mxu0 0
      %3552 = vmatprep.subr.bf16.mxu0 0
      %3553 = vmatpush1.bf16.msra.mxu0 0
      %3554 = vmatprep.subr.bf16.mxu0 0
      %3555 = vmatpush1.bf16.msra.mxu0 0
      %3556 = vmatprep.subr.bf16.mxu0 0
      %3557 = vmatpush1.bf16.msra.mxu0 0
      %3558 = vmatprep.subr.bf16.mxu0 0
      %3559 = vmatpush1.bf16.msra.mxu0 0
      %3560 = vmatprep.subr.bf16.mxu0 0
      %3561 = vmatpush1.bf16.msra.mxu0 0
      %3562 = vmatprep.mubr.bf16.mxu0 0
      %3563 = vmatmul.mubr.bf16.gmra.mrb[0].mxu0 %v3528
      %v3564 = vpop.f32.mrb[0].mxu0
      %v3565 = vadd.f32 0.0, %v3564
      %v3566 = vpop.f32.mrb[0].mxu0
      %v3567 = vpop.f32.mrb[0].mxu0
      %v3568 = vadd.f32 0.0, %v3567
      %v3569 = vpop.f32.mrb[0].mxu0
      %3570 = vdwg.mxu0
      %v3571 = vadd.f32 %v2783, %v3565
      %v3572 = vadd.f32 %v2784, %v3568
      %v3573 = vlaneseq
      %v3574 = vshrl.u32 %v3573, 7
      %v3575 = vsub.s32 4, %v3574
      %v3576 = vrot.slane %v2785, %v3575
      %v3577 = vadd.f32 %v3571, %v3576
      %v3578 = vadd.f32 %v3572, %v3576
      %v3579 = vsel %vm2843, %v3577, 0.0
      %3580 = vadd.xlane.f32.xlu0 %v3579
      %v3581 = vpop.xlane.xlu0 %3580
      %v3582 = vsel %vm2843, %v3578, 0.0
      %3583 = vadd.xlane.f32.xlu0 %v3582
      %v3584 = vpop.xlane.xlu0 %3583
      %v3585 = vmul.f32 %v3581, %v2850
      %v3586 = vmul.f32 %v3584, %v2850
      %v3587 = vsub.f32 %v3577, %v3585
      %v3588 = vsub.f32 %v3578, %v3586
      %v3589 = vmul.f32 %v3587, %v3587
      %v3590 = vmul.f32 %v3588, %v3588
      %v3591 = vsel %vm2843, %v3589, 0.0
      %3592 = vadd.xlane.f32.xlu0 %v3591
      %v3593 = vpop.xlane.xlu0 %3592
      %v3594 = vsel %vm2843, %v3590, 0.0
      %3595 = vadd.xlane.f32.xlu0 %v3594
      %v3596 = vpop.xlane.xlu0 %3595
      %v3597 = vmul.f32 %v3593, %v2850
      %v3598 = vmul.f32 %v3596, %v2850
      %v3599 = vadd.f32 %v3597, 1e-05
      %v3600 = vadd.f32 %v3598, 1e-05
      %v3601 = vrsqrt.pop %v3599
      %v3602 = vrsqrt.pop %v3600
      %v3603 = vmul.f32 %v3587, %v3601
      %v3604 = vmul.f32 %v3588, %v3602
      %v3605 = vlaneseq
      %v3606 = vshrl.u32 %v3605, 7
      %v3607 = vsub.s32 2, %v3606
      %v3608 = vrot.slane %v2785, %v3607
      %v3609 = vmul.f32 %v3603, %v3608
      %v3610 = vmul.f32 %v3604, %v3608
      %v3611 = vlaneseq
      %v3612 = vshrl.u32 %v3611, 7
      %v3613 = vsub.s32 3, %v3612
      %v3614 = vrot.slane %v2785, %v3613
      %v3615 = vadd.f32 %v3609, %v3614
      %v3616 = vadd.f32 %v3610, %v3614
      %v3617 = vpack.c.bf16 %v3616, %v3615
      %v3618 = vlaneseq
      %v3619 = vshrl.u32 %v3618, 7
      %v3620 = vsub.s32 7, %v3619
      %v3621 = vrot.slane %v2785, %v3620
      %v3622 = vlaneseq
      %v3623 = vshrl.u32 %v3622, 7
      %v3624 = vsub.s32 7, %v3623
      %v3625 = vrot.slane %v2786, %v3624
      %v3634 = vunpack.c.l.b16 %v2803
      %v3635 = vunpack.c.h.b16 %v2803
      %v3636 = vunpack.c.l.b16 %v2804
      %v3637 = vunpack.c.h.b16 %v2804
      %v3638 = vunpack.c.l.b16 %v2805
      %v3639 = vunpack.c.h.b16 %v2805
      %v3640 = vunpack.c.l.b16 %v2806
      %v3641 = vunpack.c.h.b16 %v2806
      %v3642 = vunpack.c.l.b16 %v2807
      %v3643 = vunpack.c.h.b16 %v2807
      %v3644 = vunpack.c.l.b16 %v2808
      %v3645 = vunpack.c.h.b16 %v2808
      %v3646 = vunpack.c.l.b16 %v2809
      %v3647 = vunpack.c.h.b16 %v2809
      %v3648 = vunpack.c.l.b16 %v2810
      %v3649 = vunpack.c.h.b16 %v2810
      %v3650 = vpack.c.b16 %v3636, %v3634
      %v3651 = vpack.c.b16 %v3637, %v3635
      %v3652 = vpack.c.b16 %v3640, %v3638
      %v3653 = vpack.c.b16 %v3641, %v3639
      %v3654 = vpack.c.b16 %v3644, %v3642
      %v3655 = vpack.c.b16 %v3645, %v3643
      %v3656 = vpack.c.b16 %v3648, %v3646
      %v3657 = vpack.c.b16 %v3649, %v3647
      %v3667 = vsel %vm2843, %v3617, 0
      %3669 = vmatprep.subr.bf16.mxu0 %v3651
      %3670 = vmatpush1.bf16.msra.mxu0 %v3650
      %3671 = vmatprep.subr.bf16.mxu0 %v3653
      %3672 = vmatpush1.bf16.msra.mxu0 %v3652
      %3673 = vmatprep.subr.bf16.mxu0 %v3655
      %3674 = vmatpush1.bf16.msra.mxu0 %v3654
      %3675 = vmatprep.subr.bf16.mxu0 %v3657
      %3676 = vmatpush1.bf16.msra.mxu0 %v3656
      %3677 = vmatprep.subr.bf16.mxu0 0
      %3678 = vmatpush1.bf16.msra.mxu0 0
      %3679 = vmatprep.subr.bf16.mxu0 0
      %3680 = vmatpush1.bf16.msra.mxu0 0
      %3681 = vmatprep.subr.bf16.mxu0 0
      %3682 = vmatpush1.bf16.msra.mxu0 0
      %3683 = vmatprep.subr.bf16.mxu0 0
      %3684 = vmatpush1.bf16.msra.mxu0 0
      %3685 = vmatprep.subr.bf16.mxu0 0
      %3686 = vmatpush1.bf16.msra.mxu0 0
      %3687 = vmatprep.subr.bf16.mxu0 0
      %3688 = vmatpush1.bf16.msra.mxu0 0
      %3689 = vmatprep.subr.bf16.mxu0 0
      %3690 = vmatpush1.bf16.msra.mxu0 0
      %3691 = vmatprep.subr.bf16.mxu0 0
      %3692 = vmatpush1.bf16.msra.mxu0 0
      %3693 = vmatprep.subr.bf16.mxu0 0
      %3694 = vmatpush1.bf16.msra.mxu0 0
      %3695 = vmatprep.subr.bf16.mxu0 0
      %3696 = vmatpush1.bf16.msra.mxu0 0
      %3697 = vmatprep.subr.bf16.mxu0 0
      %3698 = vmatpush1.bf16.msra.mxu0 0
      %3699 = vmatprep.subr.bf16.mxu0 0
      %3700 = vmatpush1.bf16.msra.mxu0 0
      %3701 = vmatprep.mubr.bf16.mxu0 0
      %3702 = vmatmul.mubr.bf16.gmra.mrb[0].mxu0 %v3667
      %v3703 = vpop.f32.mrb[0].mxu0
      %v3704 = vadd.f32 %v3621, %v3703
      %v3705 = vpop.f32.mrb[0].mxu0
      %v3706 = vadd.f32 %v3625, %v3705
      %v3707 = vpop.f32.mrb[0].mxu0
      %v3708 = vadd.f32 %v3621, %v3707
      %v3709 = vpop.f32.mrb[0].mxu0
      %v3710 = vadd.f32 %v3625, %v3709
      %3711 = vdwg.mxu0
      %v3712 = vmul.f32 %v3704, %v3704
      %v3713 = vmul.f32 %v3706, %v3706
      %v3714 = vmul.f32 %v3708, %v3708
      %v3715 = vmul.f32 %v3710, %v3710
      %v3716 = vmul.f32 %v3704, %v3712
      %v3717 = vmul.f32 %v3706, %v3713
      %v3718 = vmul.f32 %v3708, %v3714
      %v3719 = vmul.f32 %v3710, %v3715
      %v3720 = vmul.f32 %v3716, 0.044715
      %v3721 = vmul.f32 %v3717, 0.044715
      %v3722 = vmul.f32 %v3718, 0.044715
      %v3723 = vmul.f32 %v3719, 0.044715
      %v3724 = vadd.f32 %v3704, %v3720
      %v3725 = vadd.f32 %v3706, %v3721
      %v3726 = vadd.f32 %v3708, %v3722
      %v3727 = vadd.f32 %v3710, %v3723
      %v3728 = vmul.f32 %v3724, 0.7978846
      %v3729 = vmul.f32 %v3725, 0.7978846
      %v3730 = vmul.f32 %v3726, 0.7978846
      %v3731 = vmul.f32 %v3727, 0.7978846
      %v3732 = vtanh.pop %v3728
      %v3733 = vtanh.pop %v3729
      %v3734 = vtanh.pop %v3730
      %v3735 = vtanh.pop %v3731
      %v3736 = vadd.f32 %v3732, 1.0
      %v3737 = vadd.f32 %v3733, 1.0
      %v3738 = vadd.f32 %v3734, 1.0
      %v3739 = vadd.f32 %v3735, 1.0
      %v3740 = vmul.f32 %v3736, 0.5
      %v3741 = vmul.f32 %v3737, 0.5
      %v3742 = vmul.f32 %v3738, 0.5
      %v3743 = vmul.f32 %v3739, 0.5
      %v3744 = vmul.f32 %v3704, %v3740
      %v3745 = vmul.f32 %v3706, %v3741
      %v3746 = vmul.f32 %v3708, %v3742
      %v3747 = vmul.f32 %v3710, %v3743
      %v3748 = vpack.c.bf16 %v3746, %v3744
      %v3749 = vpack.c.bf16 %v3747, %v3745
      %v3782 = vunpack.c.l.b16 %v2811
      %v3783 = vunpack.c.l.b16 %v2812
      %v3784 = vunpack.c.l.b16 %v2813
      %v3785 = vunpack.c.l.b16 %v2814
      %v3786 = vunpack.c.l.b16 %v2815
      %v3787 = vunpack.c.l.b16 %v2816
      %v3788 = vunpack.c.l.b16 %v2817
      %v3789 = vunpack.c.l.b16 %v2818
      %v3790 = vunpack.c.l.b16 %v2819
      %v3791 = vunpack.c.l.b16 %v2820
      %v3792 = vunpack.c.l.b16 %v2821
      %v3793 = vunpack.c.l.b16 %v2822
      %v3794 = vunpack.c.l.b16 %v2823
      %v3795 = vunpack.c.l.b16 %v2824
      %v3796 = vunpack.c.l.b16 %v2825
      %v3797 = vunpack.c.l.b16 %v2826
      %v3798 = vunpack.c.l.b16 %v2827
      %v3799 = vunpack.c.l.b16 %v2828
      %v3800 = vunpack.c.l.b16 %v2829
      %v3801 = vunpack.c.l.b16 %v2830
      %v3802 = vunpack.c.l.b16 %v2831
      %v3803 = vunpack.c.l.b16 %v2832
      %v3804 = vunpack.c.l.b16 %v2833
      %v3805 = vunpack.c.l.b16 %v2834
      %v3806 = vunpack.c.l.b16 %v2835
      %v3807 = vunpack.c.l.b16 %v2836
      %v3808 = vunpack.c.l.b16 %v2837
      %v3809 = vunpack.c.l.b16 %v2838
      %v3810 = vunpack.c.l.b16 %v2839
      %v3811 = vunpack.c.l.b16 %v2840
      %v3812 = vunpack.c.l.b16 %v2841
      %v3813 = vunpack.c.l.b16 %v2842
      %v3814 = vpack.c.b16 %v3783, %v3782
      %v3815 = vpack.c.b16 %v3785, %v3784
      %v3816 = vpack.c.b16 %v3787, %v3786
      %v3817 = vpack.c.b16 %v3789, %v3788
      %v3818 = vpack.c.b16 %v3791, %v3790
      %v3819 = vpack.c.b16 %v3793, %v3792
      %v3820 = vpack.c.b16 %v3795, %v3794
      %v3821 = vpack.c.b16 %v3797, %v3796
      %v3822 = vpack.c.b16 %v3799, %v3798
      %v3823 = vpack.c.b16 %v3801, %v3800
      %v3824 = vpack.c.b16 %v3803, %v3802
      %v3825 = vpack.c.b16 %v3805, %v3804
      %v3826 = vpack.c.b16 %v3807, %v3806
      %v3827 = vpack.c.b16 %v3809, %v3808
      %v3828 = vpack.c.b16 %v3811, %v3810
      %v3829 = vpack.c.b16 %v3813, %v3812
      %3846 = vmatprep.subr.bf16.mxu0 0
      %3847 = vmatpush1.bf16.msra.mxu0 %v3814
      %3848 = vmatprep.subr.bf16.mxu0 0
      %3849 = vmatpush1.bf16.msra.mxu0 %v3815
      %3850 = vmatprep.subr.bf16.mxu0 0
      %3851 = vmatpush1.bf16.msra.mxu0 %v3816
      %3852 = vmatprep.subr.bf16.mxu0 0
      %3853 = vmatpush1.bf16.msra.mxu0 %v3817
      %3854 = vmatprep.subr.bf16.mxu0 0
      %3855 = vmatpush1.bf16.msra.mxu0 %v3818
      %3856 = vmatprep.subr.bf16.mxu0 0
      %3857 = vmatpush1.bf16.msra.mxu0 %v3819
      %3858 = vmatprep.subr.bf16.mxu0 0
      %3859 = vmatpush1.bf16.msra.mxu0 %v3820
      %3860 = vmatprep.subr.bf16.mxu0 0
      %3861 = vmatpush1.bf16.msra.mxu0 %v3821
      %3862 = vmatprep.subr.bf16.mxu0 0
      %3863 = vmatpush1.bf16.msra.mxu0 %v3822
      %3864 = vmatprep.subr.bf16.mxu0 0
      %3865 = vmatpush1.bf16.msra.mxu0 %v3823
      %3866 = vmatprep.subr.bf16.mxu0 0
      %3867 = vmatpush1.bf16.msra.mxu0 %v3824
      %3868 = vmatprep.subr.bf16.mxu0 0
      %3869 = vmatpush1.bf16.msra.mxu0 %v3825
      %3870 = vmatprep.subr.bf16.mxu0 0
      %3871 = vmatpush1.bf16.msra.mxu0 %v3826
      %3872 = vmatprep.subr.bf16.mxu0 0
      %3873 = vmatpush1.bf16.msra.mxu0 %v3827
      %3874 = vmatprep.subr.bf16.mxu0 0
      %3875 = vmatpush1.bf16.msra.mxu0 %v3828
      %3876 = vmatprep.subr.bf16.mxu0 0
      %3877 = vmatpush1.bf16.msra.mxu0 %v3829
      %3878 = vmatprep.mubr.bf16.mxu0 %v3749
      %3879 = vmatmul.mubr.bf16.gmra.mrb[0].mxu0 %v3748
      %v3880 = vpop.f32.mrb[0].mxu0
      %v3881 = vadd.f32 0.0, %v3880
      %v3882 = vpop.f32.mrb[0].mxu0
      %v3883 = vpop.f32.mrb[0].mxu0
      %v3884 = vadd.f32 0.0, %v3883
      %v3885 = vpop.f32.mrb[0].mxu0
      %3886 = vdwg.mxu0
      %v3887 = vadd.f32 %v3577, %v3881
      %v3888 = vadd.f32 %v3578, %v3884
      %v3889 = vlaneseq
      %v3890 = vshrl.u32 %v3889, 7
      %v3891 = vsub.s32 5, %v3890
      %v3892 = vrot.slane %v2785, %v3891
      %v3893 = vadd.f32 %v3887, %v3892
      %v3894 = vadd.f32 %v3888, %v3892
      %3895 = vst.msk [vmem:[%s467] sm:$0xff] %vm2843, %v3893
      %3896 = vst.msk [vmem:[%s467 + $0x8] sm:$0xff] %vm2843, %v3894
      %p3897 = scmp.lt.s32.totalorder %s25, 1
      %s3898 = scalar_select %p3897, %s25, 1
      %s3899 = smul.addr %s3898, 2
      %s3900 = smul.addr %s3899, 8
      %s3901 = scalar_lea.vmem %s14, %s3900
      // Predicated region
      $region77: #{a_call__.1} parent=75 // pred_check
        %p3902 = pneg %p342
      $region78: #{a_call__.1} parent=75 // pred_check_branch
        %3904 = sbr.rel (%p3902) target = $region80
      $region79: #{a_call__.1} parent=75 // pred_region
        _
      $region80: #{a_call__.1} parent=75 // pred_fallthru
        _
    $region76: #{a_call__.1} parent=5 // pred_fallthru
      _
    %p3905 = scmp.le.s32.totalorder 2, %s20
    // Predicated region
    $region81: #{a_call__.1} parent=5 // pred_check
      %p3906 = pneg %p3905
    $region82: #{a_call__.1} parent=5 // pred_check_branch
      %3908 = sbr.rel (%p3906) target = $region84
    $region83: #{a_call__.1} parent=5 // pred_region
      %s3909 = ssub.s32 %s20, 2
      // Predicated region
      $region85: #{a_call__.1} parent=83 // pred_check
        %p3910 = pneg %p348
      $region86: #{a_call__.1} parent=83 // pred_check_branch
        %3912 = sbr.rel (%p3910) target = $region88
      $region87: #{a_call__.1} parent=83 // pred_region
        %p3913 = scmp.lt.s32.totalorder %s26, 1
        %s3914 = scalar_select %p3913, %s26, 1
        %s3915 = smul.addr %s3914, 2
        %s3916 = smul.addr %s3915, 8
        %s3917 = scalar_lea.vmem %s14, %s3916
      $region88: #{a_call__.1} parent=83 // pred_fallthru
        _
    $region84: #{a_call__.1} parent=5 // pred_fallthru
      _
  $region6: #{a_call__.1} parent=0 // loop_footer
    %s24 = sadd.s32 1, %s20
  $region7: #{a_call__.1} parent=0 // loop_footer_branch
    %19 = sbr.rel target = $region3
  $region8: #{a_call__.1} parent=0 // loop_exit
    _

</llo_original>
